<compile_context>
chip_gen: v5e
topology: v5e:2x2
jax: 0.10.0
libtpu: 0.0.40
codegen_flags: <defaults>
</compile_context>

<pallas_src>
import math
import functools

import jax
import jax.numpy as jnp
from jax.experimental import pallas as pl
from jax.experimental.pallas import tpu as pltpu

# ----------------------------- config (synthetic BertConfig) -----------------
VOCAB = 100
HIDDEN = 32
NUM_LAYERS = 2
NUM_HEADS = 4
HEAD_DIM = HIDDEN // NUM_HEADS
INTERMEDIATE = 64
MAXLEN = 128
TYPE_VOCAB = 2
NUM_LABELS = 3
LN_EPS = 1e-12
PAD = 128  # lane-dense padded width for pooler / classifier outputs


# ----------------------------- in-kernel helpers ------------------------------
def _layernorm(x, g, b):
    mu = jnp.mean(x, axis=-1, keepdims=True)
    var = jnp.mean(jnp.square(x - mu), axis=-1, keepdims=True)
    return (x - mu) * jax.lax.rsqrt(var + LN_EPS) * g + b


def _gelu_tanh(x):
    # TODO(synk): HF BERT default "gelu" is erf-based; tanh approximation is
    # used here (maps cleanly onto the TPU EUP).
    c = math.sqrt(2.0 / math.pi)
    return 0.5 * x * (1.0 + jnp.tanh(c * (x + 0.044715 * x * x * x)))


# ----------------------------- the fused Pallas kernel ------------------------
def _bert_kernel(x_ref, mask_ref, emb_g_ref, emb_b_ref,
                 qkv_w_ref, qkv_b_ref, ao_w_ref, ao_b_ref,
                 aln_g_ref, aln_b_ref, i_w_ref, i_b_ref,
                 o_w_ref, o_b_ref, oln_g_ref, oln_b_ref,
                 pool_w_ref, pool_b_ref, cls_w_ref, cls_b_ref,
                 logits_ref, emb_ref, *, seq):
    f32, bf16 = jnp.float32, jnp.bfloat16
    S, H, nh, dh = seq, HIDDEN, NUM_HEADS, HEAD_DIM

    def mm(x_bf, w):  # bf16 MXU inputs, f32 accumulation
        return jnp.dot(x_bf, w, preferred_element_type=f32)

    # --- embedding LayerNorm (embedding gathers/sum done in wrapper glue) ---
    h = _layernorm(x_ref[0], emb_g_ref[...], emb_b_ref[...])          # [S,H] f32

    # --- hoisted additive-mask broadcast: one broadcast for the whole kernel ---
    mask_b = jnp.broadcast_to(mask_ref[0].reshape(1, 1, S), (nh, S, S))

    # TODO(synk): nn.Dropout layers are identity here (inference semantics).
    for l in range(NUM_LAYERS):
        hb = h.astype(bf16)
        # Three HxH dots (no sub-128-lane slicing of a fused QKV output).
        # The 1/sqrt(head_dim) attention scale is folded into Q weight/bias.
        q = mm(hb, qkv_w_ref[l, 0]) + qkv_b_ref[l, 0]                  # [S,H] f32
        k = mm(hb, qkv_w_ref[l, 1]) + qkv_b_ref[l, 1]
        v = mm(hb, qkv_w_ref[l, 2]) + qkv_b_ref[l, 2]

        # ---- attention, batched over heads (no per-head python loop) ----
        qh = q.reshape(S, nh, dh).transpose(1, 0, 2).astype(bf16)      # [nh,S,dh]
        kh = k.reshape(S, nh, dh).transpose(1, 0, 2).astype(bf16)
        vh = v.reshape(S, nh, dh).transpose(1, 0, 2).astype(bf16)

        s = jnp.einsum("hqd,hkd->hqk", qh, kh,
                       preferred_element_type=f32) + mask_b            # [nh,S,S]
        s = s - jnp.max(s, axis=-1, keepdims=True)
        p = jnp.exp(s)
        p = p * pl.reciprocal(jnp.sum(p, axis=-1, keepdims=True), approx=True)
        ctx = jnp.einsum("hqk,hkd->hqd", p.astype(bf16), vh,
                         preferred_element_type=f32)                   # [nh,S,dh]
        ctx = ctx.transpose(1, 0, 2).reshape(S, H)

        attn = mm(ctx.astype(bf16), ao_w_ref[l]) + ao_b_ref[l]         # one [S,H]@[H,H]
        h = _layernorm(attn + h, aln_g_ref[l], aln_b_ref[l])           # add + LN fused

        # ---- feed-forward: dense -> gelu -> dense, intermediate stays in VMEM ----
        inter = _gelu_tanh(mm(h.astype(bf16), i_w_ref[l]) + i_b_ref[l])  # [S,I]
        ffn = mm(inter.astype(bf16), o_w_ref[l]) + o_b_ref[l]
        h = _layernorm(ffn + h, oln_g_ref[l], oln_b_ref[l])

    # ---- pooler (CLS token) + classifier head; weights zero-padded to 128
    #      lanes so both stores are lane-dense (wrapper slices back). ----
    cls_tok = h[0:1, :].astype(bf16)                                   # [1,H]
    pooled = jnp.tanh(mm(cls_tok, pool_w_ref[...]) + pool_b_ref[...])  # [1,PAD]
    emb_ref[0] = pooled
    logits_ref[0] = mm(pooled.astype(bf16), cls_w_ref[...]) + cls_b_ref[...]


# ----------------------------- parameters ------------------------------------
def _normal(key, shape, std=0.02):
    return std * jax.random.normal(key, shape, dtype=jnp.float32)


def init_params(key):
    keys = iter(jax.random.split(key, 8 + NUM_LAYERS * 16))
    H, I = HIDDEN, INTERMEDIATE
    p = {
        "word_emb": _normal(next(keys), (VOCAB, H)),
        "pos_emb": _normal(next(keys), (MAXLEN, H)),
        "type_emb": _normal(next(keys), (TYPE_VOCAB, H)),
        "emb_ln_g": jnp.ones((H,), jnp.float32),
        "emb_ln_b": jnp.zeros((H,), jnp.float32),
        "layers": [],
    }
    for _ in range(NUM_LAYERS):
        lp = {
            "q_w": _normal(next(keys), (H, H)), "q_b": jnp.zeros((H,), jnp.float32),
            "k_w": _normal(next(keys), (H, H)), "k_b": jnp.zeros((H,), jnp.float32),
            "v_w": _normal(next(keys), (H, H)), "v_b": jnp.zeros((H,), jnp.float32),
            "ao_w": _normal(next(keys), (H, H)), "ao_b": jnp.zeros((H,), jnp.float32),
            "attn_ln_g": jnp.ones((H,), jnp.float32),
            "attn_ln_b": jnp.zeros((H,), jnp.float32),
            "i_w": _normal(next(keys), (H, I)), "i_b": jnp.zeros((I,), jnp.float32),
            "o_w": _normal(next(keys), (I, H)), "o_b": jnp.zeros((H,), jnp.float32),
            "out_ln_g": jnp.ones((H,), jnp.float32),
            "out_ln_b": jnp.zeros((H,), jnp.float32),
        }
        p["layers"].append(lp)
    p["pool_w"] = _normal(next(keys), (H, H))
    p["pool_b"] = jnp.zeros((H,), jnp.float32)
    p["cls_w"] = _normal(next(keys), (H, NUM_LABELS))
    p["cls_b"] = jnp.zeros((NUM_LABELS,), jnp.float32)
    return p


def fuse_params(p):
    """Stack / pre-layout per-layer params for the fused kernel.
    Matmul weights -> bf16 (f32 MXU accumulation); LN params / biases stay f32.
    1/sqrt(head_dim) folded into Q. Pooler/classifier weights zero-padded to
    128 output lanes for lane-dense stores."""
    bf16 = jnp.bfloat16
    H = HIDDEN
    scale = 1.0 / math.sqrt(HEAD_DIM)
    qkv_w, qkv_b, ao_w, ao_b = [], [], [], []
    aln_g, aln_b, i_w, i_b, o_w, o_b, oln_g, oln_b = ([] for _ in range(8))
    for lp in p["layers"]:
        qkv_w.append(jnp.stack([lp["q_w"] * scale, lp["k_w"], lp["v_w"]]))        # [3,H,H]
        qkv_b.append(jnp.stack([lp["q_b"] * scale, lp["k_b"], lp["v_b"]])[:, None, :])  # [3,1,H]
        ao_w.append(lp["ao_w"])                                                   # [H,H] un-split
        ao_b.append(lp["ao_b"][None, :])
        aln_g.append(lp["attn_ln_g"][None, :]); aln_b.append(lp["attn_ln_b"][None, :])
        i_w.append(lp["i_w"]); i_b.append(lp["i_b"][None, :])
        o_w.append(lp["o_w"]); o_b.append(lp["o_b"][None, :])
        oln_g.append(lp["out_ln_g"][None, :]); oln_b.append(lp["out_ln_b"][None, :])

    pool_w = jnp.zeros((H, PAD), jnp.float32).at[:, :H].set(p["pool_w"])
    pool_b = jnp.zeros((1, PAD), jnp.float32).at[0, :H].set(p["pool_b"])
    cls_w = jnp.zeros((PAD, PAD), jnp.float32).at[:H, :NUM_LABELS].set(p["cls_w"])
    cls_b = jnp.zeros((1, PAD), jnp.float32).at[0, :NUM_LABELS].set(p["cls_b"])

    return {
        "word_emb": p["word_emb"], "pos_emb": p["pos_emb"], "type_emb": p["type_emb"],
        "emb_ln_g": p["emb_ln_g"][None, :], "emb_ln_b": p["emb_ln_b"][None, :],
        "qkv_w": jnp.stack(qkv_w).astype(bf16),      # [L,3,H,H]
        "qkv_b": jnp.stack(qkv_b),                   # [L,3,1,H]
        "ao_w": jnp.stack(ao_w).astype(bf16),        # [L,H,H]
        "ao_b": jnp.stack(ao_b),                     # [L,1,H]
        "attn_ln_g": jnp.stack(aln_g), "attn_ln_b": jnp.stack(aln_b),
        "i_w": jnp.stack(i_w).astype(bf16), "i_b": jnp.stack(i_b),
        "o_w": jnp.stack(o_w).astype(bf16), "o_b": jnp.stack(o_b),
        "out_ln_g": jnp.stack(oln_g), "out_ln_b": jnp.stack(oln_b),
        "pool_w": pool_w.astype(bf16), "pool_b": pool_b,     # [H,PAD], [1,PAD]
        "cls_w": cls_w.astype(bf16), "cls_b": cls_b,         # [PAD,PAD], [1,PAD]
    }


# ----------------------------- forward pass -----------------------------------
@jax.jit
def bert_forward(fp, input_ids, attention_mask, token_type_ids):
    B, S = input_ids.shape
    H = HIDDEN

    # --- embeddings (gathers are plain-JAX glue; everything else in-kernel) ---
    we = jnp.take(fp["word_emb"], input_ids, axis=0)                 # [B,S,H]
    pe = jnp.take(fp["pos_emb"], jnp.arange(S), axis=0)[None]        # [1,S,H]
    te = jnp.take(fp["type_emb"], token_type_ids, axis=0)            # [B,S,H]
    x_emb = (we + pe + te).astype(jnp.float32)                       # [B,S,H]

    # --- extended additive attention mask: (1 - m) * -10000 ---
    ext = ((1.0 - attention_mask.astype(jnp.float32)) * -10000.0)[:, None, :]  # [B,1,S]

    def batched(shape):            # one batch element per grid step
        nd = len(shape)
        return pl.BlockSpec((1,) + tuple(shape[1:]),
                            lambda b, _n=nd: (b,) + (0,) * (_n - 1))

    def resident(shape):           # weights: constant block index -> stay in VMEM
        nd = len(shape)
        return pl.BlockSpec(tuple(shape), lambda b, _n=nd: (0,) * _n)

    weights = (fp["emb_ln_g"], fp["emb_ln_b"],
               fp["qkv_w"], fp["qkv_b"], fp["ao_w"], fp["ao_b"],
               fp["attn_ln_g"], fp["attn_ln_b"],
               fp["i_w"], fp["i_b"], fp["o_w"], fp["o_b"],
               fp["out_ln_g"], fp["out_ln_b"],
               fp["pool_w"], fp["pool_b"], fp["cls_w"], fp["cls_b"])

    kern = functools.partial(_bert_kernel, seq=S)
    logits_pad, emb_pad = pl.pallas_call(
        kern,
        out_shape=(jax.ShapeDtypeStruct((B, 1, PAD), jnp.float32),
                   jax.ShapeDtypeStruct((B, 1, PAD), jnp.float32)),
        grid=(B,),
        in_specs=[batched(x_emb.shape), batched(ext.shape)]
                 + [resident(w.shape) for w in weights],
        out_specs=(pl.BlockSpec((1, 1, PAD), lambda b: (b, 0, 0)),
                   pl.BlockSpec((1, 1, PAD), lambda b: (b, 0, 0))),
        compiler_params=pltpu.CompilerParams(
            dimension_semantics=("parallel",)),   # shards batch across v7x TCs
    )(x_emb, ext, *weights)

    logits = logits_pad[:, 0, :NUM_LABELS]
    emb = emb_pad[:, 0, :H]
    # TODO(synk): optional labels -> MSE/CrossEntropy loss branch not implemented
    # (labels=None path of the reference forward).
    return logits, emb


# ----------------------------- main -------------------------------------------
if __name__ == "__main__":
    key = jax.random.PRNGKey(0)
    pkey, ikey = jax.random.split(key)
    params = init_params(pkey)
    fused = fuse_params(params)

    B, S = 2, 8
    input_ids = jax.random.randint(ikey, (B, S), 0, VOCAB, dtype=jnp.int32)
    attention_mask = jnp.ones((B, S), dtype=jnp.int32)
    token_type_ids = jnp.zeros((B, S), dtype=jnp.int32)

    logits, emb = bert_forward(fused, input_ids, attention_mask, token_type_ids)
    jax.block_until_ready((logits, emb))
    assert logits.shape == (B, NUM_LABELS) and emb.shape == (B, HIDDEN)
    print("KERNEL_OK")
</pallas_src>

<mosaic_0001>
module attributes {stable_mosaic.version = 11 : i64} {
  func.func @_bert_kernel(%arg0: i32, %arg1: memref<1x8x32xf32, #tpu.memory_space<vmem>>, %arg2: memref<1x1x8xf32, #tpu.memory_space<vmem>>, %arg3: memref<1x32xf32, #tpu.memory_space<vmem>>, %arg4: memref<1x32xf32, #tpu.memory_space<vmem>>, %arg5: memref<2x3x32x32xbf16, #tpu.memory_space<vmem>>, %arg6: memref<2x3x1x32xf32, #tpu.memory_space<vmem>>, %arg7: memref<2x32x32xbf16, #tpu.memory_space<vmem>>, %arg8: memref<2x1x32xf32, #tpu.memory_space<vmem>>, %arg9: memref<2x1x32xf32, #tpu.memory_space<vmem>>, %arg10: memref<2x1x32xf32, #tpu.memory_space<vmem>>, %arg11: memref<2x32x64xbf16, #tpu.memory_space<vmem>>, %arg12: memref<2x1x64xf32, #tpu.memory_space<vmem>>, %arg13: memref<2x64x32xbf16, #tpu.memory_space<vmem>>, %arg14: memref<2x1x32xf32, #tpu.memory_space<vmem>>, %arg15: memref<2x1x32xf32, #tpu.memory_space<vmem>>, %arg16: memref<2x1x32xf32, #tpu.memory_space<vmem>>, %arg17: memref<32x128xbf16, #tpu.memory_space<vmem>>, %arg18: memref<1x128xf32, #tpu.memory_space<vmem>>, %arg19: memref<128x128xbf16, #tpu.memory_space<vmem>>, %arg20: memref<1x128xf32, #tpu.memory_space<vmem>>, %arg21: memref<1x1x128xf32, #tpu.memory_space<vmem>>, %arg22: memref<1x1x128xf32, #tpu.memory_space<vmem>>) attributes {dimension_semantics = [#tpu.dimension_semantics<parallel>], iteration_bounds = array<i64: 2>, scalar_prefetch = 0 : i64, scratch_operands = 0 : i64, tpu.core_type = #tpu.core_type<tc>, window_params = [{transform_indices = @transform_0, window_bounds = array<i64: 1, 8, 32>}, {transform_indices = @transform_1, window_bounds = array<i64: 1, 1, 8>}, {pipeline_mode = #tpu.pipeline_mode<synchronous>, transform_indices = @transform_2, window_bounds = array<i64: 1, 32>}, {pipeline_mode = #tpu.pipeline_mode<synchronous>, transform_indices = @transform_3, window_bounds = array<i64: 1, 32>}, {pipeline_mode = #tpu.pipeline_mode<synchronous>, transform_indices = @transform_4, window_bounds = array<i64: 2, 3, 32, 32>}, {pipeline_mode = #tpu.pipeline_mode<synchronous>, transform_indices = @transform_5, window_bounds = array<i64: 2, 3, 1, 32>}, {pipeline_mode = #tpu.pipeline_mode<synchronous>, transform_indices = @transform_6, window_bounds = array<i64: 2, 32, 32>}, {pipeline_mode = #tpu.pipeline_mode<synchronous>, transform_indices = @transform_7, window_bounds = array<i64: 2, 1, 32>}, {pipeline_mode = #tpu.pipeline_mode<synchronous>, transform_indices = @transform_8, window_bounds = array<i64: 2, 1, 32>}, {pipeline_mode = #tpu.pipeline_mode<synchronous>, transform_indices = @transform_9, window_bounds = array<i64: 2, 1, 32>}, {pipeline_mode = #tpu.pipeline_mode<synchronous>, transform_indices = @transform_10, window_bounds = array<i64: 2, 32, 64>}, {pipeline_mode = #tpu.pipeline_mode<synchronous>, transform_indices = @transform_11, window_bounds = array<i64: 2, 1, 64>}, {pipeline_mode = #tpu.pipeline_mode<synchronous>, transform_indices = @transform_12, window_bounds = array<i64: 2, 64, 32>}, {pipeline_mode = #tpu.pipeline_mode<synchronous>, transform_indices = @transform_13, window_bounds = array<i64: 2, 1, 32>}, {pipeline_mode = #tpu.pipeline_mode<synchronous>, transform_indices = @transform_14, window_bounds = array<i64: 2, 1, 32>}, {pipeline_mode = #tpu.pipeline_mode<synchronous>, transform_indices = @transform_15, window_bounds = array<i64: 2, 1, 32>}, {pipeline_mode = #tpu.pipeline_mode<synchronous>, transform_indices = @transform_16, window_bounds = array<i64: 32, 128>}, {pipeline_mode = #tpu.pipeline_mode<synchronous>, transform_indices = @transform_17, window_bounds = array<i64: 1, 128>}, {pipeline_mode = #tpu.pipeline_mode<synchronous>, transform_indices = @transform_18, window_bounds = array<i64: 128, 128>}, {pipeline_mode = #tpu.pipeline_mode<synchronous>, transform_indices = @transform_19, window_bounds = array<i64: 1, 128>}, {transform_indices = @transform_20, window_bounds = array<i64: 1, 1, 128>}, {transform_indices = @transform_21, window_bounds = array<i64: 1, 1, 128>}]} {
    %c0 = arith.constant 0 : index
    %c0_0 = arith.constant 0 : index
    %c0_1 = arith.constant 0 : index
    %0 = vector.load %arg1[%c0, %c0_0, %c0_1] : memref<1x8x32xf32, #tpu.memory_space<vmem>>, vector<1x8x32xf32>
    %1 = vector.shape_cast %0 : vector<1x8x32xf32> to vector<8x32xf32>
    %c0_2 = arith.constant 0 : index
    %c0_3 = arith.constant 0 : index
    %2 = vector.load %arg3[%c0_2, %c0_3] : memref<1x32xf32, #tpu.memory_space<vmem>>, vector<1x32xf32>
    %c0_4 = arith.constant 0 : index
    %c0_5 = arith.constant 0 : index
    %3 = vector.load %arg4[%c0_4, %c0_5] : memref<1x32xf32, #tpu.memory_space<vmem>>, vector<1x32xf32>
    %cst = arith.constant dense<0.000000e+00> : vector<8xf32>
    %4 = vector.multi_reduction <add>, %1, %cst [1] : vector<8x32xf32> to vector<8xf32>
    %5 = vector.shape_cast %4 : vector<8xf32> to vector<8x1xf32>
    %cst_6 = arith.constant 3.200000e+01 : f32
    %6 = vector.broadcast %cst_6 : f32 to vector<8x1xf32>
    %7 = arith.divf %5, %6 : vector<8x1xf32>
    %8 = vector.broadcast %7 : vector<8x1xf32> to vector<8x32xf32>
    %9 = arith.subf %1, %8 : vector<8x32xf32>
    %10 = arith.mulf %9, %9 : vector<8x32xf32>
    %cst_7 = arith.constant dense<0.000000e+00> : vector<8xf32>
    %11 = vector.multi_reduction <add>, %10, %cst_7 [1] : vector<8x32xf32> to vector<8xf32>
    %12 = vector.shape_cast %11 : vector<8xf32> to vector<8x1xf32>
    %cst_8 = arith.constant 3.200000e+01 : f32
    %13 = vector.broadcast %cst_8 : f32 to vector<8x1xf32>
    %14 = arith.divf %12, %13 : vector<8x1xf32>
    %15 = vector.broadcast %7 : vector<8x1xf32> to vector<8x32xf32>
    %16 = arith.subf %1, %15 : vector<8x32xf32>
    %cst_9 = arith.constant 9.99999996E-13 : f32
    %17 = vector.broadcast %cst_9 : f32 to vector<8x1xf32>
    %18 = arith.addf %14, %17 : vector<8x1xf32>
    %19 = math.rsqrt %18 : vector<8x1xf32>
    %20 = vector.broadcast %19 : vector<8x1xf32> to vector<8x32xf32>
    %21 = arith.mulf %16, %20 : vector<8x32xf32>
    %22 = vector.broadcast %2 : vector<1x32xf32> to vector<8x32xf32>
    %23 = arith.mulf %21, %22 : vector<8x32xf32>
    %24 = vector.broadcast %3 : vector<1x32xf32> to vector<8x32xf32>
    %25 = arith.addf %23, %24 : vector<8x32xf32>
    %c0_10 = arith.constant 0 : index
    %c0_11 = arith.constant 0 : index
    %c0_12 = arith.constant 0 : index
    %26 = vector.load %arg2[%c0_10, %c0_11, %c0_12] : memref<1x1x8xf32, #tpu.memory_space<vmem>>, vector<1x1x8xf32>
    %27 = vector.shape_cast %26 : vector<1x1x8xf32> to vector<1x8xf32>
    %28 = vector.shape_cast %27 : vector<1x8xf32> to vector<1x1x8xf32>
    %29 = vector.shape_cast %28 : vector<1x1x8xf32> to vector<1x1x8xf32>
    %30 = vector.broadcast %29 : vector<1x1x8xf32> to vector<4x8x8xf32>
    %31 = arith.truncf %25 : vector<8x32xf32> to vector<8x32xbf16>
    %c0_13 = arith.constant 0 : index
    %c0_14 = arith.constant 0 : index
    %c0_15 = arith.constant 0 : index
    %c0_16 = arith.constant 0 : index
    %32 = vector.load %arg5[%c0_13, %c0_14, %c0_15, %c0_16] : memref<2x3x32x32xbf16, #tpu.memory_space<vmem>>, vector<1x1x32x32xbf16>
    %33 = vector.shape_cast %32 : vector<1x1x32x32xbf16> to vector<32x32xbf16>
    %cst_17 = arith.constant dense<0.000000e+00> : vector<8x32xf32>
    %34 = tpu.matmul %31, %33, %cst_17 {dimension_numbers = #tpu.dot_dimension_numbers<[1], [0], [0], [1], [0, 0, 1, 1], [], []>} : vector<8x32xbf16>, vector<32x32xbf16>, vector<8x32xf32> -> vector<8x32xf32>
    %c0_18 = arith.constant 0 : index
    %c0_19 = arith.constant 0 : index
    %c0_20 = arith.constant 0 : index
    %c0_21 = arith.constant 0 : index
    %35 = vector.load %arg6[%c0_18, %c0_19, %c0_20, %c0_21] : memref<2x3x1x32xf32, #tpu.memory_space<vmem>>, vector<1x1x1x32xf32>
    %36 = vector.shape_cast %35 : vector<1x1x1x32xf32> to vector<1x32xf32>
    %37 = vector.broadcast %36 : vector<1x32xf32> to vector<8x32xf32>
    %38 = arith.addf %34, %37 : vector<8x32xf32>
    %c0_22 = arith.constant 0 : index
    %c1 = arith.constant 1 : index
    %c0_23 = arith.constant 0 : index
    %c0_24 = arith.constant 0 : index
    %39 = vector.load %arg5[%c0_22, %c1, %c0_23, %c0_24] : memref<2x3x32x32xbf16, #tpu.memory_space<vmem>>, vector<1x1x32x32xbf16>
    %40 = vector.shape_cast %39 : vector<1x1x32x32xbf16> to vector<32x32xbf16>
    %cst_25 = arith.constant dense<0.000000e+00> : vector<8x32xf32>
    %41 = tpu.matmul %31, %40, %cst_25 {dimension_numbers = #tpu.dot_dimension_numbers<[1], [0], [0], [1], [0, 0, 1, 1], [], []>} : vector<8x32xbf16>, vector<32x32xbf16>, vector<8x32xf32> -> vector<8x32xf32>
    %c0_26 = arith.constant 0 : index
    %c1_27 = arith.constant 1 : index
    %c0_28 = arith.constant 0 : index
    %c0_29 = arith.constant 0 : index
    %42 = vector.load %arg6[%c0_26, %c1_27, %c0_28, %c0_29] : memref<2x3x1x32xf32, #tpu.memory_space<vmem>>, vector<1x1x1x32xf32>
    %43 = vector.shape_cast %42 : vector<1x1x1x32xf32> to vector<1x32xf32>
    %44 = vector.broadcast %43 : vector<1x32xf32> to vector<8x32xf32>
    %45 = arith.addf %41, %44 : vector<8x32xf32>
    %c0_30 = arith.constant 0 : index
    %c2 = arith.constant 2 : index
    %c0_31 = arith.constant 0 : index
    %c0_32 = arith.constant 0 : index
    %46 = vector.load %arg5[%c0_30, %c2, %c0_31, %c0_32] : memref<2x3x32x32xbf16, #tpu.memory_space<vmem>>, vector<1x1x32x32xbf16>
    %47 = vector.shape_cast %46 : vector<1x1x32x32xbf16> to vector<32x32xbf16>
    %cst_33 = arith.constant dense<0.000000e+00> : vector<8x32xf32>
    %48 = tpu.matmul %31, %47, %cst_33 {dimension_numbers = #tpu.dot_dimension_numbers<[1], [0], [0], [1], [0, 0, 1, 1], [], []>} : vector<8x32xbf16>, vector<32x32xbf16>, vector<8x32xf32> -> vector<8x32xf32>
    %c0_34 = arith.constant 0 : index
    %c2_35 = arith.constant 2 : index
    %c0_36 = arith.constant 0 : index
    %c0_37 = arith.constant 0 : index
    %49 = vector.load %arg6[%c0_34, %c2_35, %c0_36, %c0_37] : memref<2x3x1x32xf32, #tpu.memory_space<vmem>>, vector<1x1x1x32xf32>
    %50 = vector.shape_cast %49 : vector<1x1x1x32xf32> to vector<1x32xf32>
    %51 = vector.broadcast %50 : vector<1x32xf32> to vector<8x32xf32>
    %52 = arith.addf %48, %51 : vector<8x32xf32>
    %53 = vector.shape_cast %38 : vector<8x32xf32> to vector<8x4x8xf32>
    %54 = tpu.transpose %53, [1, 0, 2] : vector<8x4x8xf32> -> vector<4x8x8xf32>
    %55 = arith.truncf %54 : vector<4x8x8xf32> to vector<4x8x8xbf16>
    %56 = vector.shape_cast %45 : vector<8x32xf32> to vector<8x4x8xf32>
    %57 = tpu.transpose %56, [1, 0, 2] : vector<8x4x8xf32> -> vector<4x8x8xf32>
    %58 = arith.truncf %57 : vector<4x8x8xf32> to vector<4x8x8xbf16>
    %59 = vector.shape_cast %52 : vector<8x32xf32> to vector<8x4x8xf32>
    %60 = tpu.transpose %59, [1, 0, 2] : vector<8x4x8xf32> -> vector<4x8x8xf32>
    %61 = arith.truncf %60 : vector<4x8x8xf32> to vector<4x8x8xbf16>
    "tpu.trace_start"() <{level = 10 : i32, message = "hqd,hkd->hqk"}> : () -> ()
    %cst_38 = arith.constant dense<0.000000e+00> : vector<4x8x8xf32>
    %62 = tpu.matmul %55, %58, %cst_38 {dimension_numbers = #tpu.dot_dimension_numbers<[2], [2], [1], [1], [0, 0, 0, 1, 1, 1], [0], [0]>} : vector<4x8x8xbf16>, vector<4x8x8xbf16>, vector<4x8x8xf32> -> vector<4x8x8xf32>
    "tpu.trace_stop"() : () -> ()
    %63 = arith.addf %62, %30 : vector<4x8x8xf32>
    %cst_39 = arith.constant dense<0xFF800000> : vector<4x8xf32>
    %64 = vector.multi_reduction <maximumf>, %63, %cst_39 [2] : vector<4x8x8xf32> to vector<4x8xf32>
    %65 = vector.shape_cast %64 : vector<4x8xf32> to vector<4x8x1xf32>
    %66 = vector.broadcast %65 : vector<4x8x1xf32> to vector<4x8x8xf32>
    %67 = arith.subf %63, %66 : vector<4x8x8xf32>
    %68 = math.exp %67 : vector<4x8x8xf32>
    %cst_40 = arith.constant dense<0.000000e+00> : vector<4x8xf32>
    %69 = vector.multi_reduction <add>, %68, %cst_40 [2] : vector<4x8x8xf32> to vector<4x8xf32>
    %70 = vector.shape_cast %69 : vector<4x8xf32> to vector<4x8x1xf32>
    %71 = tpu.reciprocal %70 {approx = true} : vector<4x8x1xf32> -> vector<4x8x1xf32>
    %72 = vector.broadcast %71 : vector<4x8x1xf32> to vector<4x8x8xf32>
    %73 = arith.mulf %68, %72 : vector<4x8x8xf32>
    %74 = arith.truncf %73 : vector<4x8x8xf32> to vector<4x8x8xbf16>
    "tpu.trace_start"() <{level = 10 : i32, message = "hqk,hkd->hqd"}> : () -> ()
    %cst_41 = arith.constant dense<0.000000e+00> : vector<4x8x8xf32>
    %75 = tpu.matmul %74, %61, %cst_41 {dimension_numbers = #tpu.dot_dimension_numbers<[2], [1], [1], [2], [0, 0, 0, 1, 1, 2], [0], [0]>} : vector<4x8x8xbf16>, vector<4x8x8xbf16>, vector<4x8x8xf32> -> vector<4x8x8xf32>
    "tpu.trace_stop"() : () -> ()
    %76 = tpu.transpose %75, [1, 0, 2] : vector<4x8x8xf32> -> vector<8x4x8xf32>
    %77 = vector.shape_cast %76 : vector<8x4x8xf32> to vector<8x32xf32>
    %78 = arith.truncf %77 : vector<8x32xf32> to vector<8x32xbf16>
    %c0_42 = arith.constant 0 : index
    %c0_43 = arith.constant 0 : index
    %c0_44 = arith.constant 0 : index
    %79 = vector.load %arg7[%c0_42, %c0_43, %c0_44] : memref<2x32x32xbf16, #tpu.memory_space<vmem>>, vector<1x32x32xbf16>
    %80 = vector.shape_cast %79 : vector<1x32x32xbf16> to vector<32x32xbf16>
    %cst_45 = arith.constant dense<0.000000e+00> : vector<8x32xf32>
    %81 = tpu.matmul %78, %80, %cst_45 {dimension_numbers = #tpu.dot_dimension_numbers<[1], [0], [0], [1], [0, 0, 1, 1], [], []>} : vector<8x32xbf16>, vector<32x32xbf16>, vector<8x32xf32> -> vector<8x32xf32>
    %c0_46 = arith.constant 0 : index
    %c0_47 = arith.constant 0 : index
    %c0_48 = arith.constant 0 : index
    %82 = vector.load %arg8[%c0_46, %c0_47, %c0_48] : memref<2x1x32xf32, #tpu.memory_space<vmem>>, vector<1x1x32xf32>
    %83 = vector.shape_cast %82 : vector<1x1x32xf32> to vector<1x32xf32>
    %84 = vector.broadcast %83 : vector<1x32xf32> to vector<8x32xf32>
    %85 = arith.addf %81, %84 : vector<8x32xf32>
    %86 = arith.addf %85, %25 : vector<8x32xf32>
    %c0_49 = arith.constant 0 : index
    %c0_50 = arith.constant 0 : index
    %c0_51 = arith.constant 0 : index
    %87 = vector.load %arg9[%c0_49, %c0_50, %c0_51] : memref<2x1x32xf32, #tpu.memory_space<vmem>>, vector<1x1x32xf32>
    %88 = vector.shape_cast %87 : vector<1x1x32xf32> to vector<1x32xf32>
    %c0_52 = arith.constant 0 : index
    %c0_53 = arith.constant 0 : index
    %c0_54 = arith.constant 0 : index
    %89 = vector.load %arg10[%c0_52, %c0_53, %c0_54] : memref<2x1x32xf32, #tpu.memory_space<vmem>>, vector<1x1x32xf32>
    %90 = vector.shape_cast %89 : vector<1x1x32xf32> to vector<1x32xf32>
    %cst_55 = arith.constant dense<0.000000e+00> : vector<8xf32>
    %91 = vector.multi_reduction <add>, %86, %cst_55 [1] : vector<8x32xf32> to vector<8xf32>
    %92 = vector.shape_cast %91 : vector<8xf32> to vector<8x1xf32>
    %cst_56 = arith.constant 3.200000e+01 : f32
    %93 = vector.broadcast %cst_56 : f32 to vector<8x1xf32>
    %94 = arith.divf %92, %93 : vector<8x1xf32>
    %95 = vector.broadcast %94 : vector<8x1xf32> to vector<8x32xf32>
    %96 = arith.subf %86, %95 : vector<8x32xf32>
    %97 = arith.mulf %96, %96 : vector<8x32xf32>
    %cst_57 = arith.constant dense<0.000000e+00> : vector<8xf32>
    %98 = vector.multi_reduction <add>, %97, %cst_57 [1] : vector<8x32xf32> to vector<8xf32>
    %99 = vector.shape_cast %98 : vector<8xf32> to vector<8x1xf32>
    %cst_58 = arith.constant 3.200000e+01 : f32
    %100 = vector.broadcast %cst_58 : f32 to vector<8x1xf32>
    %101 = arith.divf %99, %100 : vector<8x1xf32>
    %102 = vector.broadcast %94 : vector<8x1xf32> to vector<8x32xf32>
    %103 = arith.subf %86, %102 : vector<8x32xf32>
    %cst_59 = arith.constant 9.99999996E-13 : f32
    %104 = vector.broadcast %cst_59 : f32 to vector<8x1xf32>
    %105 = arith.addf %101, %104 : vector<8x1xf32>
    %106 = math.rsqrt %105 : vector<8x1xf32>
    %107 = vector.broadcast %106 : vector<8x1xf32> to vector<8x32xf32>
    %108 = arith.mulf %103, %107 : vector<8x32xf32>
    %109 = vector.broadcast %88 : vector<1x32xf32> to vector<8x32xf32>
    %110 = arith.mulf %108, %109 : vector<8x32xf32>
    %111 = vector.broadcast %90 : vector<1x32xf32> to vector<8x32xf32>
    %112 = arith.addf %110, %111 : vector<8x32xf32>
    %113 = arith.truncf %112 : vector<8x32xf32> to vector<8x32xbf16>
    %c0_60 = arith.constant 0 : index
    %c0_61 = arith.constant 0 : index
    %c0_62 = arith.constant 0 : index
    %114 = vector.load %arg11[%c0_60, %c0_61, %c0_62] : memref<2x32x64xbf16, #tpu.memory_space<vmem>>, vector<1x32x64xbf16>
    %115 = vector.shape_cast %114 : vector<1x32x64xbf16> to vector<32x64xbf16>
    %cst_63 = arith.constant dense<0.000000e+00> : vector<8x64xf32>
    %116 = tpu.matmul %113, %115, %cst_63 {dimension_numbers = #tpu.dot_dimension_numbers<[1], [0], [0], [1], [0, 0, 1, 1], [], []>} : vector<8x32xbf16>, vector<32x64xbf16>, vector<8x64xf32> -> vector<8x64xf32>
    %c0_64 = arith.constant 0 : index
    %c0_65 = arith.constant 0 : index
    %c0_66 = arith.constant 0 : index
    %117 = vector.load %arg12[%c0_64, %c0_65, %c0_66] : memref<2x1x64xf32, #tpu.memory_space<vmem>>, vector<1x1x64xf32>
    %118 = vector.shape_cast %117 : vector<1x1x64xf32> to vector<1x64xf32>
    %119 = vector.broadcast %118 : vector<1x64xf32> to vector<8x64xf32>
    %120 = arith.addf %116, %119 : vector<8x64xf32>
    %cst_67 = arith.constant 5.000000e-01 : f32
    %121 = vector.broadcast %cst_67 : f32 to vector<8x64xf32>
    %122 = arith.mulf %121, %120 : vector<8x64xf32>
    %cst_68 = arith.constant 4.471500e-02 : f32
    %123 = vector.broadcast %cst_68 : f32 to vector<8x64xf32>
    %124 = arith.mulf %123, %120 : vector<8x64xf32>
    %125 = arith.mulf %124, %120 : vector<8x64xf32>
    %126 = arith.mulf %125, %120 : vector<8x64xf32>
    %127 = arith.addf %120, %126 : vector<8x64xf32>
    %cst_69 = arith.constant 0.797884583 : f32
    %128 = vector.broadcast %cst_69 : f32 to vector<8x64xf32>
    %129 = arith.mulf %128, %127 : vector<8x64xf32>
    %130 = math.tanh %129 : vector<8x64xf32>
    %cst_70 = arith.constant 1.000000e+00 : f32
    %131 = vector.broadcast %cst_70 : f32 to vector<8x64xf32>
    %132 = arith.addf %131, %130 : vector<8x64xf32>
    %133 = arith.mulf %122, %132 : vector<8x64xf32>
    %134 = arith.truncf %133 : vector<8x64xf32> to vector<8x64xbf16>
    %c0_71 = arith.constant 0 : index
    %c0_72 = arith.constant 0 : index
    %c0_73 = arith.constant 0 : index
    %135 = vector.load %arg13[%c0_71, %c0_72, %c0_73] : memref<2x64x32xbf16, #tpu.memory_space<vmem>>, vector<1x64x32xbf16>
    %136 = vector.shape_cast %135 : vector<1x64x32xbf16> to vector<64x32xbf16>
    %cst_74 = arith.constant dense<0.000000e+00> : vector<8x32xf32>
    %137 = tpu.matmul %134, %136, %cst_74 {dimension_numbers = #tpu.dot_dimension_numbers<[1], [0], [0], [1], [0, 0, 1, 1], [], []>} : vector<8x64xbf16>, vector<64x32xbf16>, vector<8x32xf32> -> vector<8x32xf32>
    %c0_75 = arith.constant 0 : index
    %c0_76 = arith.constant 0 : index
    %c0_77 = arith.constant 0 : index
    %138 = vector.load %arg14[%c0_75, %c0_76, %c0_77] : memref<2x1x32xf32, #tpu.memory_space<vmem>>, vector<1x1x32xf32>
    %139 = vector.shape_cast %138 : vector<1x1x32xf32> to vector<1x32xf32>
    %140 = vector.broadcast %139 : vector<1x32xf32> to vector<8x32xf32>
    %141 = arith.addf %137, %140 : vector<8x32xf32>
    %142 = arith.addf %141, %112 : vector<8x32xf32>
    %c0_78 = arith.constant 0 : index
    %c0_79 = arith.constant 0 : index
    %c0_80 = arith.constant 0 : index
    %143 = vector.load %arg15[%c0_78, %c0_79, %c0_80] : memref<2x1x32xf32, #tpu.memory_space<vmem>>, vector<1x1x32xf32>
    %144 = vector.shape_cast %143 : vector<1x1x32xf32> to vector<1x32xf32>
    %c0_81 = arith.constant 0 : index
    %c0_82 = arith.constant 0 : index
    %c0_83 = arith.constant 0 : index
    %145 = vector.load %arg16[%c0_81, %c0_82, %c0_83] : memref<2x1x32xf32, #tpu.memory_space<vmem>>, vector<1x1x32xf32>
    %146 = vector.shape_cast %145 : vector<1x1x32xf32> to vector<1x32xf32>
    %cst_84 = arith.constant dense<0.000000e+00> : vector<8xf32>
    %147 = vector.multi_reduction <add>, %142, %cst_84 [1] : vector<8x32xf32> to vector<8xf32>
    %148 = vector.shape_cast %147 : vector<8xf32> to vector<8x1xf32>
    %cst_85 = arith.constant 3.200000e+01 : f32
    %149 = vector.broadcast %cst_85 : f32 to vector<8x1xf32>
    %150 = arith.divf %148, %149 : vector<8x1xf32>
    %151 = vector.broadcast %150 : vector<8x1xf32> to vector<8x32xf32>
    %152 = arith.subf %142, %151 : vector<8x32xf32>
    %153 = arith.mulf %152, %152 : vector<8x32xf32>
    %cst_86 = arith.constant dense<0.000000e+00> : vector<8xf32>
    %154 = vector.multi_reduction <add>, %153, %cst_86 [1] : vector<8x32xf32> to vector<8xf32>
    %155 = vector.shape_cast %154 : vector<8xf32> to vector<8x1xf32>
    %cst_87 = arith.constant 3.200000e+01 : f32
    %156 = vector.broadcast %cst_87 : f32 to vector<8x1xf32>
    %157 = arith.divf %155, %156 : vector<8x1xf32>
    %158 = vector.broadcast %150 : vector<8x1xf32> to vector<8x32xf32>
    %159 = arith.subf %142, %158 : vector<8x32xf32>
    %cst_88 = arith.constant 9.99999996E-13 : f32
    %160 = vector.broadcast %cst_88 : f32 to vector<8x1xf32>
    %161 = arith.addf %157, %160 : vector<8x1xf32>
    %162 = math.rsqrt %161 : vector<8x1xf32>
    %163 = vector.broadcast %162 : vector<8x1xf32> to vector<8x32xf32>
    %164 = arith.mulf %159, %163 : vector<8x32xf32>
    %165 = vector.broadcast %144 : vector<1x32xf32> to vector<8x32xf32>
    %166 = arith.mulf %164, %165 : vector<8x32xf32>
    %167 = vector.broadcast %146 : vector<1x32xf32> to vector<8x32xf32>
    %168 = arith.addf %166, %167 : vector<8x32xf32>
    %169 = arith.truncf %168 : vector<8x32xf32> to vector<8x32xbf16>
    %c1_89 = arith.constant 1 : index
    %c0_90 = arith.constant 0 : index
    %c0_91 = arith.constant 0 : index
    %c0_92 = arith.constant 0 : index
    %170 = vector.load %arg5[%c1_89, %c0_90, %c0_91, %c0_92] : memref<2x3x32x32xbf16, #tpu.memory_space<vmem>>, vector<1x1x32x32xbf16>
    %171 = vector.shape_cast %170 : vector<1x1x32x32xbf16> to vector<32x32xbf16>
    %cst_93 = arith.constant dense<0.000000e+00> : vector<8x32xf32>
    %172 = tpu.matmul %169, %171, %cst_93 {dimension_numbers = #tpu.dot_dimension_numbers<[1], [0], [0], [1], [0, 0, 1, 1], [], []>} : vector<8x32xbf16>, vector<32x32xbf16>, vector<8x32xf32> -> vector<8x32xf32>
    %c1_94 = arith.constant 1 : index
    %c0_95 = arith.constant 0 : index
    %c0_96 = arith.constant 0 : index
    %c0_97 = arith.constant 0 : index
    %173 = vector.load %arg6[%c1_94, %c0_95, %c0_96, %c0_97] : memref<2x3x1x32xf32, #tpu.memory_space<vmem>>, vector<1x1x1x32xf32>
    %174 = vector.shape_cast %173 : vector<1x1x1x32xf32> to vector<1x32xf32>
    %175 = vector.broadcast %174 : vector<1x32xf32> to vector<8x32xf32>
    %176 = arith.addf %172, %175 : vector<8x32xf32>
    %c1_98 = arith.constant 1 : index
    %c1_99 = arith.constant 1 : index
    %c0_100 = arith.constant 0 : index
    %c0_101 = arith.constant 0 : index
    %177 = vector.load %arg5[%c1_98, %c1_99, %c0_100, %c0_101] : memref<2x3x32x32xbf16, #tpu.memory_space<vmem>>, vector<1x1x32x32xbf16>
    %178 = vector.shape_cast %177 : vector<1x1x32x32xbf16> to vector<32x32xbf16>
    %cst_102 = arith.constant dense<0.000000e+00> : vector<8x32xf32>
    %179 = tpu.matmul %169, %178, %cst_102 {dimension_numbers = #tpu.dot_dimension_numbers<[1], [0], [0], [1], [0, 0, 1, 1], [], []>} : vector<8x32xbf16>, vector<32x32xbf16>, vector<8x32xf32> -> vector<8x32xf32>
    %c1_103 = arith.constant 1 : index
    %c1_104 = arith.constant 1 : index
    %c0_105 = arith.constant 0 : index
    %c0_106 = arith.constant 0 : index
    %180 = vector.load %arg6[%c1_103, %c1_104, %c0_105, %c0_106] : memref<2x3x1x32xf32, #tpu.memory_space<vmem>>, vector<1x1x1x32xf32>
    %181 = vector.shape_cast %180 : vector<1x1x1x32xf32> to vector<1x32xf32>
    %182 = vector.broadcast %181 : vector<1x32xf32> to vector<8x32xf32>
    %183 = arith.addf %179, %182 : vector<8x32xf32>
    %c1_107 = arith.constant 1 : index
    %c2_108 = arith.constant 2 : index
    %c0_109 = arith.constant 0 : index
    %c0_110 = arith.constant 0 : index
    %184 = vector.load %arg5[%c1_107, %c2_108, %c0_109, %c0_110] : memref<2x3x32x32xbf16, #tpu.memory_space<vmem>>, vector<1x1x32x32xbf16>
    %185 = vector.shape_cast %184 : vector<1x1x32x32xbf16> to vector<32x32xbf16>
    %cst_111 = arith.constant dense<0.000000e+00> : vector<8x32xf32>
    %186 = tpu.matmul %169, %185, %cst_111 {dimension_numbers = #tpu.dot_dimension_numbers<[1], [0], [0], [1], [0, 0, 1, 1], [], []>} : vector<8x32xbf16>, vector<32x32xbf16>, vector<8x32xf32> -> vector<8x32xf32>
    %c1_112 = arith.constant 1 : index
    %c2_113 = arith.constant 2 : index
    %c0_114 = arith.constant 0 : index
    %c0_115 = arith.constant 0 : index
    %187 = vector.load %arg6[%c1_112, %c2_113, %c0_114, %c0_115] : memref<2x3x1x32xf32, #tpu.memory_space<vmem>>, vector<1x1x1x32xf32>
    %188 = vector.shape_cast %187 : vector<1x1x1x32xf32> to vector<1x32xf32>
    %189 = vector.broadcast %188 : vector<1x32xf32> to vector<8x32xf32>
    %190 = arith.addf %186, %189 : vector<8x32xf32>
    %191 = vector.shape_cast %176 : vector<8x32xf32> to vector<8x4x8xf32>
    %192 = tpu.transpose %191, [1, 0, 2] : vector<8x4x8xf32> -> vector<4x8x8xf32>
    %193 = arith.truncf %192 : vector<4x8x8xf32> to vector<4x8x8xbf16>
    %194 = vector.shape_cast %183 : vector<8x32xf32> to vector<8x4x8xf32>
    %195 = tpu.transpose %194, [1, 0, 2] : vector<8x4x8xf32> -> vector<4x8x8xf32>
    %196 = arith.truncf %195 : vector<4x8x8xf32> to vector<4x8x8xbf16>
    %197 = vector.shape_cast %190 : vector<8x32xf32> to vector<8x4x8xf32>
    %198 = tpu.transpose %197, [1, 0, 2] : vector<8x4x8xf32> -> vector<4x8x8xf32>
    %199 = arith.truncf %198 : vector<4x8x8xf32> to vector<4x8x8xbf16>
    "tpu.trace_start"() <{level = 10 : i32, message = "hqd,hkd->hqk"}> : () -> ()
    %cst_116 = arith.constant dense<0.000000e+00> : vector<4x8x8xf32>
    %200 = tpu.matmul %193, %196, %cst_116 {dimension_numbers = #tpu.dot_dimension_numbers<[2], [2], [1], [1], [0, 0, 0, 1, 1, 1], [0], [0]>} : vector<4x8x8xbf16>, vector<4x8x8xbf16>, vector<4x8x8xf32> -> vector<4x8x8xf32>
    "tpu.trace_stop"() : () -> ()
    %201 = arith.addf %200, %30 : vector<4x8x8xf32>
    %cst_117 = arith.constant dense<0xFF800000> : vector<4x8xf32>
    %202 = vector.multi_reduction <maximumf>, %201, %cst_117 [2] : vector<4x8x8xf32> to vector<4x8xf32>
    %203 = vector.shape_cast %202 : vector<4x8xf32> to vector<4x8x1xf32>
    %204 = vector.broadcast %203 : vector<4x8x1xf32> to vector<4x8x8xf32>
    %205 = arith.subf %201, %204 : vector<4x8x8xf32>
    %206 = math.exp %205 : vector<4x8x8xf32>
    %cst_118 = arith.constant dense<0.000000e+00> : vector<4x8xf32>
    %207 = vector.multi_reduction <add>, %206, %cst_118 [2] : vector<4x8x8xf32> to vector<4x8xf32>
    %208 = vector.shape_cast %207 : vector<4x8xf32> to vector<4x8x1xf32>
    %209 = tpu.reciprocal %208 {approx = true} : vector<4x8x1xf32> -> vector<4x8x1xf32>
    %210 = vector.broadcast %209 : vector<4x8x1xf32> to vector<4x8x8xf32>
    %211 = arith.mulf %206, %210 : vector<4x8x8xf32>
    %212 = arith.truncf %211 : vector<4x8x8xf32> to vector<4x8x8xbf16>
    "tpu.trace_start"() <{level = 10 : i32, message = "hqk,hkd->hqd"}> : () -> ()
    %cst_119 = arith.constant dense<0.000000e+00> : vector<4x8x8xf32>
    %213 = tpu.matmul %212, %199, %cst_119 {dimension_numbers = #tpu.dot_dimension_numbers<[2], [1], [1], [2], [0, 0, 0, 1, 1, 2], [0], [0]>} : vector<4x8x8xbf16>, vector<4x8x8xbf16>, vector<4x8x8xf32> -> vector<4x8x8xf32>
    "tpu.trace_stop"() : () -> ()
    %214 = tpu.transpose %213, [1, 0, 2] : vector<4x8x8xf32> -> vector<8x4x8xf32>
    %215 = vector.shape_cast %214 : vector<8x4x8xf32> to vector<8x32xf32>
    %216 = arith.truncf %215 : vector<8x32xf32> to vector<8x32xbf16>
    %c1_120 = arith.constant 1 : index
    %c0_121 = arith.constant 0 : index
    %c0_122 = arith.constant 0 : index
    %217 = vector.load %arg7[%c1_120, %c0_121, %c0_122] : memref<2x32x32xbf16, #tpu.memory_space<vmem>>, vector<1x32x32xbf16>
    %218 = vector.shape_cast %217 : vector<1x32x32xbf16> to vector<32x32xbf16>
    %cst_123 = arith.constant dense<0.000000e+00> : vector<8x32xf32>
    %219 = tpu.matmul %216, %218, %cst_123 {dimension_numbers = #tpu.dot_dimension_numbers<[1], [0], [0], [1], [0, 0, 1, 1], [], []>} : vector<8x32xbf16>, vector<32x32xbf16>, vector<8x32xf32> -> vector<8x32xf32>
    %c1_124 = arith.constant 1 : index
    %c0_125 = arith.constant 0 : index
    %c0_126 = arith.constant 0 : index
    %220 = vector.load %arg8[%c1_124, %c0_125, %c0_126] : memref<2x1x32xf32, #tpu.memory_space<vmem>>, vector<1x1x32xf32>
    %221 = vector.shape_cast %220 : vector<1x1x32xf32> to vector<1x32xf32>
    %222 = vector.broadcast %221 : vector<1x32xf32> to vector<8x32xf32>
    %223 = arith.addf %219, %222 : vector<8x32xf32>
    %224 = arith.addf %223, %168 : vector<8x32xf32>
    %c1_127 = arith.constant 1 : index
    %c0_128 = arith.constant 0 : index
    %c0_129 = arith.constant 0 : index
    %225 = vector.load %arg9[%c1_127, %c0_128, %c0_129] : memref<2x1x32xf32, #tpu.memory_space<vmem>>, vector<1x1x32xf32>
    %226 = vector.shape_cast %225 : vector<1x1x32xf32> to vector<1x32xf32>
    %c1_130 = arith.constant 1 : index
    %c0_131 = arith.constant 0 : index
    %c0_132 = arith.constant 0 : index
    %227 = vector.load %arg10[%c1_130, %c0_131, %c0_132] : memref<2x1x32xf32, #tpu.memory_space<vmem>>, vector<1x1x32xf32>
    %228 = vector.shape_cast %227 : vector<1x1x32xf32> to vector<1x32xf32>
    %cst_133 = arith.constant dense<0.000000e+00> : vector<8xf32>
    %229 = vector.multi_reduction <add>, %224, %cst_133 [1] : vector<8x32xf32> to vector<8xf32>
    %230 = vector.shape_cast %229 : vector<8xf32> to vector<8x1xf32>
    %cst_134 = arith.constant 3.200000e+01 : f32
    %231 = vector.broadcast %cst_134 : f32 to vector<8x1xf32>
    %232 = arith.divf %230, %231 : vector<8x1xf32>
    %233 = vector.broadcast %232 : vector<8x1xf32> to vector<8x32xf32>
    %234 = arith.subf %224, %233 : vector<8x32xf32>
    %235 = arith.mulf %234, %234 : vector<8x32xf32>
    %cst_135 = arith.constant dense<0.000000e+00> : vector<8xf32>
    %236 = vector.multi_reduction <add>, %235, %cst_135 [1] : vector<8x32xf32> to vector<8xf32>
    %237 = vector.shape_cast %236 : vector<8xf32> to vector<8x1xf32>
    %cst_136 = arith.constant 3.200000e+01 : f32
    %238 = vector.broadcast %cst_136 : f32 to vector<8x1xf32>
    %239 = arith.divf %237, %238 : vector<8x1xf32>
    %240 = vector.broadcast %232 : vector<8x1xf32> to vector<8x32xf32>
    %241 = arith.subf %224, %240 : vector<8x32xf32>
    %cst_137 = arith.constant 9.99999996E-13 : f32
    %242 = vector.broadcast %cst_137 : f32 to vector<8x1xf32>
    %243 = arith.addf %239, %242 : vector<8x1xf32>
    %244 = math.rsqrt %243 : vector<8x1xf32>
    %245 = vector.broadcast %244 : vector<8x1xf32> to vector<8x32xf32>
    %246 = arith.mulf %241, %245 : vector<8x32xf32>
    %247 = vector.broadcast %226 : vector<1x32xf32> to vector<8x32xf32>
    %248 = arith.mulf %246, %247 : vector<8x32xf32>
    %249 = vector.broadcast %228 : vector<1x32xf32> to vector<8x32xf32>
    %250 = arith.addf %248, %249 : vector<8x32xf32>
    %251 = arith.truncf %250 : vector<8x32xf32> to vector<8x32xbf16>
    %c1_138 = arith.constant 1 : index
    %c0_139 = arith.constant 0 : index
    %c0_140 = arith.constant 0 : index
    %252 = vector.load %arg11[%c1_138, %c0_139, %c0_140] : memref<2x32x64xbf16, #tpu.memory_space<vmem>>, vector<1x32x64xbf16>
    %253 = vector.shape_cast %252 : vector<1x32x64xbf16> to vector<32x64xbf16>
    %cst_141 = arith.constant dense<0.000000e+00> : vector<8x64xf32>
    %254 = tpu.matmul %251, %253, %cst_141 {dimension_numbers = #tpu.dot_dimension_numbers<[1], [0], [0], [1], [0, 0, 1, 1], [], []>} : vector<8x32xbf16>, vector<32x64xbf16>, vector<8x64xf32> -> vector<8x64xf32>
    %c1_142 = arith.constant 1 : index
    %c0_143 = arith.constant 0 : index
    %c0_144 = arith.constant 0 : index
    %255 = vector.load %arg12[%c1_142, %c0_143, %c0_144] : memref<2x1x64xf32, #tpu.memory_space<vmem>>, vector<1x1x64xf32>
    %256 = vector.shape_cast %255 : vector<1x1x64xf32> to vector<1x64xf32>
    %257 = vector.broadcast %256 : vector<1x64xf32> to vector<8x64xf32>
    %258 = arith.addf %254, %257 : vector<8x64xf32>
    %cst_145 = arith.constant 5.000000e-01 : f32
    %259 = vector.broadcast %cst_145 : f32 to vector<8x64xf32>
    %260 = arith.mulf %259, %258 : vector<8x64xf32>
    %cst_146 = arith.constant 4.471500e-02 : f32
    %261 = vector.broadcast %cst_146 : f32 to vector<8x64xf32>
    %262 = arith.mulf %261, %258 : vector<8x64xf32>
    %263 = arith.mulf %262, %258 : vector<8x64xf32>
    %264 = arith.mulf %263, %258 : vector<8x64xf32>
    %265 = arith.addf %258, %264 : vector<8x64xf32>
    %cst_147 = arith.constant 0.797884583 : f32
    %266 = vector.broadcast %cst_147 : f32 to vector<8x64xf32>
    %267 = arith.mulf %266, %265 : vector<8x64xf32>
    %268 = math.tanh %267 : vector<8x64xf32>
    %cst_148 = arith.constant 1.000000e+00 : f32
    %269 = vector.broadcast %cst_148 : f32 to vector<8x64xf32>
    %270 = arith.addf %269, %268 : vector<8x64xf32>
    %271 = arith.mulf %260, %270 : vector<8x64xf32>
    %272 = arith.truncf %271 : vector<8x64xf32> to vector<8x64xbf16>
    %c1_149 = arith.constant 1 : index
    %c0_150 = arith.constant 0 : index
    %c0_151 = arith.constant 0 : index
    %273 = vector.load %arg13[%c1_149, %c0_150, %c0_151] : memref<2x64x32xbf16, #tpu.memory_space<vmem>>, vector<1x64x32xbf16>
    %274 = vector.shape_cast %273 : vector<1x64x32xbf16> to vector<64x32xbf16>
    %cst_152 = arith.constant dense<0.000000e+00> : vector<8x32xf32>
    %275 = tpu.matmul %272, %274, %cst_152 {dimension_numbers = #tpu.dot_dimension_numbers<[1], [0], [0], [1], [0, 0, 1, 1], [], []>} : vector<8x64xbf16>, vector<64x32xbf16>, vector<8x32xf32> -> vector<8x32xf32>
    %c1_153 = arith.constant 1 : index
    %c0_154 = arith.constant 0 : index
    %c0_155 = arith.constant 0 : index
    %276 = vector.load %arg14[%c1_153, %c0_154, %c0_155] : memref<2x1x32xf32, #tpu.memory_space<vmem>>, vector<1x1x32xf32>
    %277 = vector.shape_cast %276 : vector<1x1x32xf32> to vector<1x32xf32>
    %278 = vector.broadcast %277 : vector<1x32xf32> to vector<8x32xf32>
    %279 = arith.addf %275, %278 : vector<8x32xf32>
    %280 = arith.addf %279, %250 : vector<8x32xf32>
    %c1_156 = arith.constant 1 : index
    %c0_157 = arith.constant 0 : index
    %c0_158 = arith.constant 0 : index
    %281 = vector.load %arg15[%c1_156, %c0_157, %c0_158] : memref<2x1x32xf32, #tpu.memory_space<vmem>>, vector<1x1x32xf32>
    %282 = vector.shape_cast %281 : vector<1x1x32xf32> to vector<1x32xf32>
    %c1_159 = arith.constant 1 : index
    %c0_160 = arith.constant 0 : index
    %c0_161 = arith.constant 0 : index
    %283 = vector.load %arg16[%c1_159, %c0_160, %c0_161] : memref<2x1x32xf32, #tpu.memory_space<vmem>>, vector<1x1x32xf32>
    %284 = vector.shape_cast %283 : vector<1x1x32xf32> to vector<1x32xf32>
    %cst_162 = arith.constant dense<0.000000e+00> : vector<8xf32>
    %285 = vector.multi_reduction <add>, %280, %cst_162 [1] : vector<8x32xf32> to vector<8xf32>
    %286 = vector.shape_cast %285 : vector<8xf32> to vector<8x1xf32>
    %cst_163 = arith.constant 3.200000e+01 : f32
    %287 = vector.broadcast %cst_163 : f32 to vector<8x1xf32>
    %288 = arith.divf %286, %287 : vector<8x1xf32>
    %289 = vector.broadcast %288 : vector<8x1xf32> to vector<8x32xf32>
    %290 = arith.subf %280, %289 : vector<8x32xf32>
    %291 = arith.mulf %290, %290 : vector<8x32xf32>
    %cst_164 = arith.constant dense<0.000000e+00> : vector<8xf32>
    %292 = vector.multi_reduction <add>, %291, %cst_164 [1] : vector<8x32xf32> to vector<8xf32>
    %293 = vector.shape_cast %292 : vector<8xf32> to vector<8x1xf32>
    %cst_165 = arith.constant 3.200000e+01 : f32
    %294 = vector.broadcast %cst_165 : f32 to vector<8x1xf32>
    %295 = arith.divf %293, %294 : vector<8x1xf32>
    %296 = vector.broadcast %288 : vector<8x1xf32> to vector<8x32xf32>
    %297 = arith.subf %280, %296 : vector<8x32xf32>
    %cst_166 = arith.constant 9.99999996E-13 : f32
    %298 = vector.broadcast %cst_166 : f32 to vector<8x1xf32>
    %299 = arith.addf %295, %298 : vector<8x1xf32>
    %300 = math.rsqrt %299 : vector<8x1xf32>
    %301 = vector.broadcast %300 : vector<8x1xf32> to vector<8x32xf32>
    %302 = arith.mulf %297, %301 : vector<8x32xf32>
    %303 = vector.broadcast %282 : vector<1x32xf32> to vector<8x32xf32>
    %304 = arith.mulf %302, %303 : vector<8x32xf32>
    %305 = vector.broadcast %284 : vector<1x32xf32> to vector<8x32xf32>
    %306 = arith.addf %304, %305 : vector<8x32xf32>
    %307 = vector.extract_strided_slice %306 {offsets = [0, 0], sizes = [1, 32], strides = [1, 1]} : vector<8x32xf32> to vector<1x32xf32>
    %308 = arith.truncf %307 : vector<1x32xf32> to vector<1x32xbf16>
    %c0_167 = arith.constant 0 : index
    %c0_168 = arith.constant 0 : index
    %309 = vector.load %arg17[%c0_167, %c0_168] : memref<32x128xbf16, #tpu.memory_space<vmem>>, vector<32x128xbf16>
    %cst_169 = arith.constant dense<0.000000e+00> : vector<1x128xf32>
    %310 = tpu.matmul %308, %309, %cst_169 {dimension_numbers = #tpu.dot_dimension_numbers<[1], [0], [0], [1], [0, 0, 1, 1], [], []>} : vector<1x32xbf16>, vector<32x128xbf16>, vector<1x128xf32> -> vector<1x128xf32>
    %c0_170 = arith.constant 0 : index
    %c0_171 = arith.constant 0 : index
    %311 = vector.load %arg18[%c0_170, %c0_171] : memref<1x128xf32, #tpu.memory_space<vmem>>, vector<1x128xf32>
    %312 = arith.addf %310, %311 : vector<1x128xf32>
    %313 = math.tanh %312 : vector<1x128xf32>
    %c0_172 = arith.constant 0 : index
    %c0_173 = arith.constant 0 : index
    %c0_174 = arith.constant 0 : index
    %314 = vector.load %arg22[%c0_172, %c0_173, %c0_174] : memref<1x1x128xf32, #tpu.memory_space<vmem>>, vector<1x1x128xf32>
    %315 = vector.shape_cast %314 : vector<1x1x128xf32> to vector<1x128xf32>
    %316 = vector.shape_cast %313 : vector<1x128xf32> to vector<1x1x128xf32>
    tpu.vector_store %arg22[%c0_172, %c0_173, %c0_174], %316 {strides = array<i32>} : memref<1x1x128xf32, #tpu.memory_space<vmem>>, vector<1x1x128xf32>,
    %317 = arith.truncf %313 : vector<1x128xf32> to vector<1x128xbf16>
    %c0_175 = arith.constant 0 : index
    %c0_176 = arith.constant 0 : index
    %318 = vector.load %arg19[%c0_175, %c0_176] : memref<128x128xbf16, #tpu.memory_space<vmem>>, vector<128x128xbf16>
    %cst_177 = arith.constant dense<0.000000e+00> : vector<1x128xf32>
    %319 = tpu.matmul %317, %318, %cst_177 {dimension_numbers = #tpu.dot_dimension_numbers<[1], [0], [0], [1], [0, 0, 1, 1], [], []>} : vector<1x128xbf16>, vector<128x128xbf16>, vector<1x128xf32> -> vector<1x128xf32>
    %c0_178 = arith.constant 0 : index
    %c0_179 = arith.constant 0 : index
    %320 = vector.load %arg20[%c0_178, %c0_179] : memref<1x128xf32, #tpu.memory_space<vmem>>, vector<1x128xf32>
    %321 = arith.addf %319, %320 : vector<1x128xf32>
    %c0_180 = arith.constant 0 : index
    %c0_181 = arith.constant 0 : index
    %c0_182 = arith.constant 0 : index
    %322 = vector.load %arg21[%c0_180, %c0_181, %c0_182] : memref<1x1x128xf32, #tpu.memory_space<vmem>>, vector<1x1x128xf32>
    %323 = vector.shape_cast %322 : vector<1x1x128xf32> to vector<1x128xf32>
    %324 = vector.shape_cast %321 : vector<1x128xf32> to vector<1x1x128xf32>
    tpu.vector_store %arg21[%c0_180, %c0_181, %c0_182], %324 {strides = array<i32>} : memref<1x1x128xf32, #tpu.memory_space<vmem>>, vector<1x1x128xf32>,
    return
  }
  func.func @transform_0(%arg0: i32) -> (i32, i32, i32) {
    %c0_i32 = arith.constant 0 : i32
    %c0_i32_0 = arith.constant 0 : i32
    %c0_i32_1 = arith.constant 0 : i32
    return %arg0, %c0_i32, %c0_i32_0 : i32, i32, i32
  }
  func.func @transform_1(%arg0: i32) -> (i32, i32, i32) {
    %c0_i32 = arith.constant 0 : i32
    %c0_i32_0 = arith.constant 0 : i32
    %c0_i32_1 = arith.constant 0 : i32
    return %arg0, %c0_i32, %c0_i32_0 : i32, i32, i32
  }
  func.func @transform_2(%arg0: i32) -> (i32, i32) {
    %c0_i32 = arith.constant 0 : i32
    %c0_i32_0 = arith.constant 0 : i32
    %c0_i32_1 = arith.constant 0 : i32
    return %c0_i32, %c0_i32_0 : i32, i32
  }
  func.func @transform_3(%arg0: i32) -> (i32, i32) {
    %c0_i32 = arith.constant 0 : i32
    %c0_i32_0 = arith.constant 0 : i32
    %c0_i32_1 = arith.constant 0 : i32
    return %c0_i32, %c0_i32_0 : i32, i32
  }
  func.func @transform_4(%arg0: i32) -> (i32, i32, i32, i32) {
    %c0_i32 = arith.constant 0 : i32
    %c0_i32_0 = arith.constant 0 : i32
    %c0_i32_1 = arith.constant 0 : i32
    %c0_i32_2 = arith.constant 0 : i32
    %c0_i32_3 = arith.constant 0 : i32
    return %c0_i32, %c0_i32_0, %c0_i32_1, %c0_i32_2 : i32, i32, i32, i32
  }
  func.func @transform_5(%arg0: i32) -> (i32, i32, i32, i32) {
    %c0_i32 = arith.constant 0 : i32
    %c0_i32_0 = arith.constant 0 : i32
    %c0_i32_1 = arith.constant 0 : i32
    %c0_i32_2 = arith.constant 0 : i32
    %c0_i32_3 = arith.constant 0 : i32
    return %c0_i32, %c0_i32_0, %c0_i32_1, %c0_i32_2 : i32, i32, i32, i32
  }
  func.func @transform_6(%arg0: i32) -> (i32, i32, i32) {
    %c0_i32 = arith.constant 0 : i32
    %c0_i32_0 = arith.constant 0 : i32
    %c0_i32_1 = arith.constant 0 : i32
    %c0_i32_2 = arith.constant 0 : i32
    return %c0_i32, %c0_i32_0, %c0_i32_1 : i32, i32, i32
  }
  func.func @transform_7(%arg0: i32) -> (i32, i32, i32) {
    %c0_i32 = arith.constant 0 : i32
    %c0_i32_0 = arith.constant 0 : i32
    %c0_i32_1 = arith.constant 0 : i32
    %c0_i32_2 = arith.constant 0 : i32
    return %c0_i32, %c0_i32_0, %c0_i32_1 : i32, i32, i32
  }
  func.func @transform_8(%arg0: i32) -> (i32, i32, i32) {
    %c0_i32 = arith.constant 0 : i32
    %c0_i32_0 = arith.constant 0 : i32
    %c0_i32_1 = arith.constant 0 : i32
    %c0_i32_2 = arith.constant 0 : i32
    return %c0_i32, %c0_i32_0, %c0_i32_1 : i32, i32, i32
  }
  func.func @transform_9(%arg0: i32) -> (i32, i32, i32) {
    %c0_i32 = arith.constant 0 : i32
    %c0_i32_0 = arith.constant 0 : i32
    %c0_i32_1 = arith.constant 0 : i32
    %c0_i32_2 = arith.constant 0 : i32
    return %c0_i32, %c0_i32_0, %c0_i32_1 : i32, i32, i32
  }
  func.func @transform_10(%arg0: i32) -> (i32, i32, i32) {
    %c0_i32 = arith.constant 0 : i32
    %c0_i32_0 = arith.constant 0 : i32
    %c0_i32_1 = arith.constant 0 : i32
    %c0_i32_2 = arith.constant 0 : i32
    return %c0_i32, %c0_i32_0, %c0_i32_1 : i32, i32, i32
  }
  func.func @transform_11(%arg0: i32) -> (i32, i32, i32) {
    %c0_i32 = arith.constant 0 : i32
    %c0_i32_0 = arith.constant 0 : i32
    %c0_i32_1 = arith.constant 0 : i32
    %c0_i32_2 = arith.constant 0 : i32
    return %c0_i32, %c0_i32_0, %c0_i32_1 : i32, i32, i32
  }
  func.func @transform_12(%arg0: i32) -> (i32, i32, i32) {
    %c0_i32 = arith.constant 0 : i32
    %c0_i32_0 = arith.constant 0 : i32
    %c0_i32_1 = arith.constant 0 : i32
    %c0_i32_2 = arith.constant 0 : i32
    return %c0_i32, %c0_i32_0, %c0_i32_1 : i32, i32, i32
  }
  func.func @transform_13(%arg0: i32) -> (i32, i32, i32) {
    %c0_i32 = arith.constant 0 : i32
    %c0_i32_0 = arith.constant 0 : i32
    %c0_i32_1 = arith.constant 0 : i32
    %c0_i32_2 = arith.constant 0 : i32
    return %c0_i32, %c0_i32_0, %c0_i32_1 : i32, i32, i32
  }
  func.func @transform_14(%arg0: i32) -> (i32, i32, i32) {
    %c0_i32 = arith.constant 0 : i32
    %c0_i32_0 = arith.constant 0 : i32
    %c0_i32_1 = arith.constant 0 : i32
    %c0_i32_2 = arith.constant 0 : i32
    return %c0_i32, %c0_i32_0, %c0_i32_1 : i32, i32, i32
  }
  func.func @transform_15(%arg0: i32) -> (i32, i32, i32) {
    %c0_i32 = arith.constant 0 : i32
    %c0_i32_0 = arith.constant 0 : i32
    %c0_i32_1 = arith.constant 0 : i32
    %c0_i32_2 = arith.constant 0 : i32
    return %c0_i32, %c0_i32_0, %c0_i32_1 : i32, i32, i32
  }
  func.func @transform_16(%arg0: i32) -> (i32, i32) {
    %c0_i32 = arith.constant 0 : i32
    %c0_i32_0 = arith.constant 0 : i32
    %c0_i32_1 = arith.constant 0 : i32
    return %c0_i32, %c0_i32_0 : i32, i32
  }
  func.func @transform_17(%arg0: i32) -> (i32, i32) {
    %c0_i32 = arith.constant 0 : i32
    %c0_i32_0 = arith.constant 0 : i32
    %c0_i32_1 = arith.constant 0 : i32
    return %c0_i32, %c0_i32_0 : i32, i32
  }
  func.func @transform_18(%arg0: i32) -> (i32, i32) {
    %c0_i32 = arith.constant 0 : i32
    %c0_i32_0 = arith.constant 0 : i32
    %c0_i32_1 = arith.constant 0 : i32
    return %c0_i32, %c0_i32_0 : i32, i32
  }
  func.func @transform_19(%arg0: i32) -> (i32, i32) {
    %c0_i32 = arith.constant 0 : i32
    %c0_i32_0 = arith.constant 0 : i32
    %c0_i32_1 = arith.constant 0 : i32
    return %c0_i32, %c0_i32_0 : i32, i32
  }
  func.func @transform_20(%arg0: i32) -> (i32, i32, i32) {
    %c0_i32 = arith.constant 0 : i32
    %c0_i32_0 = arith.constant 0 : i32
    %c0_i32_1 = arith.constant 0 : i32
    return %arg0, %c0_i32, %c0_i32_0 : i32, i32, i32
  }
  func.func @transform_21(%arg0: i32) -> (i32, i32, i32) {
    %c0_i32 = arith.constant 0 : i32
    %c0_i32_0 = arith.constant 0 : i32
    %c0_i32_1 = arith.constant 0 : i32
    return %arg0, %c0_i32, %c0_i32_0 : i32, i32, i32
  }
}

</mosaic_0001>

<llo_original>
// kernel: bert_forward.1
$region0: #{bert_forward.1}
  #allocation0 [shape = 'u32[]', space=smem, size = 0x4, offset = 0x4, fixed_abs, tag = 'smem constant byte address 0x4 - core index']
  #allocation1 [shape = 'u32[72,128]{1,0:T(1,128)}', space=vmem, size = 0x9000, scoped, tag = 'internal scratch']
  %s0 = inlined_call_operand.vmem [shape: f32[2,8,32], index: 0, kind: input, shape index: {}]
  %s1 = inlined_call_operand.vmem [shape: f32[2,1,8], index: 1, kind: input, shape index: {}]
  %s2 = inlined_call_operand.vmem [shape: f32[1,32], index: 2, kind: input, shape index: {}]
  %s3 = inlined_call_operand.vmem [shape: f32[1,32], index: 3, kind: input, shape index: {}]
  %s4 = inlined_call_operand.vmem [shape: bf16[2,3,32,32], index: 4, kind: input, shape index: {}]
  %s5 = inlined_call_operand.vmem [shape: f32[2,3,1,32], index: 5, kind: input, shape index: {}]
  %s6 = inlined_call_operand.vmem [shape: bf16[2,32,32], index: 6, kind: input, shape index: {}]
  %s7 = inlined_call_operand.vmem [shape: f32[2,1,32], index: 7, kind: input, shape index: {}]
  %s8 = inlined_call_operand.vmem [shape: f32[2,1,32], index: 8, kind: input, shape index: {}]
  %s9 = inlined_call_operand.vmem [shape: f32[2,1,32], index: 9, kind: input, shape index: {}]
  %s10 = inlined_call_operand.vmem [shape: bf16[2,32,64], index: 10, kind: input, shape index: {}]
  %s11 = inlined_call_operand.vmem [shape: f32[2,1,64], index: 11, kind: input, shape index: {}]
  %s12 = inlined_call_operand.vmem [shape: bf16[2,64,32], index: 12, kind: input, shape index: {}]
  %s13 = inlined_call_operand.vmem [shape: f32[2,1,32], index: 13, kind: input, shape index: {}]
  %s14 = inlined_call_operand.vmem [shape: f32[2,1,32], index: 14, kind: input, shape index: {}]
  %s15 = inlined_call_operand.vmem [shape: f32[2,1,32], index: 15, kind: input, shape index: {}]
  %s16 = inlined_call_operand.vmem [shape: bf16[32,128], index: 16, kind: input, shape index: {}]
  %s17 = inlined_call_operand.vmem [shape: f32[1,128], index: 17, kind: input, shape index: {}]
  %s18 = inlined_call_operand.vmem [shape: bf16[128,128], index: 18, kind: input, shape index: {}]
  %s19 = inlined_call_operand.vmem [shape: f32[1,128], index: 19, kind: input, shape index: {}]
  %s20 = inlined_call_operand.hbm [shape: f32[2,1,128], index: 20, kind: output, shape index: {0}]
  %s21 = inlined_call_operand.hbm [shape: f32[2,1,128], index: 21, kind: output, shape index: {1}]
  %22 = xla_tuple %s20, %s21
  %s23 = sld [smem:[#allocation0]]
  $region121: #{bert_forward.1} parent=0
    _
  %s25 = ssub.s32 1, %s23
  %s26 = scalar_select 0, %s25, %s23
  $region1: #{bert_forward.1} parent=0
    #allocation2 [shape = 'u8[1024]{0}', space=vmem, size = 0x400, scoped, tag = 'output window, operand 0']
    #allocation3 [shape = 's32[2]{0}', space=sflag, size = 0x8, scoped, tag = 'scoped memory for bert_forward.1']
    #allocation4 [shape = 'u8[1024]{0}', space=vmem, size = 0x400, scoped, tag = 'output window, operand 1']
    #allocation5 [shape = 's32[2]{0}', space=sflag, size = 0x8, scoped, tag = 'scoped memory for bert_forward.1']
    %27 = vsyncpa [#allocation3], 0
    %s28 = scalar_lea.sflag [#allocation3], 1
    %29 = vsyncpa %s28, 0
    %30 = vsyncpa [#allocation5], 0
    %s31 = scalar_lea.sflag [#allocation5], 1
    %32 = vsyncpa %s31, 0
    loop: start=0, step=1, limit=4
    $region2: #{bert_forward.1} parent=1 // loop_pre_header
      _
    $region3: #{bert_forward.1} parent=1 // loop_header
      %s34 = sphi 0, %s38
      %p35 = scmp.ge.s32.totalorder %s34, 4
      %s44 = sphi 0, %s46
      %s47 = sphi 0, %s44
      %s48 = sphi 0, %s47
      %s64 = sphi 0, %s48
      %s70 = sphi 0, %s72
      %s73 = sphi 0, %s70
      %s74 = sphi 0, %s73
      %s90 = sphi 0, %s74
      %s94 = sphi 0, %s94
      %s96 = sphi 0, %s94
      %s97 = sphi 0, %s96
      %s111 = sphi 0, %s97
      %s115 = sphi 0, %s115
      %s117 = sphi 0, %s115
      %s118 = sphi 0, %s117
      %s132 = sphi 0, %s118
      %s136 = sphi 0, %s136
      %s138 = sphi 0, %s136
      %s139 = sphi 0, %s138
      %s153 = sphi 0, %s139
      %s157 = sphi 0, %s157
      %s159 = sphi 0, %s157
      %s160 = sphi 0, %s159
      %s174 = sphi 0, %s160
      %s178 = sphi 0, %s178
      %s180 = sphi 0, %s178
      %s181 = sphi 0, %s180
      %s195 = sphi 0, %s181
      %s199 = sphi 0, %s199
      %s201 = sphi 0, %s199
      %s202 = sphi 0, %s201
      %s216 = sphi 0, %s202
      %s220 = sphi 0, %s220
      %s222 = sphi 0, %s220
      %s223 = sphi 0, %s222
      %s237 = sphi 0, %s223
      %s241 = sphi 0, %s241
      %s243 = sphi 0, %s241
      %s244 = sphi 0, %s243
      %s258 = sphi 0, %s244
      %s262 = sphi 0, %s262
      %s264 = sphi 0, %s262
      %s265 = sphi 0, %s264
      %s279 = sphi 0, %s265
      %s283 = sphi 0, %s283
      %s285 = sphi 0, %s283
      %s286 = sphi 0, %s285
      %s300 = sphi 0, %s286
      %s304 = sphi 0, %s304
      %s306 = sphi 0, %s304
      %s307 = sphi 0, %s306
      %s321 = sphi 0, %s307
      %s325 = sphi 0, %s325
      %s327 = sphi 0, %s325
      %s328 = sphi 0, %s327
      %s342 = sphi 0, %s328
      %s346 = sphi 0, %s346
      %s348 = sphi 0, %s346
      %s349 = sphi 0, %s348
      %s363 = sphi 0, %s349
      %s367 = sphi 0, %s367
      %s369 = sphi 0, %s367
      %s370 = sphi 0, %s369
      %s384 = sphi 0, %s370
      %s388 = sphi 0, %s388
      %s390 = sphi 0, %s388
      %s391 = sphi 0, %s390
      %s405 = sphi 0, %s391
      %s409 = sphi 0, %s409
      %s411 = sphi 0, %s409
      %s412 = sphi 0, %s411
      %s426 = sphi 0, %s412
      %s430 = sphi 0, %s430
      %s432 = sphi 0, %s430
      %s433 = sphi 0, %s432
      %s447 = sphi 0, %s433
      %s451 = sphi 0, %s451
      %s453 = sphi 0, %s451
      %s454 = sphi 0, %s453
      %s468 = sphi 0, %s454
      %s474 = sphi 0, %s476
      %s477 = sphi 0, %s474
      %s478 = sphi 0, %s477
      %s494 = sphi 0, %s478
      %s500 = sphi 0, %s502
      %s503 = sphi 0, %s500
      %s504 = sphi 0, %s503
      %s520 = sphi 0, %s504
    $region4: #{bert_forward.1} parent=1 // loop_header_branch
      %37 = sbr.rel (%p35) target = $region8
    $region5: #{bert_forward.1} parent=1 // loop_body
      %s39 = ssub.s32 %s34, 1
      %s40 = ssub.s32 %s34, 2
      %s41 = sadd.s32 %s34, 1
      %s42 = ssub.s32 %s34, %s41
      %p43 = scmp.eq.s32.totalorder %s42, 0
      %s45 = sadd.s32 %s44, 1
      %s46 = scalar_select %p43, %s44, %s45
      %p49 = pneg %p43
      %p50 = scmp.eq.s32.totalorder %s34, 1
      %p51 = por %p49, %p50
      %p52 = scmp.ne.s32.totalorder %s44, %s47
      %p53 = scmp.eq.s32.totalorder %s34, 0
      %p54 = por %p52, %p53
      %p55 = scmp.ne.s32.totalorder %s44, %s47
      %p56 = scmp.eq.s32.totalorder %s39, 1
      %p57 = por %p55, %p56
      %p58 = scmp.ne.s32.totalorder %s47, %s48
      %p59 = scmp.eq.s32.totalorder %s39, 0
      %p60 = por %p58, %p59
      %p61 = scmp.ne.s32.totalorder %s47, %s48
      %p62 = scmp.eq.s32.totalorder %s40, 1
      %p63 = por %p61, %p62
      %p65 = scmp.ne.s32.totalorder %s48, %s64
      %p66 = scmp.eq.s32.totalorder %s40, 0
      %p67 = por %p65, %p66
      %s68 = ssub.s32 %s34, %s41
      %p69 = scmp.eq.s32.totalorder %s68, 0
      %s71 = sadd.s32 %s70, 1
      %s72 = scalar_select %p69, %s70, %s71
      %p75 = pneg %p69
      %p76 = scmp.eq.s32.totalorder %s34, 1
      %p77 = por %p75, %p76
      %p78 = scmp.ne.s32.totalorder %s70, %s73
      %p79 = scmp.eq.s32.totalorder %s34, 0
      %p80 = por %p78, %p79
      %p81 = scmp.ne.s32.totalorder %s70, %s73
      %p82 = scmp.eq.s32.totalorder %s39, 1
      %p83 = por %p81, %p82
      %p84 = scmp.ne.s32.totalorder %s73, %s74
      %p85 = scmp.eq.s32.totalorder %s39, 0
      %p86 = por %p84, %p85
      %p87 = scmp.ne.s32.totalorder %s73, %s74
      %p88 = scmp.eq.s32.totalorder %s40, 1
      %p89 = por %p87, %p88
      %p91 = scmp.ne.s32.totalorder %s74, %s90
      %p92 = scmp.eq.s32.totalorder %s40, 0
      %p93 = por %p91, %p92
      %s95 = sadd.s32 %s94, 1
      %p98 = scmp.eq.s32.totalorder %s34, 1
      %p99 = scmp.ne.s32.totalorder %s94, %s96
      %p100 = scmp.eq.s32.totalorder %s34, 0
      %p101 = por %p99, %p100
      %p102 = scmp.ne.s32.totalorder %s94, %s96
      %p103 = scmp.eq.s32.totalorder %s39, 1
      %p104 = por %p102, %p103
      %p105 = scmp.ne.s32.totalorder %s96, %s97
      %p106 = scmp.eq.s32.totalorder %s39, 0
      %p107 = por %p105, %p106
      %p108 = scmp.ne.s32.totalorder %s96, %s97
      %p109 = scmp.eq.s32.totalorder %s40, 1
      %p110 = por %p108, %p109
      %p112 = scmp.ne.s32.totalorder %s97, %s111
      %p113 = scmp.eq.s32.totalorder %s40, 0
      %p114 = por %p112, %p113
      %s116 = sadd.s32 %s115, 1
      %p119 = scmp.eq.s32.totalorder %s34, 1
      %p120 = scmp.ne.s32.totalorder %s115, %s117
      %p121 = scmp.eq.s32.totalorder %s34, 0
      %p122 = por %p120, %p121
      %p123 = scmp.ne.s32.totalorder %s115, %s117
      %p124 = scmp.eq.s32.totalorder %s39, 1
      %p125 = por %p123, %p124
      %p126 = scmp.ne.s32.totalorder %s117, %s118
      %p127 = scmp.eq.s32.totalorder %s39, 0
      %p128 = por %p126, %p127
      %p129 = scmp.ne.s32.totalorder %s117, %s118
      %p130 = scmp.eq.s32.totalorder %s40, 1
      %p131 = por %p129, %p130
      %p133 = scmp.ne.s32.totalorder %s118, %s132
      %p134 = scmp.eq.s32.totalorder %s40, 0
      %p135 = por %p133, %p134
      %s137 = sadd.s32 %s136, 1
      %p140 = scmp.eq.s32.totalorder %s34, 1
      %p141 = scmp.ne.s32.totalorder %s136, %s138
      %p142 = scmp.eq.s32.totalorder %s34, 0
      %p143 = por %p141, %p142
      %p144 = scmp.ne.s32.totalorder %s136, %s138
      %p145 = scmp.eq.s32.totalorder %s39, 1
      %p146 = por %p144, %p145
      %p147 = scmp.ne.s32.totalorder %s138, %s139
      %p148 = scmp.eq.s32.totalorder %s39, 0
      %p149 = por %p147, %p148
      %p150 = scmp.ne.s32.totalorder %s138, %s139
      %p151 = scmp.eq.s32.totalorder %s40, 1
      %p152 = por %p150, %p151
      %p154 = scmp.ne.s32.totalorder %s139, %s153
      %p155 = scmp.eq.s32.totalorder %s40, 0
      %p156 = por %p154, %p155
      %s158 = sadd.s32 %s157, 1
      %p161 = scmp.eq.s32.totalorder %s34, 1
      %p162 = scmp.ne.s32.totalorder %s157, %s159
      %p163 = scmp.eq.s32.totalorder %s34, 0
      %p164 = por %p162, %p163
      %p165 = scmp.ne.s32.totalorder %s157, %s159
      %p166 = scmp.eq.s32.totalorder %s39, 1
      %p167 = por %p165, %p166
      %p168 = scmp.ne.s32.totalorder %s159, %s160
      %p169 = scmp.eq.s32.totalorder %s39, 0
      %p170 = por %p168, %p169
      %p171 = scmp.ne.s32.totalorder %s159, %s160
      %p172 = scmp.eq.s32.totalorder %s40, 1
      %p173 = por %p171, %p172
      %p175 = scmp.ne.s32.totalorder %s160, %s174
      %p176 = scmp.eq.s32.totalorder %s40, 0
      %p177 = por %p175, %p176
      %s179 = sadd.s32 %s178, 1
      %p182 = scmp.eq.s32.totalorder %s34, 1
      %p183 = scmp.ne.s32.totalorder %s178, %s180
      %p184 = scmp.eq.s32.totalorder %s34, 0
      %p185 = por %p183, %p184
      %p186 = scmp.ne.s32.totalorder %s178, %s180
      %p187 = scmp.eq.s32.totalorder %s39, 1
      %p188 = por %p186, %p187
      %p189 = scmp.ne.s32.totalorder %s180, %s181
      %p190 = scmp.eq.s32.totalorder %s39, 0
      %p191 = por %p189, %p190
      %p192 = scmp.ne.s32.totalorder %s180, %s181
      %p193 = scmp.eq.s32.totalorder %s40, 1
      %p194 = por %p192, %p193
      %p196 = scmp.ne.s32.totalorder %s181, %s195
      %p197 = scmp.eq.s32.totalorder %s40, 0
      %p198 = por %p196, %p197
      %s200 = sadd.s32 %s199, 1
      %p203 = scmp.eq.s32.totalorder %s34, 1
      %p204 = scmp.ne.s32.totalorder %s199, %s201
      %p205 = scmp.eq.s32.totalorder %s34, 0
      %p206 = por %p204, %p205
      %p207 = scmp.ne.s32.totalorder %s199, %s201
      %p208 = scmp.eq.s32.totalorder %s39, 1
      %p209 = por %p207, %p208
      %p210 = scmp.ne.s32.totalorder %s201, %s202
      %p211 = scmp.eq.s32.totalorder %s39, 0
      %p212 = por %p210, %p211
      %p213 = scmp.ne.s32.totalorder %s201, %s202
      %p214 = scmp.eq.s32.totalorder %s40, 1
      %p215 = por %p213, %p214
      %p217 = scmp.ne.s32.totalorder %s202, %s216
      %p218 = scmp.eq.s32.totalorder %s40, 0
      %p219 = por %p217, %p218
      %s221 = sadd.s32 %s220, 1
      %p224 = scmp.eq.s32.totalorder %s34, 1
      %p225 = scmp.ne.s32.totalorder %s220, %s222
      %p226 = scmp.eq.s32.totalorder %s34, 0
      %p227 = por %p225, %p226
      %p228 = scmp.ne.s32.totalorder %s220, %s222
      %p229 = scmp.eq.s32.totalorder %s39, 1
      %p230 = por %p228, %p229
      %p231 = scmp.ne.s32.totalorder %s222, %s223
      %p232 = scmp.eq.s32.totalorder %s39, 0
      %p233 = por %p231, %p232
      %p234 = scmp.ne.s32.totalorder %s222, %s223
      %p235 = scmp.eq.s32.totalorder %s40, 1
      %p236 = por %p234, %p235
      %p238 = scmp.ne.s32.totalorder %s223, %s237
      %p239 = scmp.eq.s32.totalorder %s40, 0
      %p240 = por %p238, %p239
      %s242 = sadd.s32 %s241, 1
      %p245 = scmp.eq.s32.totalorder %s34, 1
      %p246 = scmp.ne.s32.totalorder %s241, %s243
      %p247 = scmp.eq.s32.totalorder %s34, 0
      %p248 = por %p246, %p247
      %p249 = scmp.ne.s32.totalorder %s241, %s243
      %p250 = scmp.eq.s32.totalorder %s39, 1
      %p251 = por %p249, %p250
      %p252 = scmp.ne.s32.totalorder %s243, %s244
      %p253 = scmp.eq.s32.totalorder %s39, 0
      %p254 = por %p252, %p253
      %p255 = scmp.ne.s32.totalorder %s243, %s244
      %p256 = scmp.eq.s32.totalorder %s40, 1
      %p257 = por %p255, %p256
      %p259 = scmp.ne.s32.totalorder %s244, %s258
      %p260 = scmp.eq.s32.totalorder %s40, 0
      %p261 = por %p259, %p260
      %s263 = sadd.s32 %s262, 1
      %p266 = scmp.eq.s32.totalorder %s34, 1
      %p267 = scmp.ne.s32.totalorder %s262, %s264
      %p268 = scmp.eq.s32.totalorder %s34, 0
      %p269 = por %p267, %p268
      %p270 = scmp.ne.s32.totalorder %s262, %s264
      %p271 = scmp.eq.s32.totalorder %s39, 1
      %p272 = por %p270, %p271
      %p273 = scmp.ne.s32.totalorder %s264, %s265
      %p274 = scmp.eq.s32.totalorder %s39, 0
      %p275 = por %p273, %p274
      %p276 = scmp.ne.s32.totalorder %s264, %s265
      %p277 = scmp.eq.s32.totalorder %s40, 1
      %p278 = por %p276, %p277
      %p280 = scmp.ne.s32.totalorder %s265, %s279
      %p281 = scmp.eq.s32.totalorder %s40, 0
      %p282 = por %p280, %p281
      %s284 = sadd.s32 %s283, 1
      %p287 = scmp.eq.s32.totalorder %s34, 1
      %p288 = scmp.ne.s32.totalorder %s283, %s285
      %p289 = scmp.eq.s32.totalorder %s34, 0
      %p290 = por %p288, %p289
      %p291 = scmp.ne.s32.totalorder %s283, %s285
      %p292 = scmp.eq.s32.totalorder %s39, 1
      %p293 = por %p291, %p292
      %p294 = scmp.ne.s32.totalorder %s285, %s286
      %p295 = scmp.eq.s32.totalorder %s39, 0
      %p296 = por %p294, %p295
      %p297 = scmp.ne.s32.totalorder %s285, %s286
      %p298 = scmp.eq.s32.totalorder %s40, 1
      %p299 = por %p297, %p298
      %p301 = scmp.ne.s32.totalorder %s286, %s300
      %p302 = scmp.eq.s32.totalorder %s40, 0
      %p303 = por %p301, %p302
      %s305 = sadd.s32 %s304, 1
      %p308 = scmp.eq.s32.totalorder %s34, 1
      %p309 = scmp.ne.s32.totalorder %s304, %s306
      %p310 = scmp.eq.s32.totalorder %s34, 0
      %p311 = por %p309, %p310
      %p312 = scmp.ne.s32.totalorder %s304, %s306
      %p313 = scmp.eq.s32.totalorder %s39, 1
      %p314 = por %p312, %p313
      %p315 = scmp.ne.s32.totalorder %s306, %s307
      %p316 = scmp.eq.s32.totalorder %s39, 0
      %p317 = por %p315, %p316
      %p318 = scmp.ne.s32.totalorder %s306, %s307
      %p319 = scmp.eq.s32.totalorder %s40, 1
      %p320 = por %p318, %p319
      %p322 = scmp.ne.s32.totalorder %s307, %s321
      %p323 = scmp.eq.s32.totalorder %s40, 0
      %p324 = por %p322, %p323
      %s326 = sadd.s32 %s325, 1
      %p329 = scmp.eq.s32.totalorder %s34, 1
      %p330 = scmp.ne.s32.totalorder %s325, %s327
      %p331 = scmp.eq.s32.totalorder %s34, 0
      %p332 = por %p330, %p331
      %p333 = scmp.ne.s32.totalorder %s325, %s327
      %p334 = scmp.eq.s32.totalorder %s39, 1
      %p335 = por %p333, %p334
      %p336 = scmp.ne.s32.totalorder %s327, %s328
      %p337 = scmp.eq.s32.totalorder %s39, 0
      %p338 = por %p336, %p337
      %p339 = scmp.ne.s32.totalorder %s327, %s328
      %p340 = scmp.eq.s32.totalorder %s40, 1
      %p341 = por %p339, %p340
      %p343 = scmp.ne.s32.totalorder %s328, %s342
      %p344 = scmp.eq.s32.totalorder %s40, 0
      %p345 = por %p343, %p344
      %s347 = sadd.s32 %s346, 1
      %p350 = scmp.eq.s32.totalorder %s34, 1
      %p351 = scmp.ne.s32.totalorder %s346, %s348
      %p352 = scmp.eq.s32.totalorder %s34, 0
      %p353 = por %p351, %p352
      %p354 = scmp.ne.s32.totalorder %s346, %s348
      %p355 = scmp.eq.s32.totalorder %s39, 1
      %p356 = por %p354, %p355
      %p357 = scmp.ne.s32.totalorder %s348, %s349
      %p358 = scmp.eq.s32.totalorder %s39, 0
      %p359 = por %p357, %p358
      %p360 = scmp.ne.s32.totalorder %s348, %s349
      %p361 = scmp.eq.s32.totalorder %s40, 1
      %p362 = por %p360, %p361
      %p364 = scmp.ne.s32.totalorder %s349, %s363
      %p365 = scmp.eq.s32.totalorder %s40, 0
      %p366 = por %p364, %p365
      %s368 = sadd.s32 %s367, 1
      %p371 = scmp.eq.s32.totalorder %s34, 1
      %p372 = scmp.ne.s32.totalorder %s367, %s369
      %p373 = scmp.eq.s32.totalorder %s34, 0
      %p374 = por %p372, %p373
      %p375 = scmp.ne.s32.totalorder %s367, %s369
      %p376 = scmp.eq.s32.totalorder %s39, 1
      %p377 = por %p375, %p376
      %p378 = scmp.ne.s32.totalorder %s369, %s370
      %p379 = scmp.eq.s32.totalorder %s39, 0
      %p380 = por %p378, %p379
      %p381 = scmp.ne.s32.totalorder %s369, %s370
      %p382 = scmp.eq.s32.totalorder %s40, 1
      %p383 = por %p381, %p382
      %p385 = scmp.ne.s32.totalorder %s370, %s384
      %p386 = scmp.eq.s32.totalorder %s40, 0
      %p387 = por %p385, %p386
      %s389 = sadd.s32 %s388, 1
      %p392 = scmp.eq.s32.totalorder %s34, 1
      %p393 = scmp.ne.s32.totalorder %s388, %s390
      %p394 = scmp.eq.s32.totalorder %s34, 0
      %p395 = por %p393, %p394
      %p396 = scmp.ne.s32.totalorder %s388, %s390
      %p397 = scmp.eq.s32.totalorder %s39, 1
      %p398 = por %p396, %p397
      %p399 = scmp.ne.s32.totalorder %s390, %s391
      %p400 = scmp.eq.s32.totalorder %s39, 0
      %p401 = por %p399, %p400
      %p402 = scmp.ne.s32.totalorder %s390, %s391
      %p403 = scmp.eq.s32.totalorder %s40, 1
      %p404 = por %p402, %p403
      %p406 = scmp.ne.s32.totalorder %s391, %s405
      %p407 = scmp.eq.s32.totalorder %s40, 0
      %p408 = por %p406, %p407
      %s410 = sadd.s32 %s409, 1
      %p413 = scmp.eq.s32.totalorder %s34, 1
      %p414 = scmp.ne.s32.totalorder %s409, %s411
      %p415 = scmp.eq.s32.totalorder %s34, 0
      %p416 = por %p414, %p415
      %p417 = scmp.ne.s32.totalorder %s409, %s411
      %p418 = scmp.eq.s32.totalorder %s39, 1
      %p419 = por %p417, %p418
      %p420 = scmp.ne.s32.totalorder %s411, %s412
      %p421 = scmp.eq.s32.totalorder %s39, 0
      %p422 = por %p420, %p421
      %p423 = scmp.ne.s32.totalorder %s411, %s412
      %p424 = scmp.eq.s32.totalorder %s40, 1
      %p425 = por %p423, %p424
      %p427 = scmp.ne.s32.totalorder %s412, %s426
      %p428 = scmp.eq.s32.totalorder %s40, 0
      %p429 = por %p427, %p428
      %s431 = sadd.s32 %s430, 1
      %p434 = scmp.eq.s32.totalorder %s34, 1
      %p435 = scmp.ne.s32.totalorder %s430, %s432
      %p436 = scmp.eq.s32.totalorder %s34, 0
      %p437 = por %p435, %p436
      %p438 = scmp.ne.s32.totalorder %s430, %s432
      %p439 = scmp.eq.s32.totalorder %s39, 1
      %p440 = por %p438, %p439
      %p441 = scmp.ne.s32.totalorder %s432, %s433
      %p442 = scmp.eq.s32.totalorder %s39, 0
      %p443 = por %p441, %p442
      %p444 = scmp.ne.s32.totalorder %s432, %s433
      %p445 = scmp.eq.s32.totalorder %s40, 1
      %p446 = por %p444, %p445
      %p448 = scmp.ne.s32.totalorder %s433, %s447
      %p449 = scmp.eq.s32.totalorder %s40, 0
      %p450 = por %p448, %p449
      %s452 = sadd.s32 %s451, 1
      %p455 = scmp.eq.s32.totalorder %s34, 1
      %p456 = scmp.ne.s32.totalorder %s451, %s453
      %p457 = scmp.eq.s32.totalorder %s34, 0
      %p458 = por %p456, %p457
      %p459 = scmp.ne.s32.totalorder %s451, %s453
      %p460 = scmp.eq.s32.totalorder %s39, 1
      %p461 = por %p459, %p460
      %p462 = scmp.ne.s32.totalorder %s453, %s454
      %p463 = scmp.eq.s32.totalorder %s39, 0
      %p464 = por %p462, %p463
      %p465 = scmp.ne.s32.totalorder %s453, %s454
      %p466 = scmp.eq.s32.totalorder %s40, 1
      %p467 = por %p465, %p466
      %p469 = scmp.ne.s32.totalorder %s454, %s468
      %p470 = scmp.eq.s32.totalorder %s40, 0
      %p471 = por %p469, %p470
      %s472 = ssub.s32 %s34, %s41
      %p473 = scmp.eq.s32.totalorder %s472, 0
      %s475 = sadd.s32 %s474, 1
      %s476 = scalar_select %p473, %s474, %s475
      %p479 = pneg %p473
      %p480 = scmp.eq.s32.totalorder %s34, 1
      %p481 = por %p479, %p480
      %p482 = scmp.ne.s32.totalorder %s474, %s477
      %p483 = scmp.eq.s32.totalorder %s34, 0
      %p484 = por %p482, %p483
      %p485 = scmp.ne.s32.totalorder %s474, %s477
      %p486 = scmp.eq.s32.totalorder %s39, 1
      %p487 = por %p485, %p486
      %p488 = scmp.ne.s32.totalorder %s477, %s478
      %p489 = scmp.eq.s32.totalorder %s39, 0
      %p490 = por %p488, %p489
      %p491 = scmp.ne.s32.totalorder %s477, %s478
      %p492 = scmp.eq.s32.totalorder %s40, 1
      %p493 = por %p491, %p492
      %p495 = scmp.ne.s32.totalorder %s478, %s494
      %p496 = scmp.eq.s32.totalorder %s40, 0
      %p497 = por %p495, %p496
      %s498 = ssub.s32 %s34, %s41
      %p499 = scmp.eq.s32.totalorder %s498, 0
      %s501 = sadd.s32 %s500, 1
      %s502 = scalar_select %p499, %s500, %s501
      %p505 = pneg %p499
      %p506 = scmp.eq.s32.totalorder %s34, 1
      %p507 = por %p505, %p506
      %p508 = scmp.ne.s32.totalorder %s500, %s503
      %p509 = scmp.eq.s32.totalorder %s34, 0
      %p510 = por %p508, %p509
      %p511 = scmp.ne.s32.totalorder %s500, %s503
      %p512 = scmp.eq.s32.totalorder %s39, 1
      %p513 = por %p511, %p512
      %p514 = scmp.ne.s32.totalorder %s503, %s504
      %p515 = scmp.eq.s32.totalorder %s39, 0
      %p516 = por %p514, %p515
      %p517 = scmp.ne.s32.totalorder %s503, %s504
      %p518 = scmp.eq.s32.totalorder %s40, 1
      %p519 = por %p517, %p518
      %p521 = scmp.ne.s32.totalorder %s504, %s520
      %p522 = scmp.eq.s32.totalorder %s40, 0
      %p523 = por %p521, %p522
      %p524 = scmp.le.s32.totalorder 1, %s34
      %p525 = scmp.lt.s32.totalorder %s34, 3
      %p526 = pnand %p524, %p525
      %p527 = pneg %p526
      // Predicated region
      $region9: #{bert_forward.1} parent=5 // pred_check
        _
      $region10: #{bert_forward.1} parent=5 // pred_check_branch
        %529 = sbr.rel (%p526) target = $region12
      $region11: #{bert_forward.1} parent=5 // pred_region
        %s530 = ssub.s32 %s34, 1
        // Predicated region
        $region13: #{bert_forward.1} parent=11 // pred_check
          %p531 = pneg %p107
        $region14: #{bert_forward.1} parent=11 // pred_check_branch
          %533 = sbr.rel (%p531) target = $region16
        $region15: #{bert_forward.1} parent=11 // pred_region
          _
        $region16: #{bert_forward.1} parent=11 // pred_fallthru
          _
        // Predicated region
        $region17: #{bert_forward.1} parent=11 // pred_check
          %p534 = pneg %p128
        $region18: #{bert_forward.1} parent=11 // pred_check_branch
          %536 = sbr.rel (%p534) target = $region20
        $region19: #{bert_forward.1} parent=11 // pred_region
          _
        $region20: #{bert_forward.1} parent=11 // pred_fallthru
          _
        // Predicated region
        $region21: #{bert_forward.1} parent=11 // pred_check
          %p537 = pneg %p149
        $region22: #{bert_forward.1} parent=11 // pred_check_branch
          %539 = sbr.rel (%p537) target = $region24
        $region23: #{bert_forward.1} parent=11 // pred_region
          _
        $region24: #{bert_forward.1} parent=11 // pred_fallthru
          _
        // Predicated region
        $region25: #{bert_forward.1} parent=11 // pred_check
          %p540 = pneg %p170
        $region26: #{bert_forward.1} parent=11 // pred_check_branch
          %542 = sbr.rel (%p540) target = $region28
        $region27: #{bert_forward.1} parent=11 // pred_region
          _
        $region28: #{bert_forward.1} parent=11 // pred_fallthru
          _
        // Predicated region
        $region29: #{bert_forward.1} parent=11 // pred_check
          %p543 = pneg %p191
        $region30: #{bert_forward.1} parent=11 // pred_check_branch
          %545 = sbr.rel (%p543) target = $region32
        $region31: #{bert_forward.1} parent=11 // pred_region
          _
        $region32: #{bert_forward.1} parent=11 // pred_fallthru
          _
        // Predicated region
        $region33: #{bert_forward.1} parent=11 // pred_check
          %p546 = pneg %p212
        $region34: #{bert_forward.1} parent=11 // pred_check_branch
          %548 = sbr.rel (%p546) target = $region36
        $region35: #{bert_forward.1} parent=11 // pred_region
          _
        $region36: #{bert_forward.1} parent=11 // pred_fallthru
          _
        // Predicated region
        $region37: #{bert_forward.1} parent=11 // pred_check
          %p549 = pneg %p233
        $region38: #{bert_forward.1} parent=11 // pred_check_branch
          %551 = sbr.rel (%p549) target = $region40
        $region39: #{bert_forward.1} parent=11 // pred_region
          _
        $region40: #{bert_forward.1} parent=11 // pred_fallthru
          _
        // Predicated region
        $region41: #{bert_forward.1} parent=11 // pred_check
          %p552 = pneg %p254
        $region42: #{bert_forward.1} parent=11 // pred_check_branch
          %554 = sbr.rel (%p552) target = $region44
        $region43: #{bert_forward.1} parent=11 // pred_region
          _
        $region44: #{bert_forward.1} parent=11 // pred_fallthru
          _
        // Predicated region
        $region45: #{bert_forward.1} parent=11 // pred_check
          %p555 = pneg %p275
        $region46: #{bert_forward.1} parent=11 // pred_check_branch
          %557 = sbr.rel (%p555) target = $region48
        $region47: #{bert_forward.1} parent=11 // pred_region
          _
        $region48: #{bert_forward.1} parent=11 // pred_fallthru
          _
        // Predicated region
        $region49: #{bert_forward.1} parent=11 // pred_check
          %p558 = pneg %p296
        $region50: #{bert_forward.1} parent=11 // pred_check_branch
          %560 = sbr.rel (%p558) target = $region52
        $region51: #{bert_forward.1} parent=11 // pred_region
          _
        $region52: #{bert_forward.1} parent=11 // pred_fallthru
          _
        // Predicated region
        $region53: #{bert_forward.1} parent=11 // pred_check
          %p561 = pneg %p317
        $region54: #{bert_forward.1} parent=11 // pred_check_branch
          %563 = sbr.rel (%p561) target = $region56
        $region55: #{bert_forward.1} parent=11 // pred_region
          _
        $region56: #{bert_forward.1} parent=11 // pred_fallthru
          _
        // Predicated region
        $region57: #{bert_forward.1} parent=11 // pred_check
          %p564 = pneg %p338
        $region58: #{bert_forward.1} parent=11 // pred_check_branch
          %566 = sbr.rel (%p564) target = $region60
        $region59: #{bert_forward.1} parent=11 // pred_region
          _
        $region60: #{bert_forward.1} parent=11 // pred_fallthru
          _
        // Predicated region
        $region61: #{bert_forward.1} parent=11 // pred_check
          %p567 = pneg %p359
        $region62: #{bert_forward.1} parent=11 // pred_check_branch
          %569 = sbr.rel (%p567) target = $region64
        $region63: #{bert_forward.1} parent=11 // pred_region
          _
        $region64: #{bert_forward.1} parent=11 // pred_fallthru
          _
        // Predicated region
        $region65: #{bert_forward.1} parent=11 // pred_check
          %p570 = pneg %p380
        $region66: #{bert_forward.1} parent=11 // pred_check_branch
          %572 = sbr.rel (%p570) target = $region68
        $region67: #{bert_forward.1} parent=11 // pred_region
          _
        $region68: #{bert_forward.1} parent=11 // pred_fallthru
          _
        // Predicated region
        $region69: #{bert_forward.1} parent=11 // pred_check
          %p573 = pneg %p401
        $region70: #{bert_forward.1} parent=11 // pred_check_branch
          %575 = sbr.rel (%p573) target = $region72
        $region71: #{bert_forward.1} parent=11 // pred_region
          _
        $region72: #{bert_forward.1} parent=11 // pred_fallthru
          _
        // Predicated region
        $region73: #{bert_forward.1} parent=11 // pred_check
          %p576 = pneg %p422
        $region74: #{bert_forward.1} parent=11 // pred_check_branch
          %578 = sbr.rel (%p576) target = $region76
        $region75: #{bert_forward.1} parent=11 // pred_region
          _
        $region76: #{bert_forward.1} parent=11 // pred_fallthru
          _
        // Predicated region
        $region77: #{bert_forward.1} parent=11 // pred_check
          %p579 = pneg %p443
        $region78: #{bert_forward.1} parent=11 // pred_check_branch
          %581 = sbr.rel (%p579) target = $region80
        $region79: #{bert_forward.1} parent=11 // pred_region
          _
        $region80: #{bert_forward.1} parent=11 // pred_fallthru
          _
        // Predicated region
        $region81: #{bert_forward.1} parent=11 // pred_check
          %p582 = pneg %p464
        $region82: #{bert_forward.1} parent=11 // pred_check_branch
          %584 = sbr.rel (%p582) target = $region84
        $region83: #{bert_forward.1} parent=11 // pred_region
          _
        $region84: #{bert_forward.1} parent=11 // pred_fallthru
          _
      $region12: #{bert_forward.1} parent=5 // pred_fallthru
        _
      %p585 = scmp.lt.s32.totalorder %s34, 2
      // Predicated region
      $region85: #{bert_forward.1} parent=5 // pred_check
        %p586 = pneg %p585
      $region86: #{bert_forward.1} parent=5 // pred_check_branch
        %588 = sbr.rel (%p586) target = $region88
      $region87: #{bert_forward.1} parent=5 // pred_region
        // Predicated region
        $region89: #{bert_forward.1} parent=87 // pred_check
          %p589 = pneg %p54
        $region90: #{bert_forward.1} parent=87 // pred_check_branch
          %591 = sbr.rel (%p589) target = $region92
        $region91: #{bert_forward.1} parent=87 // pred_region
          %p592 = scmp.lt.s32.totalorder %s34, 1
          %s593 = scalar_select %p592, %s34, 1
          %s594 = smul.addr %s593, 8
          %s595 = scalar_lea.vmem %s0, %s594
        $region92: #{bert_forward.1} parent=87 // pred_fallthru
          _
        // Predicated region
        $region93: #{bert_forward.1} parent=87 // pred_check
          %p596 = pneg %p80
        $region94: #{bert_forward.1} parent=87 // pred_check_branch
          %598 = sbr.rel (%p596) target = $region96
        $region95: #{bert_forward.1} parent=87 // pred_region
          %p599 = scmp.lt.s32.totalorder %s34, 1
          %s600 = scalar_select %p599, %s34, 1
          %s601 = scalar_lea.vmem %s1, %s600
        $region96: #{bert_forward.1} parent=87 // pred_fallthru
          _
      $region88: #{bert_forward.1} parent=5 // pred_fallthru
        _
      %p602 = scmp.le.s32.totalorder 1, %s34
      %p603 = scmp.lt.s32.totalorder %s34, 3
      %p604 = pnand %p602, %p603
      %p605 = pneg %p604
      // Predicated region
      $region97: #{bert_forward.1} parent=5 // pred_check
        _
      $region98: #{bert_forward.1} parent=5 // pred_check_branch
        %607 = sbr.rel (%p604) target = $region100
      $region99: #{bert_forward.1} parent=5 // pred_region
        %s608 = ssub.s32 %s34, 1
        %p609 = scmp.lt.s32.totalorder %s39, 1
        %s610 = scalar_select %p609, %s39, 1
        %s611 = smul.addr %s610, 8
        %s612 = scalar_lea.vmem %s0, %s611
        %p613 = pneg %p60
        %p614 = pneg %p57
        %p615 = scmp.lt.s32.totalorder %s39, 1
        %s616 = scalar_select %p615, %s39, 1
        %s617 = scalar_lea.vmem %s1, %s616
        %p618 = pneg %p86
        %p619 = pneg %p83
        %p620 = pneg %p107
        %p621 = pneg %p104
        %p622 = pneg %p128
        %p623 = pneg %p125
        %p624 = pneg %p149
        %p625 = pneg %p146
        %p626 = pneg %p170
        %p627 = pneg %p167
        %p628 = pneg %p191
        %p629 = pneg %p188
        %p630 = pneg %p212
        %p631 = pneg %p209
        %p632 = pneg %p233
        %p633 = pneg %p230
        %p634 = pneg %p254
        %p635 = pneg %p251
        %p636 = pneg %p275
        %p637 = pneg %p272
        %p638 = pneg %p296
        %p639 = pneg %p293
        %p640 = pneg %p317
        %p641 = pneg %p314
        %p642 = pneg %p338
        %p643 = pneg %p335
        %p644 = pneg %p359
        %p645 = pneg %p356
        %p646 = pneg %p380
        %p647 = pneg %p377
        %p648 = pneg %p401
        %p649 = pneg %p398
        %p650 = pneg %p422
        %p651 = pneg %p419
        %p652 = pneg %p443
        %p653 = pneg %p440
        %p654 = pneg %p464
        %p655 = pneg %p461
        %p656 = pneg %p490
        %p657 = pneg %p487
        %s658 = sand.u32 %s477, 1
        %s659 = scalar_lea.sflag [#allocation3], %s658
        %s660 = sand.u32 %s477, 1
        %s661 = scalar_lea.vmem [#allocation2], %s660
        %p662 = pneg %p516
        %p663 = pneg %p513
        %s664 = sand.u32 %s503, 1
        %s665 = scalar_lea.sflag [#allocation5], %s664
        %s666 = sand.u32 %s503, 1
        %s667 = scalar_lea.vmem [#allocation4], %s666
        %p668 = scmp.lt.s32.totalorder %s39, 1
        %s669 = scalar_select %p668, %s39, 1
        %s670 = smul.addr %s669, 8
        %s671 = scalar_lea.vmem %s0, %s670
        %p672 = scmp.lt.s32.totalorder %s39, 1
        %s673 = scalar_select %p672, %s39, 1
        %s674 = scalar_lea.vmem %s1, %s673
        %v676 = vld [vmem:[%s671] sm:$0xff]
        %v677 = vld [vmem:[%s2] sm:$0x1]
        %v678 = vld [vmem:[%s3] sm:$0x1]
        %vm679 = vcmask 261120
        %v680 = vsel %vm679, %v676, 0.0
        %681 = vadd.xlane.f32.xlu0 %v680
        %v682 = vpop.xlane.xlu0 %681
        %v683 = vrcp.pop 32.0
        %v684 = vmul.f32 32.0, %v683
        %v685 = vsub.f32 1.0, %v684
        %v686 = vmul.f32 %v683, %v685
        %v687 = vadd.f32 %v683, %v686
        %vm688 = vweird.f32 %v683
        %v689 = vsel %vm688, %v683, %v687
        %v690 = vmul.f32 %v682, %v689
        %v691 = vsub.f32 %v676, %v690
        %v692 = vmul.f32 %v691, %v691
        %v693 = vsel %vm679, %v692, 0.0
        %694 = vadd.xlane.f32.xlu0 %v693
        %v695 = vpop.xlane.xlu0 %694
        %v696 = vmul.f32 %v695, %v689
        %v697 = vadd.f32 %v696, 1e-12
        %v698 = vrsqrt.pop %v697
        %v699 = vmul.f32 %v698, %v697
        %v700 = vmul.f32 %v699, %v698
        %v701 = vmul.f32 0.5, %v700
        %v702 = vsub.f32 1.5, %v701
        %v703 = vmul.f32 %v698, %v702
        %vm704 = vweird.f32 %v697
        %vm705 = vweird.f32 %v698
        %vm706 = vmor %vm704, %vm705
        %v707 = vsel %vm706, %v698, %v703
        %v708 = vmul.f32 %v691, %v707
        %v710 = vperm.slane %v677, 0
        %v712 = vmul.f32 %v708, %v710
        %v714 = vperm.slane %v678, 0
        %v716 = vadd.f32 %v712, %v714
        %v717 = vld [vmem:[%s674] sm:$0x1]
        %v719 = vperm.slane %v717, 0
        %v721 = vpack.c.bf16 %v716, %v716
        %v722 = vld [vmem:[%s4] sm:$0xf]
        %v723 = vld [vmem:[%s4 + $0x4] sm:$0xf]
        %v724 = vld [vmem:[%s4 + $0x8] sm:$0xf]
        %v725 = vld [vmem:[%s4 + $0xc] sm:$0xf]
        %v726 = vld [vmem:[%s5] sm:$0x1]
        %v728 = vperm.slane %v726, 0
        %v734 = vunpack.c.l.b16 %v722
        %v735 = vunpack.c.l.b16 %v723
        %v736 = vunpack.c.l.b16 %v724
        %v737 = vunpack.c.l.b16 %v725
        %v738 = vpack.c.b16 %v735, %v734
        %v739 = vpack.c.b16 %v737, %v736
        %v743 = vsel %vm679, %v721, 0
        %745 = vmatpush.bf16.msra.mxu0 0
        %746 = vmatpush.bf16.msra.mxu0 0
        %747 = vmatpush.bf16.msra.mxu0 0
        %748 = vmatpush.bf16.msra.mxu0 0
        %749 = vmatpush.bf16.msra.mxu0 0
        %750 = vmatpush.bf16.msra.mxu0 0
        %751 = vmatpush.bf16.msra.mxu0 %v739
        %752 = vmatpush.bf16.msra.mxu0 %v738
        %753 = vmatmul.bf16.gmra.mxu0 %v743
        %v754 = vpop.f32.mrf.mxu0
        %v755 = vadd.f32 %v728, %v754
        %v756 = vpop.f32.mrf.mxu0
        %757 = vdwg.mxu0
        %s758 = scalar_lea.vmem %s4, 16
        %v759 = vld [vmem:[%s758] sm:$0xf]
        %v760 = vld [vmem:[%s758 + $0x4] sm:$0xf]
        %v761 = vld [vmem:[%s758 + $0x8] sm:$0xf]
        %v762 = vld [vmem:[%s758 + $0xc] sm:$0xf]
        %s763 = scalar_lea.vmem %s5, 1
        %v764 = vld [vmem:[%s763] sm:$0x1]
        %v766 = vperm.slane %v764, 0
        %v772 = vunpack.c.l.b16 %v759
        %v773 = vunpack.c.l.b16 %v760
        %v774 = vunpack.c.l.b16 %v761
        %v775 = vunpack.c.l.b16 %v762
        %v776 = vpack.c.b16 %v773, %v772
        %v777 = vpack.c.b16 %v775, %v774
        %780 = vmatpush.bf16.msra.mxu0 0
        %781 = vmatpush.bf16.msra.mxu0 0
        %782 = vmatpush.bf16.msra.mxu0 0
        %783 = vmatpush.bf16.msra.mxu0 0
        %784 = vmatpush.bf16.msra.mxu0 0
        %785 = vmatpush.bf16.msra.mxu0 0
        %786 = vmatpush.bf16.msra.mxu0 %v777
        %787 = vmatpush.bf16.msra.mxu0 %v776
        %788 = vmatmul.bf16.gmra.mxu0 %v743
        %v789 = vpop.f32.mrf.mxu0
        %v790 = vadd.f32 %v766, %v789
        %v791 = vpop.f32.mrf.mxu0
        %792 = vdwg.mxu0
        %s793 = scalar_lea.vmem %s4, 32
        %v794 = vld [vmem:[%s793] sm:$0xf]
        %v795 = vld [vmem:[%s793 + $0x4] sm:$0xf]
        %v796 = vld [vmem:[%s793 + $0x8] sm:$0xf]
        %v797 = vld [vmem:[%s793 + $0xc] sm:$0xf]
        %s798 = scalar_lea.vmem %s5, 2
        %v799 = vld [vmem:[%s798] sm:$0x1]
        %v801 = vperm.slane %v799, 0
        %v807 = vunpack.c.l.b16 %v794
        %v808 = vunpack.c.l.b16 %v795
        %v809 = vunpack.c.l.b16 %v796
        %v810 = vunpack.c.l.b16 %v797
        %v811 = vpack.c.b16 %v808, %v807
        %v812 = vpack.c.b16 %v810, %v809
        %815 = vmatpush.bf16.msra.mxu0 0
        %816 = vmatpush.bf16.msra.mxu0 0
        %817 = vmatpush.bf16.msra.mxu0 0
        %818 = vmatpush.bf16.msra.mxu0 0
        %819 = vmatpush.bf16.msra.mxu0 0
        %820 = vmatpush.bf16.msra.mxu0 0
        %821 = vmatpush.bf16.msra.mxu0 %v812
        %822 = vmatpush.bf16.msra.mxu0 %v811
        %823 = vmatmul.bf16.gmra.mxu0 %v743
        %v824 = vpop.f32.mrf.mxu0
        %v825 = vadd.f32 %v801, %v824
        %v826 = vpop.f32.mrf.mxu0
        %827 = vdwg.mxu0
        %829 = vrot.lane.b32.xlu0 %v755, 120
        %v830 = vpop.permute.xlu0 %829
        %832 = vrot.lane.b32.xlu0 %v755, 112
        %v833 = vpop.permute.xlu0 %832
        %835 = vrot.lane.b32.xlu0 %v755, 104
        %v836 = vpop.permute.xlu0 %835
        %v838 = vrot.slane %v833, 4
        %vm839 = vcmask 1047556
        %v840 = vsel %vm839, %v838, %v755
        %v841 = vrot.slane %v755, 4
        %v842 = vsel %vm839, %v833, %v841
        %v844 = vunpack.c.l.s4 1983009808
        %v845 = vunpack.c.0.s8 %v844
        %v846 = vperm.slane %v840, %v845
        %v848 = vunpack.c.l.s4 1983009808
        %v849 = vunpack.c.0.s8 %v848
        %v850 = vperm.slane %v842, %v849
        %v851 = vrot.slane %v836, 4
        %v852 = vsel %vm839, %v851, %v830
        %v853 = vrot.slane %v830, 4
        %v854 = vsel %vm839, %v836, %v853
        %v856 = vunpack.c.l.s4 1983009808
        %v857 = vunpack.c.0.s8 %v856
        %v858 = vperm.slane %v852, %v857
        %v860 = vunpack.c.l.s4 1983009808
        %v861 = vunpack.c.0.s8 %v860
        %v862 = vperm.slane %v854, %v861
        %v863 = vrot.slane %v858, 4
        %v864 = vsel %vm839, %v863, %v846
        %v865 = vrot.slane %v846, 4
        %v866 = vsel %vm839, %v858, %v865
        %v868 = vunpack.c.l.s4 1934713408
        %v869 = vunpack.c.0.s8 %v868
        %v870 = vperm.slane %v864, %v869
        %v872 = vunpack.c.l.s4 1934713408
        %v873 = vunpack.c.0.s8 %v872
        %v874 = vperm.slane %v866, %v873
        %v875 = vrot.slane %v862, 4
        %v876 = vsel %vm839, %v875, %v850
        %v877 = vrot.slane %v850, 4
        %v878 = vsel %vm839, %v862, %v877
        %v880 = vunpack.c.l.s4 1934713408
        %v881 = vunpack.c.0.s8 %v880
        %v882 = vperm.slane %v876, %v881
        %v884 = vunpack.c.l.s4 1934713408
        %v885 = vunpack.c.0.s8 %v884
        %v886 = vperm.slane %v878, %v885
        %v887 = vrot.slane %v870, 4
        %v888 = vsel %vm839, 0.0, %v887
        %v889 = vrot.slane %v874, 4
        %v890 = vsel %vm839, 0.0, %v889
        %v891 = vrot.slane %v882, 4
        %v892 = vsel %vm839, 0.0, %v891
        %v893 = vrot.slane %v886, 4
        %v894 = vsel %vm839, 0.0, %v893
        %v895 = vsel %vm839, %v889, %v870
        %v897 = vunpack.c.l.s4 1983009808
        %v898 = vunpack.c.0.s8 %v897
        %v899 = vperm.slane %v895, %v898
        %v900 = vrot.slane %v890, 4
        %v901 = vsel %vm839, %v900, %v888
        %v903 = vunpack.c.l.s4 1983009808
        %v904 = vunpack.c.0.s8 %v903
        %v905 = vperm.slane %v901, %v904
        %v906 = vsel %vm839, %v893, %v882
        %v908 = vunpack.c.l.s4 1983009808
        %v909 = vunpack.c.0.s8 %v908
        %v910 = vperm.slane %v906, %v909
        %v911 = vrot.slane %v894, 4
        %v912 = vsel %vm839, %v911, %v892
        %v914 = vunpack.c.l.s4 1983009808
        %v915 = vunpack.c.0.s8 %v914
        %v916 = vperm.slane %v912, %v915
        %v917 = vrot.slane %v905, 4
        %v918 = vsel %vm839, %v917, %v899
        %v919 = vrot.slane %v899, 4
        %v920 = vsel %vm839, %v905, %v919
        %v922 = vunpack.c.l.s4 1934713408
        %v923 = vunpack.c.0.s8 %v922
        %v924 = vperm.slane %v918, %v923
        %v926 = vunpack.c.l.s4 1934713408
        %v927 = vunpack.c.0.s8 %v926
        %v928 = vperm.slane %v920, %v927
        %v929 = vrot.slane %v916, 4
        %v930 = vsel %vm839, %v929, %v910
        %v931 = vrot.slane %v910, 4
        %v932 = vsel %vm839, %v916, %v931
        %v934 = vunpack.c.l.s4 1934713408
        %v935 = vunpack.c.0.s8 %v934
        %v936 = vperm.slane %v930, %v935
        %v938 = vunpack.c.l.s4 1934713408
        %v939 = vunpack.c.0.s8 %v938
        %v940 = vperm.slane %v932, %v939
        %v941 = vrot.slane %v936, 4
        %v942 = vsel %vm839, %v941, %v924
        %v943 = vrot.slane %v924, 4
        %v944 = vsel %vm839, %v936, %v943
        %v945 = vrot.slane %v940, 4
        %v946 = vsel %vm839, %v945, %v928
        %v947 = vrot.slane %v928, 4
        %v948 = vsel %vm839, %v940, %v947
        %v949 = vpack.c.bf16 %v942, %v942
        %v950 = vpack.c.bf16 %v944, %v944
        %v951 = vpack.c.bf16 %v946, %v946
        %v952 = vpack.c.bf16 %v948, %v948
        %954 = vrot.lane.b32.xlu0 %v790, 120
        %v955 = vpop.permute.xlu0 %954
        %957 = vrot.lane.b32.xlu0 %v790, 112
        %v958 = vpop.permute.xlu0 %957
        %960 = vrot.lane.b32.xlu0 %v790, 104
        %v961 = vpop.permute.xlu0 %960
        %v963 = vrot.slane %v958, 4
        %v964 = vsel %vm839, %v963, %v790
        %v965 = vrot.slane %v790, 4
        %v966 = vsel %vm839, %v958, %v965
        %v968 = vunpack.c.l.s4 1983009808
        %v969 = vunpack.c.0.s8 %v968
        %v970 = vperm.slane %v964, %v969
        %v972 = vunpack.c.l.s4 1983009808
        %v973 = vunpack.c.0.s8 %v972
        %v974 = vperm.slane %v966, %v973
        %v975 = vrot.slane %v961, 4
        %v976 = vsel %vm839, %v975, %v955
        %v977 = vrot.slane %v955, 4
        %v978 = vsel %vm839, %v961, %v977
        %v980 = vunpack.c.l.s4 1983009808
        %v981 = vunpack.c.0.s8 %v980
        %v982 = vperm.slane %v976, %v981
        %v984 = vunpack.c.l.s4 1983009808
        %v985 = vunpack.c.0.s8 %v984
        %v986 = vperm.slane %v978, %v985
        %v987 = vrot.slane %v982, 4
        %v988 = vsel %vm839, %v987, %v970
        %v989 = vrot.slane %v970, 4
        %v990 = vsel %vm839, %v982, %v989
        %v992 = vunpack.c.l.s4 1934713408
        %v993 = vunpack.c.0.s8 %v992
        %v994 = vperm.slane %v988, %v993
        %v996 = vunpack.c.l.s4 1934713408
        %v997 = vunpack.c.0.s8 %v996
        %v998 = vperm.slane %v990, %v997
        %v999 = vrot.slane %v986, 4
        %v1000 = vsel %vm839, %v999, %v974
        %v1001 = vrot.slane %v974, 4
        %v1002 = vsel %vm839, %v986, %v1001
        %v1004 = vunpack.c.l.s4 1934713408
        %v1005 = vunpack.c.0.s8 %v1004
        %v1006 = vperm.slane %v1000, %v1005
        %v1008 = vunpack.c.l.s4 1934713408
        %v1009 = vunpack.c.0.s8 %v1008
        %v1010 = vperm.slane %v1002, %v1009
        %v1011 = vrot.slane %v994, 4
        %v1012 = vsel %vm839, 0.0, %v1011
        %v1013 = vrot.slane %v998, 4
        %v1014 = vsel %vm839, 0.0, %v1013
        %v1015 = vrot.slane %v1006, 4
        %v1016 = vsel %vm839, 0.0, %v1015
        %v1017 = vrot.slane %v1010, 4
        %v1018 = vsel %vm839, 0.0, %v1017
        %v1019 = vsel %vm839, %v1013, %v994
        %v1021 = vunpack.c.l.s4 1983009808
        %v1022 = vunpack.c.0.s8 %v1021
        %v1023 = vperm.slane %v1019, %v1022
        %v1024 = vrot.slane %v1014, 4
        %v1025 = vsel %vm839, %v1024, %v1012
        %v1027 = vunpack.c.l.s4 1983009808
        %v1028 = vunpack.c.0.s8 %v1027
        %v1029 = vperm.slane %v1025, %v1028
        %v1030 = vsel %vm839, %v1017, %v1006
        %v1032 = vunpack.c.l.s4 1983009808
        %v1033 = vunpack.c.0.s8 %v1032
        %v1034 = vperm.slane %v1030, %v1033
        %v1035 = vrot.slane %v1018, 4
        %v1036 = vsel %vm839, %v1035, %v1016
        %v1038 = vunpack.c.l.s4 1983009808
        %v1039 = vunpack.c.0.s8 %v1038
        %v1040 = vperm.slane %v1036, %v1039
        %v1041 = vrot.slane %v1029, 4
        %v1042 = vsel %vm839, %v1041, %v1023
        %v1043 = vrot.slane %v1023, 4
        %v1044 = vsel %vm839, %v1029, %v1043
        %v1046 = vunpack.c.l.s4 1934713408
        %v1047 = vunpack.c.0.s8 %v1046
        %v1048 = vperm.slane %v1042, %v1047
        %v1050 = vunpack.c.l.s4 1934713408
        %v1051 = vunpack.c.0.s8 %v1050
        %v1052 = vperm.slane %v1044, %v1051
        %v1053 = vrot.slane %v1040, 4
        %v1054 = vsel %vm839, %v1053, %v1034
        %v1055 = vrot.slane %v1034, 4
        %v1056 = vsel %vm839, %v1040, %v1055
        %v1058 = vunpack.c.l.s4 1934713408
        %v1059 = vunpack.c.0.s8 %v1058
        %v1060 = vperm.slane %v1054, %v1059
        %v1062 = vunpack.c.l.s4 1934713408
        %v1063 = vunpack.c.0.s8 %v1062
        %v1064 = vperm.slane %v1056, %v1063
        %v1065 = vrot.slane %v1060, 4
        %v1066 = vsel %vm839, %v1065, %v1048
        %v1067 = vrot.slane %v1048, 4
        %v1068 = vsel %vm839, %v1060, %v1067
        %v1069 = vrot.slane %v1064, 4
        %v1070 = vsel %vm839, %v1069, %v1052
        %v1071 = vrot.slane %v1052, 4
        %v1072 = vsel %vm839, %v1064, %v1071
        %v1073 = vpack.c.bf16 %v1066, %v1066
        %v1074 = vpack.c.bf16 %v1068, %v1068
        %v1075 = vpack.c.bf16 %v1070, %v1070
        %v1076 = vpack.c.bf16 %v1072, %v1072
        %1078 = vrot.lane.b32.xlu0 %v825, 120
        %v1079 = vpop.permute.xlu0 %1078
        %1081 = vrot.lane.b32.xlu0 %v825, 112
        %v1082 = vpop.permute.xlu0 %1081
        %1084 = vrot.lane.b32.xlu0 %v825, 104
        %v1085 = vpop.permute.xlu0 %1084
        %v1087 = vrot.slane %v1082, 4
        %v1088 = vsel %vm839, %v1087, %v825
        %v1089 = vrot.slane %v825, 4
        %v1090 = vsel %vm839, %v1082, %v1089
        %v1092 = vunpack.c.l.s4 1983009808
        %v1093 = vunpack.c.0.s8 %v1092
        %v1094 = vperm.slane %v1088, %v1093
        %v1096 = vunpack.c.l.s4 1983009808
        %v1097 = vunpack.c.0.s8 %v1096
        %v1098 = vperm.slane %v1090, %v1097
        %v1099 = vrot.slane %v1085, 4
        %v1100 = vsel %vm839, %v1099, %v1079
        %v1101 = vrot.slane %v1079, 4
        %v1102 = vsel %vm839, %v1085, %v1101
        %v1104 = vunpack.c.l.s4 1983009808
        %v1105 = vunpack.c.0.s8 %v1104
        %v1106 = vperm.slane %v1100, %v1105
        %v1108 = vunpack.c.l.s4 1983009808
        %v1109 = vunpack.c.0.s8 %v1108
        %v1110 = vperm.slane %v1102, %v1109
        %v1111 = vrot.slane %v1106, 4
        %v1112 = vsel %vm839, %v1111, %v1094
        %v1113 = vrot.slane %v1094, 4
        %v1114 = vsel %vm839, %v1106, %v1113
        %v1116 = vunpack.c.l.s4 1934713408
        %v1117 = vunpack.c.0.s8 %v1116
        %v1118 = vperm.slane %v1112, %v1117
        %v1120 = vunpack.c.l.s4 1934713408
        %v1121 = vunpack.c.0.s8 %v1120
        %v1122 = vperm.slane %v1114, %v1121
        %v1123 = vrot.slane %v1110, 4
        %v1124 = vsel %vm839, %v1123, %v1098
        %v1125 = vrot.slane %v1098, 4
        %v1126 = vsel %vm839, %v1110, %v1125
        %v1128 = vunpack.c.l.s4 1934713408
        %v1129 = vunpack.c.0.s8 %v1128
        %v1130 = vperm.slane %v1124, %v1129
        %v1132 = vunpack.c.l.s4 1934713408
        %v1133 = vunpack.c.0.s8 %v1132
        %v1134 = vperm.slane %v1126, %v1133
        %v1135 = vrot.slane %v1118, 4
        %v1136 = vsel %vm839, 0.0, %v1135
        %v1137 = vrot.slane %v1122, 4
        %v1138 = vsel %vm839, 0.0, %v1137
        %v1139 = vrot.slane %v1130, 4
        %v1140 = vsel %vm839, 0.0, %v1139
        %v1141 = vrot.slane %v1134, 4
        %v1142 = vsel %vm839, 0.0, %v1141
        %v1143 = vsel %vm839, %v1137, %v1118
        %v1145 = vunpack.c.l.s4 1983009808
        %v1146 = vunpack.c.0.s8 %v1145
        %v1147 = vperm.slane %v1143, %v1146
        %v1148 = vrot.slane %v1138, 4
        %v1149 = vsel %vm839, %v1148, %v1136
        %v1151 = vunpack.c.l.s4 1983009808
        %v1152 = vunpack.c.0.s8 %v1151
        %v1153 = vperm.slane %v1149, %v1152
        %v1154 = vsel %vm839, %v1141, %v1130
        %v1156 = vunpack.c.l.s4 1983009808
        %v1157 = vunpack.c.0.s8 %v1156
        %v1158 = vperm.slane %v1154, %v1157
        %v1159 = vrot.slane %v1142, 4
        %v1160 = vsel %vm839, %v1159, %v1140
        %v1162 = vunpack.c.l.s4 1983009808
        %v1163 = vunpack.c.0.s8 %v1162
        %v1164 = vperm.slane %v1160, %v1163
        %v1165 = vrot.slane %v1153, 4
        %v1166 = vsel %vm839, %v1165, %v1147
        %v1167 = vrot.slane %v1147, 4
        %v1168 = vsel %vm839, %v1153, %v1167
        %v1170 = vunpack.c.l.s4 1934713408
        %v1171 = vunpack.c.0.s8 %v1170
        %v1172 = vperm.slane %v1166, %v1171
        %v1174 = vunpack.c.l.s4 1934713408
        %v1175 = vunpack.c.0.s8 %v1174
        %v1176 = vperm.slane %v1168, %v1175
        %v1177 = vrot.slane %v1164, 4
        %v1178 = vsel %vm839, %v1177, %v1158
        %v1179 = vrot.slane %v1158, 4
        %v1180 = vsel %vm839, %v1164, %v1179
        %v1182 = vunpack.c.l.s4 1934713408
        %v1183 = vunpack.c.0.s8 %v1182
        %v1184 = vperm.slane %v1178, %v1183
        %v1186 = vunpack.c.l.s4 1934713408
        %v1187 = vunpack.c.0.s8 %v1186
        %v1188 = vperm.slane %v1180, %v1187
        %v1189 = vrot.slane %v1184, 4
        %v1190 = vsel %vm839, %v1189, %v1172
        %v1191 = vrot.slane %v1172, 4
        %v1192 = vsel %vm839, %v1184, %v1191
        %v1193 = vrot.slane %v1188, 4
        %v1194 = vsel %vm839, %v1193, %v1176
        %v1195 = vrot.slane %v1176, 4
        %v1196 = vsel %vm839, %v1188, %v1195
        %v1197 = vpack.c.bf16 %v1190, %v1190
        %v1198 = vpack.c.bf16 %v1192, %v1192
        %v1199 = vpack.c.bf16 %v1194, %v1194
        %v1200 = vpack.c.bf16 %v1196, %v1196
        %vm1201 = vcmask 64512
        %v1203 = vsel %vm1201, %v949, 0
        %v1206 = vsel %vm1201, %v1073, 0
        %1208 = vmatpush.bf16.xpose.msra.mxu0 0
        %1209 = vmatpush.bf16.xpose.msra.mxu0 0
        %1210 = vmatpush.bf16.xpose.msra.mxu0 0
        %1211 = vmatpush.bf16.xpose.msra.mxu0 0
        %1212 = vmatpush.bf16.xpose.msra.mxu0 0
        %1213 = vmatpush.bf16.xpose.msra.mxu0 0
        %1214 = vmatpush.bf16.xpose.msra.mxu0 0
        %1215 = vmatpush.bf16.xpose.msra.mxu0 %v1206
        %1216 = vmatmul.bf16.gmra.mxu0 %v1203
        %v1217 = vpop.f32.mrf.mxu0
        %v1218 = vadd.f32 %v719, %v1217
        %v1219 = vpop.f32.mrf.mxu0
        %1220 = vdwg.mxu0
        %v1222 = vsel %vm1201, %v950, 0
        %v1225 = vsel %vm1201, %v1074, 0
        %1227 = vmatpush.bf16.xpose.msra.mxu0 0
        %1228 = vmatpush.bf16.xpose.msra.mxu0 0
        %1229 = vmatpush.bf16.xpose.msra.mxu0 0
        %1230 = vmatpush.bf16.xpose.msra.mxu0 0
        %1231 = vmatpush.bf16.xpose.msra.mxu0 0
        %1232 = vmatpush.bf16.xpose.msra.mxu0 0
        %1233 = vmatpush.bf16.xpose.msra.mxu0 0
        %1234 = vmatpush.bf16.xpose.msra.mxu0 %v1225
        %1235 = vmatmul.bf16.gmra.mxu0 %v1222
        %v1236 = vpop.f32.mrf.mxu0
        %v1237 = vadd.f32 %v719, %v1236
        %v1238 = vpop.f32.mrf.mxu0
        %1239 = vdwg.mxu0
        %v1241 = vsel %vm1201, %v951, 0
        %v1244 = vsel %vm1201, %v1075, 0
        %1246 = vmatpush.bf16.xpose.msra.mxu0 0
        %1247 = vmatpush.bf16.xpose.msra.mxu0 0
        %1248 = vmatpush.bf16.xpose.msra.mxu0 0
        %1249 = vmatpush.bf16.xpose.msra.mxu0 0
        %1250 = vmatpush.bf16.xpose.msra.mxu0 0
        %1251 = vmatpush.bf16.xpose.msra.mxu0 0
        %1252 = vmatpush.bf16.xpose.msra.mxu0 0
        %1253 = vmatpush.bf16.xpose.msra.mxu0 %v1244
        %1254 = vmatmul.bf16.gmra.mxu0 %v1241
        %v1255 = vpop.f32.mrf.mxu0
        %v1256 = vadd.f32 %v719, %v1255
        %v1257 = vpop.f32.mrf.mxu0
        %1258 = vdwg.mxu0
        %v1260 = vsel %vm1201, %v952, 0
        %v1263 = vsel %vm1201, %v1076, 0
        %1265 = vmatpush.bf16.xpose.msra.mxu0 0
        %1266 = vmatpush.bf16.xpose.msra.mxu0 0
        %1267 = vmatpush.bf16.xpose.msra.mxu0 0
        %1268 = vmatpush.bf16.xpose.msra.mxu0 0
        %1269 = vmatpush.bf16.xpose.msra.mxu0 0
        %1270 = vmatpush.bf16.xpose.msra.mxu0 0
        %1271 = vmatpush.bf16.xpose.msra.mxu0 0
        %1272 = vmatpush.bf16.xpose.msra.mxu0 %v1263
        %1273 = vmatmul.bf16.gmra.mxu0 %v1260
        %v1274 = vpop.f32.mrf.mxu0
        %v1275 = vadd.f32 %v719, %v1274
        %v1276 = vpop.f32.mrf.mxu0
        %1277 = vdwg.mxu0
        %v1278 = vsel %vm1201, %v1218, -inf
        %1279 = vmax.xlane.f32.xlu0 %v1278
        %v1280 = vpop.xlane.xlu0 %1279
        %v1281 = vsel %vm1201, %v1237, -inf
        %1282 = vmax.xlane.f32.xlu0 %v1281
        %v1283 = vpop.xlane.xlu0 %1282
        %v1284 = vsel %vm1201, %v1256, -inf
        %1285 = vmax.xlane.f32.xlu0 %v1284
        %v1286 = vpop.xlane.xlu0 %1285
        %v1287 = vsel %vm1201, %v1275, -inf
        %1288 = vmax.xlane.f32.xlu0 %v1287
        %v1289 = vpop.xlane.xlu0 %1288
        %v1290 = vsub.f32 %v1218, %v1280
        %v1291 = vsub.f32 %v1237, %v1283
        %v1292 = vsub.f32 %v1256, %v1286
        %v1293 = vsub.f32 %v1275, %v1289
        %v1294 = vmul.f32 %v1290, 1.442695
        %v1295 = vpow.pop %v1294
        %v1296 = vmul.f32 %v1291, 1.442695
        %v1297 = vpow.pop %v1296
        %v1298 = vmul.f32 %v1292, 1.442695
        %v1299 = vpow.pop %v1298
        %v1300 = vmul.f32 %v1293, 1.442695
        %v1301 = vpow.pop %v1300
        %v1302 = vsel %vm1201, %v1295, 0.0
        %1303 = vadd.xlane.f32.xlu0 %v1302
        %v1304 = vpop.xlane.xlu0 %1303
        %v1305 = vsel %vm1201, %v1297, 0.0
        %1306 = vadd.xlane.f32.xlu0 %v1305
        %v1307 = vpop.xlane.xlu0 %1306
        %v1308 = vsel %vm1201, %v1299, 0.0
        %1309 = vadd.xlane.f32.xlu0 %v1308
        %v1310 = vpop.xlane.xlu0 %1309
        %v1311 = vsel %vm1201, %v1301, 0.0
        %1312 = vadd.xlane.f32.xlu0 %v1311
        %v1313 = vpop.xlane.xlu0 %1312
        %v1314 = vrcp.pop %v1304
        %v1315 = vrcp.pop %v1307
        %v1316 = vrcp.pop %v1310
        %v1317 = vrcp.pop %v1313
        %v1318 = vmul.f32 %v1295, %v1314
        %v1319 = vmul.f32 %v1297, %v1315
        %v1320 = vmul.f32 %v1299, %v1316
        %v1321 = vmul.f32 %v1301, %v1317
        %v1322 = vpack.c.bf16 %v1318, %v1318
        %v1323 = vpack.c.bf16 %v1319, %v1319
        %v1324 = vpack.c.bf16 %v1320, %v1320
        %v1325 = vpack.c.bf16 %v1321, %v1321
        %v1327 = vsel %vm1201, %v1322, 0
        %vm1329 = vcmask 1043456
        %v1331 = vsel %vm1329, %v1197, 0
        %1333 = vmatpush.bf16.msra.mxu0 0
        %1334 = vmatpush.bf16.msra.mxu0 0
        %1335 = vmatpush.bf16.msra.mxu0 0
        %1336 = vmatpush.bf16.msra.mxu0 0
        %1337 = vmatpush.bf16.msra.mxu0 0
        %1338 = vmatpush.bf16.msra.mxu0 0
        %1339 = vmatpush.bf16.msra.mxu0 0
        %1340 = vmatpush.bf16.msra.mxu0 %v1331
        %1341 = vmatmul.bf16.gmra.mxu0 %v1327
        %v1342 = vpop.f32.mrf.mxu0
        %v1343 = vadd.f32 0.0, %v1342
        %v1344 = vpop.f32.mrf.mxu0
        %1345 = vdwg.mxu0
        %v1347 = vsel %vm1201, %v1323, 0
        %v1350 = vsel %vm1329, %v1198, 0
        %1352 = vmatpush.bf16.msra.mxu0 0
        %1353 = vmatpush.bf16.msra.mxu0 0
        %1354 = vmatpush.bf16.msra.mxu0 0
        %1355 = vmatpush.bf16.msra.mxu0 0
        %1356 = vmatpush.bf16.msra.mxu0 0
        %1357 = vmatpush.bf16.msra.mxu0 0
        %1358 = vmatpush.bf16.msra.mxu0 0
        %1359 = vmatpush.bf16.msra.mxu0 %v1350
        %1360 = vmatmul.bf16.gmra.mxu0 %v1347
        %v1361 = vpop.f32.mrf.mxu0
        %v1362 = vadd.f32 0.0, %v1361
        %v1363 = vpop.f32.mrf.mxu0
        %1364 = vdwg.mxu0
        %v1366 = vsel %vm1201, %v1324, 0
        %v1369 = vsel %vm1329, %v1199, 0
        %1371 = vmatpush.bf16.msra.mxu0 0
        %1372 = vmatpush.bf16.msra.mxu0 0
        %1373 = vmatpush.bf16.msra.mxu0 0
        %1374 = vmatpush.bf16.msra.mxu0 0
        %1375 = vmatpush.bf16.msra.mxu0 0
        %1376 = vmatpush.bf16.msra.mxu0 0
        %1377 = vmatpush.bf16.msra.mxu0 0
        %1378 = vmatpush.bf16.msra.mxu0 %v1369
        %1379 = vmatmul.bf16.gmra.mxu0 %v1366
        %v1380 = vpop.f32.mrf.mxu0
        %v1381 = vadd.f32 0.0, %v1380
        %v1382 = vpop.f32.mrf.mxu0
        %1383 = vdwg.mxu0
        %v1385 = vsel %vm1201, %v1325, 0
        %v1388 = vsel %vm1329, %v1200, 0
        %1390 = vmatpush.bf16.msra.mxu0 0
        %1391 = vmatpush.bf16.msra.mxu0 0
        %1392 = vmatpush.bf16.msra.mxu0 0
        %1393 = vmatpush.bf16.msra.mxu0 0
        %1394 = vmatpush.bf16.msra.mxu0 0
        %1395 = vmatpush.bf16.msra.mxu0 0
        %1396 = vmatpush.bf16.msra.mxu0 0
        %1397 = vmatpush.bf16.msra.mxu0 %v1388
        %1398 = vmatmul.bf16.gmra.mxu0 %v1385
        %v1399 = vpop.f32.mrf.mxu0
        %v1400 = vadd.f32 0.0, %v1399
        %v1401 = vpop.f32.mrf.mxu0
        %1402 = vdwg.mxu0
        %v1403 = vrot.slane %v1381, 4
        %v1404 = vsel %vm839, %v1403, %v1343
        %v1405 = vrot.slane %v1343, 4
        %v1406 = vsel %vm839, %v1381, %v1405
        %v1408 = vunpack.c.l.s4 1983009808
        %v1409 = vunpack.c.0.s8 %v1408
        %v1410 = vperm.slane %v1404, %v1409
        %v1412 = vunpack.c.l.s4 1983009808
        %v1413 = vunpack.c.0.s8 %v1412
        %v1414 = vperm.slane %v1406, %v1413
        %v1415 = vrot.slane %v1400, 4
        %v1416 = vsel %vm839, %v1415, %v1362
        %v1417 = vrot.slane %v1362, 4
        %v1418 = vsel %vm839, %v1400, %v1417
        %v1420 = vunpack.c.l.s4 1983009808
        %v1421 = vunpack.c.0.s8 %v1420
        %v1422 = vperm.slane %v1416, %v1421
        %v1424 = vunpack.c.l.s4 1983009808
        %v1425 = vunpack.c.0.s8 %v1424
        %v1426 = vperm.slane %v1418, %v1425
        %v1427 = vrot.slane %v1422, 4
        %v1428 = vsel %vm839, %v1427, %v1410
        %v1429 = vrot.slane %v1410, 4
        %v1430 = vsel %vm839, %v1422, %v1429
        %v1432 = vunpack.c.l.s4 1934713408
        %v1433 = vunpack.c.0.s8 %v1432
        %v1434 = vperm.slane %v1428, %v1433
        %v1436 = vunpack.c.l.s4 1934713408
        %v1437 = vunpack.c.0.s8 %v1436
        %v1438 = vperm.slane %v1430, %v1437
        %v1439 = vrot.slane %v1426, 4
        %v1440 = vsel %vm839, %v1439, %v1414
        %v1441 = vrot.slane %v1414, 4
        %v1442 = vsel %vm839, %v1426, %v1441
        %v1444 = vunpack.c.l.s4 1934713408
        %v1445 = vunpack.c.0.s8 %v1444
        %v1446 = vperm.slane %v1440, %v1445
        %v1448 = vunpack.c.l.s4 1934713408
        %v1449 = vunpack.c.0.s8 %v1448
        %v1450 = vperm.slane %v1442, %v1449
        %v1451 = vrot.slane %v1434, 4
        %v1452 = vsel %vm839, 0.0, %v1451
        %v1453 = vrot.slane %v1438, 4
        %v1454 = vsel %vm839, 0.0, %v1453
        %v1455 = vrot.slane %v1446, 4
        %v1456 = vsel %vm839, 0.0, %v1455
        %v1457 = vrot.slane %v1450, 4
        %v1458 = vsel %vm839, 0.0, %v1457
        %v1459 = vsel %vm839, %v1453, %v1434
        %v1461 = vunpack.c.l.s4 1983009808
        %v1462 = vunpack.c.0.s8 %v1461
        %v1463 = vperm.slane %v1459, %v1462
        %v1464 = vrot.slane %v1454, 4
        %v1465 = vsel %vm839, %v1464, %v1452
        %v1467 = vunpack.c.l.s4 1983009808
        %v1468 = vunpack.c.0.s8 %v1467
        %v1469 = vperm.slane %v1465, %v1468
        %v1470 = vsel %vm839, %v1457, %v1446
        %v1472 = vunpack.c.l.s4 1983009808
        %v1473 = vunpack.c.0.s8 %v1472
        %v1474 = vperm.slane %v1470, %v1473
        %v1475 = vrot.slane %v1458, 4
        %v1476 = vsel %vm839, %v1475, %v1456
        %v1478 = vunpack.c.l.s4 1983009808
        %v1479 = vunpack.c.0.s8 %v1478
        %v1480 = vperm.slane %v1476, %v1479
        %v1481 = vrot.slane %v1469, 4
        %v1482 = vsel %vm839, %v1481, %v1463
        %v1483 = vrot.slane %v1463, 4
        %v1484 = vsel %vm839, %v1469, %v1483
        %v1486 = vunpack.c.l.s4 1934713408
        %v1487 = vunpack.c.0.s8 %v1486
        %v1488 = vperm.slane %v1482, %v1487
        %v1490 = vunpack.c.l.s4 1934713408
        %v1491 = vunpack.c.0.s8 %v1490
        %v1492 = vperm.slane %v1484, %v1491
        %v1493 = vrot.slane %v1480, 4
        %v1494 = vsel %vm839, %v1493, %v1474
        %v1495 = vrot.slane %v1474, 4
        %v1496 = vsel %vm839, %v1480, %v1495
        %v1498 = vunpack.c.l.s4 1934713408
        %v1499 = vunpack.c.0.s8 %v1498
        %v1500 = vperm.slane %v1494, %v1499
        %v1502 = vunpack.c.l.s4 1934713408
        %v1503 = vunpack.c.0.s8 %v1502
        %v1504 = vperm.slane %v1496, %v1503
        %v1505 = vrot.slane %v1500, 4
        %v1506 = vsel %vm839, %v1505, %v1488
        %v1507 = vrot.slane %v1488, 4
        %v1508 = vsel %vm839, %v1500, %v1507
        %v1509 = vrot.slane %v1504, 4
        %v1510 = vsel %vm839, %v1509, %v1492
        %v1511 = vrot.slane %v1492, 4
        %v1512 = vsel %vm839, %v1504, %v1511
        %1514 = vrot.lane.b32.xlu0 %v1508, 8
        %v1515 = vpop.permute.xlu0 %1514
        %1518 = vrot.lane.b32.xlu0 %v1510, 16
        %v1519 = vpop.permute.xlu0 %1518
        %1522 = vrot.lane.b32.xlu0 %v1512, 24
        %v1523 = vpop.permute.xlu0 %1522
        %v1525 = vsel %vm1201, %v1506, %v1515
        %vm1526 = vcmask 130048
        %v1527 = vsel %vm1526, %v1525, %v1519
        %vm1528 = vcmask 195584
        %v1529 = vsel %vm1528, %v1527, %v1523
        %v1530 = vpack.c.bf16 %v1529, %v1529
        %v1531 = vld [vmem:[%s6] sm:$0xf]
        %v1532 = vld [vmem:[%s6 + $0x4] sm:$0xf]
        %v1533 = vld [vmem:[%s6 + $0x8] sm:$0xf]
        %v1534 = vld [vmem:[%s6 + $0xc] sm:$0xf]
        %v1535 = vld [vmem:[%s7] sm:$0x1]
        %v1537 = vperm.slane %v1535, 0
        %v1543 = vunpack.c.l.b16 %v1531
        %v1544 = vunpack.c.l.b16 %v1532
        %v1545 = vunpack.c.l.b16 %v1533
        %v1546 = vunpack.c.l.b16 %v1534
        %v1547 = vpack.c.b16 %v1544, %v1543
        %v1548 = vpack.c.b16 %v1546, %v1545
        %v1552 = vsel %vm679, %v1530, 0
        %1554 = vmatpush.bf16.msra.mxu0 0
        %1555 = vmatpush.bf16.msra.mxu0 0
        %1556 = vmatpush.bf16.msra.mxu0 0
        %1557 = vmatpush.bf16.msra.mxu0 0
        %1558 = vmatpush.bf16.msra.mxu0 0
        %1559 = vmatpush.bf16.msra.mxu0 0
        %1560 = vmatpush.bf16.msra.mxu0 %v1548
        %1561 = vmatpush.bf16.msra.mxu0 %v1547
        %1562 = vmatmul.bf16.gmra.mxu0 %v1552
        %v1563 = vpop.f32.mrf.mxu0
        %v1564 = vadd.f32 %v1537, %v1563
        %v1565 = vpop.f32.mrf.mxu0
        %1566 = vdwg.mxu0
        %v1567 = vadd.f32 %v1564, %v716
        %v1568 = vld [vmem:[%s8] sm:$0x1]
        %v1569 = vld [vmem:[%s9] sm:$0x1]
        %v1570 = vsel %vm679, %v1567, 0.0
        %1571 = vadd.xlane.f32.xlu0 %v1570
        %v1572 = vpop.xlane.xlu0 %1571
        %v1573 = vmul.f32 %v1572, %v689
        %v1574 = vsub.f32 %v1567, %v1573
        %v1575 = vmul.f32 %v1574, %v1574
        %v1576 = vsel %vm679, %v1575, 0.0
        %1577 = vadd.xlane.f32.xlu0 %v1576
        %v1578 = vpop.xlane.xlu0 %1577
        %v1579 = vmul.f32 %v1578, %v689
        %v1580 = vadd.f32 %v1579, 1e-12
        %v1581 = vrsqrt.pop %v1580
        %v1582 = vmul.f32 %v1581, %v1580
        %v1583 = vmul.f32 %v1582, %v1581
        %v1584 = vmul.f32 0.5, %v1583
        %v1585 = vsub.f32 1.5, %v1584
        %v1586 = vmul.f32 %v1581, %v1585
        %vm1587 = vweird.f32 %v1580
        %vm1588 = vweird.f32 %v1581
        %vm1589 = vmor %vm1587, %vm1588
        %v1590 = vsel %vm1589, %v1581, %v1586
        %v1591 = vmul.f32 %v1574, %v1590
        %v1593 = vperm.slane %v1568, 0
        %v1595 = vmul.f32 %v1591, %v1593
        %v1597 = vperm.slane %v1569, 0
        %v1599 = vadd.f32 %v1595, %v1597
        %v1600 = vpack.c.bf16 %v1599, %v1599
        %v1601 = vld [vmem:[%s10] sm:$0xf]
        %v1602 = vld [vmem:[%s10 + $0x4] sm:$0xf]
        %v1603 = vld [vmem:[%s10 + $0x8] sm:$0xf]
        %v1604 = vld [vmem:[%s10 + $0xc] sm:$0xf]
        %v1605 = vld [vmem:[%s11] sm:$0x1]
        %v1607 = vperm.slane %v1605, 0
        %v1613 = vunpack.c.l.b16 %v1601
        %v1614 = vunpack.c.l.b16 %v1602
        %v1615 = vunpack.c.l.b16 %v1603
        %v1616 = vunpack.c.l.b16 %v1604
        %v1617 = vpack.c.b16 %v1614, %v1613
        %v1618 = vpack.c.b16 %v1616, %v1615
        %v1622 = vsel %vm679, %v1600, 0
        %1624 = vmatpush.bf16.msra.mxu0 0
        %1625 = vmatpush.bf16.msra.mxu0 0
        %1626 = vmatpush.bf16.msra.mxu0 0
        %1627 = vmatpush.bf16.msra.mxu0 0
        %1628 = vmatpush.bf16.msra.mxu0 0
        %1629 = vmatpush.bf16.msra.mxu0 0
        %1630 = vmatpush.bf16.msra.mxu0 %v1618
        %1631 = vmatpush.bf16.msra.mxu0 %v1617
        %1632 = vmatmul.bf16.gmra.mxu0 %v1622
        %v1633 = vpop.f32.mrf.mxu0
        %v1634 = vadd.f32 %v1607, %v1633
        %v1635 = vpop.f32.mrf.mxu0
        %1636 = vdwg.mxu0
        %v1637 = vmul.f32 %v1634, 0.5
        %v1638 = vmul.f32 %v1634, 0.044715
        %v1639 = vmul.f32 %v1638, %v1634
        %v1640 = vmul.f32 %v1639, %v1634
        %v1641 = vadd.f32 %v1634, %v1640
        %v1642 = vmul.f32 %v1641, 0.7978846
        %v1643 = vtanh.pop %v1642
        %v1644 = vadd.f32 %v1643, 1.0
        %v1645 = vmul.f32 %v1637, %v1644
        %v1646 = vpack.c.bf16 %v1645, %v1645
        %v1647 = vld [vmem:[%s12] sm:$0xf]
        %v1648 = vld [vmem:[%s12 + $0x4] sm:$0xf]
        %v1649 = vld [vmem:[%s12 + $0x8] sm:$0xf]
        %v1650 = vld [vmem:[%s12 + $0xc] sm:$0xf]
        %v1651 = vld [vmem:[%s12 + $0x10] sm:$0xf]
        %v1652 = vld [vmem:[%s12 + $0x14] sm:$0xf]
        %v1653 = vld [vmem:[%s12 + $0x18] sm:$0xf]
        %v1654 = vld [vmem:[%s12 + $0x1c] sm:$0xf]
        %v1655 = vld [vmem:[%s13] sm:$0x1]
        %v1657 = vperm.slane %v1655, 0
        %v1667 = vunpack.c.l.b16 %v1647
        %v1668 = vunpack.c.l.b16 %v1648
        %v1669 = vunpack.c.l.b16 %v1649
        %v1670 = vunpack.c.l.b16 %v1650
        %v1671 = vunpack.c.l.b16 %v1651
        %v1672 = vunpack.c.l.b16 %v1652
        %v1673 = vunpack.c.l.b16 %v1653
        %v1674 = vunpack.c.l.b16 %v1654
        %v1675 = vpack.c.b16 %v1668, %v1667
        %v1676 = vpack.c.b16 %v1670, %v1669
        %v1677 = vpack.c.b16 %v1672, %v1671
        %v1678 = vpack.c.b16 %v1674, %v1673
        %vm1683 = vcmask 523264
        %v1685 = vsel %vm1683, %v1646, 0
        %1687 = vmatpush.bf16.msra.mxu0 0
        %1688 = vmatpush.bf16.msra.mxu0 0
        %1689 = vmatpush.bf16.msra.mxu0 0
        %1690 = vmatpush.bf16.msra.mxu0 0
        %1691 = vmatpush.bf16.msra.mxu0 %v1678
        %1692 = vmatpush.bf16.msra.mxu0 %v1677
        %1693 = vmatpush.bf16.msra.mxu0 %v1676
        %1694 = vmatpush.bf16.msra.mxu0 %v1675
        %1695 = vmatmul.bf16.gmra.mxu0 %v1685
        %v1696 = vpop.f32.mrf.mxu0
        %v1697 = vadd.f32 %v1657, %v1696
        %v1698 = vpop.f32.mrf.mxu0
        %1699 = vdwg.mxu0
        %v1700 = vadd.f32 %v1697, %v1599
        %v1701 = vld [vmem:[%s14] sm:$0x1]
        %v1702 = vld [vmem:[%s15] sm:$0x1]
        %v1703 = vsel %vm679, %v1700, 0.0
        %1704 = vadd.xlane.f32.xlu0 %v1703
        %v1705 = vpop.xlane.xlu0 %1704
        %v1706 = vmul.f32 %v1705, %v689
        %v1707 = vsub.f32 %v1700, %v1706
        %v1708 = vmul.f32 %v1707, %v1707
        %v1709 = vsel %vm679, %v1708, 0.0
        %1710 = vadd.xlane.f32.xlu0 %v1709
        %v1711 = vpop.xlane.xlu0 %1710
        %v1712 = vmul.f32 %v1711, %v689
        %v1713 = vadd.f32 %v1712, 1e-12
        %v1714 = vrsqrt.pop %v1713
        %v1715 = vmul.f32 %v1714, %v1713
        %v1716 = vmul.f32 %v1715, %v1714
        %v1717 = vmul.f32 0.5, %v1716
        %v1718 = vsub.f32 1.5, %v1717
        %v1719 = vmul.f32 %v1714, %v1718
        %vm1720 = vweird.f32 %v1713
        %vm1721 = vweird.f32 %v1714
        %vm1722 = vmor %vm1720, %vm1721
        %v1723 = vsel %vm1722, %v1714, %v1719
        %v1724 = vmul.f32 %v1707, %v1723
        %v1726 = vperm.slane %v1701, 0
        %v1728 = vmul.f32 %v1724, %v1726
        %v1730 = vperm.slane %v1702, 0
        %v1732 = vadd.f32 %v1728, %v1730
        %v1733 = vpack.c.bf16 %v1732, %v1732
        %s1734 = scalar_lea.vmem %s4, 48
        %v1735 = vld [vmem:[%s1734] sm:$0xf]
        %v1736 = vld [vmem:[%s1734 + $0x4] sm:$0xf]
        %v1737 = vld [vmem:[%s1734 + $0x8] sm:$0xf]
        %v1738 = vld [vmem:[%s1734 + $0xc] sm:$0xf]
        %s1739 = scalar_lea.vmem %s5, 3
        %v1740 = vld [vmem:[%s1739] sm:$0x1]
        %v1742 = vperm.slane %v1740, 0
        %v1748 = vunpack.c.l.b16 %v1735
        %v1749 = vunpack.c.l.b16 %v1736
        %v1750 = vunpack.c.l.b16 %v1737
        %v1751 = vunpack.c.l.b16 %v1738
        %v1752 = vpack.c.b16 %v1749, %v1748
        %v1753 = vpack.c.b16 %v1751, %v1750
        %v1757 = vsel %vm679, %v1733, 0
        %1759 = vmatpush.bf16.msra.mxu0 0
        %1760 = vmatpush.bf16.msra.mxu0 0
        %1761 = vmatpush.bf16.msra.mxu0 0
        %1762 = vmatpush.bf16.msra.mxu0 0
        %1763 = vmatpush.bf16.msra.mxu0 0
        %1764 = vmatpush.bf16.msra.mxu0 0
        %1765 = vmatpush.bf16.msra.mxu0 %v1753
        %1766 = vmatpush.bf16.msra.mxu0 %v1752
        %1767 = vmatmul.bf16.gmra.mxu0 %v1757
        %v1768 = vpop.f32.mrf.mxu0
        %v1769 = vadd.f32 %v1742, %v1768
        %v1770 = vpop.f32.mrf.mxu0
        %1771 = vdwg.mxu0
        %s1772 = scalar_lea.vmem %s4, 64
        %v1773 = vld [vmem:[%s1772] sm:$0xf]
        %v1774 = vld [vmem:[%s1772 + $0x4] sm:$0xf]
        %v1775 = vld [vmem:[%s1772 + $0x8] sm:$0xf]
        %v1776 = vld [vmem:[%s1772 + $0xc] sm:$0xf]
        %s1777 = scalar_lea.vmem %s5, 4
        %v1778 = vld [vmem:[%s1777] sm:$0x1]
        %v1780 = vperm.slane %v1778, 0
        %v1786 = vunpack.c.l.b16 %v1773
        %v1787 = vunpack.c.l.b16 %v1774
        %v1788 = vunpack.c.l.b16 %v1775
        %v1789 = vunpack.c.l.b16 %v1776
        %v1790 = vpack.c.b16 %v1787, %v1786
        %v1791 = vpack.c.b16 %v1789, %v1788
        %1794 = vmatpush.bf16.msra.mxu0 0
        %1795 = vmatpush.bf16.msra.mxu0 0
        %1796 = vmatpush.bf16.msra.mxu0 0
        %1797 = vmatpush.bf16.msra.mxu0 0
        %1798 = vmatpush.bf16.msra.mxu0 0
        %1799 = vmatpush.bf16.msra.mxu0 0
        %1800 = vmatpush.bf16.msra.mxu0 %v1791
        %1801 = vmatpush.bf16.msra.mxu0 %v1790
        %1802 = vmatmul.bf16.gmra.mxu0 %v1757
        %v1803 = vpop.f32.mrf.mxu0
        %v1804 = vadd.f32 %v1780, %v1803
        %v1805 = vpop.f32.mrf.mxu0
        %1806 = vdwg.mxu0
        %s1807 = scalar_lea.vmem %s4, 80
        %v1808 = vld [vmem:[%s1807] sm:$0xf]
        %v1809 = vld [vmem:[%s1807 + $0x4] sm:$0xf]
        %v1810 = vld [vmem:[%s1807 + $0x8] sm:$0xf]
        %v1811 = vld [vmem:[%s1807 + $0xc] sm:$0xf]
        %s1812 = scalar_lea.vmem %s5, 5
        %v1813 = vld [vmem:[%s1812] sm:$0x1]
        %v1815 = vperm.slane %v1813, 0
        %v1821 = vunpack.c.l.b16 %v1808
        %v1822 = vunpack.c.l.b16 %v1809
        %v1823 = vunpack.c.l.b16 %v1810
        %v1824 = vunpack.c.l.b16 %v1811
        %v1825 = vpack.c.b16 %v1822, %v1821
        %v1826 = vpack.c.b16 %v1824, %v1823
        %1829 = vmatpush.bf16.msra.mxu0 0
        %1830 = vmatpush.bf16.msra.mxu0 0
        %1831 = vmatpush.bf16.msra.mxu0 0
        %1832 = vmatpush.bf16.msra.mxu0 0
        %1833 = vmatpush.bf16.msra.mxu0 0
        %1834 = vmatpush.bf16.msra.mxu0 0
        %1835 = vmatpush.bf16.msra.mxu0 %v1826
        %1836 = vmatpush.bf16.msra.mxu0 %v1825
        %1837 = vmatmul.bf16.gmra.mxu0 %v1757
        %v1838 = vpop.f32.mrf.mxu0
        %v1839 = vadd.f32 %v1815, %v1838
        %v1840 = vpop.f32.mrf.mxu0
        %1841 = vdwg.mxu0
        %1843 = vrot.lane.b32.xlu0 %v1769, 120
        %v1844 = vpop.permute.xlu0 %1843
        %1846 = vrot.lane.b32.xlu0 %v1769, 112
        %v1847 = vpop.permute.xlu0 %1846
        %1849 = vrot.lane.b32.xlu0 %v1769, 104
        %v1850 = vpop.permute.xlu0 %1849
        %v1852 = vrot.slane %v1847, 4
        %v1853 = vsel %vm839, %v1852, %v1769
        %v1854 = vrot.slane %v1769, 4
        %v1855 = vsel %vm839, %v1847, %v1854
        %v1857 = vunpack.c.l.s4 1983009808
        %v1858 = vunpack.c.0.s8 %v1857
        %v1859 = vperm.slane %v1853, %v1858
        %v1861 = vunpack.c.l.s4 1983009808
        %v1862 = vunpack.c.0.s8 %v1861
        %v1863 = vperm.slane %v1855, %v1862
        %v1864 = vrot.slane %v1850, 4
        %v1865 = vsel %vm839, %v1864, %v1844
        %v1866 = vrot.slane %v1844, 4
        %v1867 = vsel %vm839, %v1850, %v1866
        %v1869 = vunpack.c.l.s4 1983009808
        %v1870 = vunpack.c.0.s8 %v1869
        %v1871 = vperm.slane %v1865, %v1870
        %v1873 = vunpack.c.l.s4 1983009808
        %v1874 = vunpack.c.0.s8 %v1873
        %v1875 = vperm.slane %v1867, %v1874
        %v1876 = vrot.slane %v1871, 4
        %v1877 = vsel %vm839, %v1876, %v1859
        %v1878 = vrot.slane %v1859, 4
        %v1879 = vsel %vm839, %v1871, %v1878
        %v1881 = vunpack.c.l.s4 1934713408
        %v1882 = vunpack.c.0.s8 %v1881
        %v1883 = vperm.slane %v1877, %v1882
        %v1885 = vunpack.c.l.s4 1934713408
        %v1886 = vunpack.c.0.s8 %v1885
        %v1887 = vperm.slane %v1879, %v1886
        %v1888 = vrot.slane %v1875, 4
        %v1889 = vsel %vm839, %v1888, %v1863
        %v1890 = vrot.slane %v1863, 4
        %v1891 = vsel %vm839, %v1875, %v1890
        %v1893 = vunpack.c.l.s4 1934713408
        %v1894 = vunpack.c.0.s8 %v1893
        %v1895 = vperm.slane %v1889, %v1894
        %v1897 = vunpack.c.l.s4 1934713408
        %v1898 = vunpack.c.0.s8 %v1897
        %v1899 = vperm.slane %v1891, %v1898
        %v1900 = vrot.slane %v1883, 4
        %v1901 = vsel %vm839, 0.0, %v1900
        %v1902 = vrot.slane %v1887, 4
        %v1903 = vsel %vm839, 0.0, %v1902
        %v1904 = vrot.slane %v1895, 4
        %v1905 = vsel %vm839, 0.0, %v1904
        %v1906 = vrot.slane %v1899, 4
        %v1907 = vsel %vm839, 0.0, %v1906
        %v1908 = vsel %vm839, %v1902, %v1883
        %v1910 = vunpack.c.l.s4 1983009808
        %v1911 = vunpack.c.0.s8 %v1910
        %v1912 = vperm.slane %v1908, %v1911
        %v1913 = vrot.slane %v1903, 4
        %v1914 = vsel %vm839, %v1913, %v1901
        %v1916 = vunpack.c.l.s4 1983009808
        %v1917 = vunpack.c.0.s8 %v1916
        %v1918 = vperm.slane %v1914, %v1917
        %v1919 = vsel %vm839, %v1906, %v1895
        %v1921 = vunpack.c.l.s4 1983009808
        %v1922 = vunpack.c.0.s8 %v1921
        %v1923 = vperm.slane %v1919, %v1922
        %v1924 = vrot.slane %v1907, 4
        %v1925 = vsel %vm839, %v1924, %v1905
        %v1927 = vunpack.c.l.s4 1983009808
        %v1928 = vunpack.c.0.s8 %v1927
        %v1929 = vperm.slane %v1925, %v1928
        %v1930 = vrot.slane %v1918, 4
        %v1931 = vsel %vm839, %v1930, %v1912
        %v1932 = vrot.slane %v1912, 4
        %v1933 = vsel %vm839, %v1918, %v1932
        %v1935 = vunpack.c.l.s4 1934713408
        %v1936 = vunpack.c.0.s8 %v1935
        %v1937 = vperm.slane %v1931, %v1936
        %v1939 = vunpack.c.l.s4 1934713408
        %v1940 = vunpack.c.0.s8 %v1939
        %v1941 = vperm.slane %v1933, %v1940
        %v1942 = vrot.slane %v1929, 4
        %v1943 = vsel %vm839, %v1942, %v1923
        %v1944 = vrot.slane %v1923, 4
        %v1945 = vsel %vm839, %v1929, %v1944
        %v1947 = vunpack.c.l.s4 1934713408
        %v1948 = vunpack.c.0.s8 %v1947
        %v1949 = vperm.slane %v1943, %v1948
        %v1951 = vunpack.c.l.s4 1934713408
        %v1952 = vunpack.c.0.s8 %v1951
        %v1953 = vperm.slane %v1945, %v1952
        %v1954 = vrot.slane %v1949, 4
        %v1955 = vsel %vm839, %v1954, %v1937
        %v1956 = vrot.slane %v1937, 4
        %v1957 = vsel %vm839, %v1949, %v1956
        %v1958 = vrot.slane %v1953, 4
        %v1959 = vsel %vm839, %v1958, %v1941
        %v1960 = vrot.slane %v1941, 4
        %v1961 = vsel %vm839, %v1953, %v1960
        %v1962 = vpack.c.bf16 %v1955, %v1955
        %v1963 = vpack.c.bf16 %v1957, %v1957
        %v1964 = vpack.c.bf16 %v1959, %v1959
        %v1965 = vpack.c.bf16 %v1961, %v1961
        %1967 = vrot.lane.b32.xlu0 %v1804, 120
        %v1968 = vpop.permute.xlu0 %1967
        %1970 = vrot.lane.b32.xlu0 %v1804, 112
        %v1971 = vpop.permute.xlu0 %1970
        %1973 = vrot.lane.b32.xlu0 %v1804, 104
        %v1974 = vpop.permute.xlu0 %1973
        %v1976 = vrot.slane %v1971, 4
        %v1977 = vsel %vm839, %v1976, %v1804
        %v1978 = vrot.slane %v1804, 4
        %v1979 = vsel %vm839, %v1971, %v1978
        %v1981 = vunpack.c.l.s4 1983009808
        %v1982 = vunpack.c.0.s8 %v1981
        %v1983 = vperm.slane %v1977, %v1982
        %v1985 = vunpack.c.l.s4 1983009808
        %v1986 = vunpack.c.0.s8 %v1985
        %v1987 = vperm.slane %v1979, %v1986
        %v1988 = vrot.slane %v1974, 4
        %v1989 = vsel %vm839, %v1988, %v1968
        %v1990 = vrot.slane %v1968, 4
        %v1991 = vsel %vm839, %v1974, %v1990
        %v1993 = vunpack.c.l.s4 1983009808
        %v1994 = vunpack.c.0.s8 %v1993
        %v1995 = vperm.slane %v1989, %v1994
        %v1997 = vunpack.c.l.s4 1983009808
        %v1998 = vunpack.c.0.s8 %v1997
        %v1999 = vperm.slane %v1991, %v1998
        %v2000 = vrot.slane %v1995, 4
        %v2001 = vsel %vm839, %v2000, %v1983
        %v2002 = vrot.slane %v1983, 4
        %v2003 = vsel %vm839, %v1995, %v2002
        %v2005 = vunpack.c.l.s4 1934713408
        %v2006 = vunpack.c.0.s8 %v2005
        %v2007 = vperm.slane %v2001, %v2006
        %v2009 = vunpack.c.l.s4 1934713408
        %v2010 = vunpack.c.0.s8 %v2009
        %v2011 = vperm.slane %v2003, %v2010
        %v2012 = vrot.slane %v1999, 4
        %v2013 = vsel %vm839, %v2012, %v1987
        %v2014 = vrot.slane %v1987, 4
        %v2015 = vsel %vm839, %v1999, %v2014
        %v2017 = vunpack.c.l.s4 1934713408
        %v2018 = vunpack.c.0.s8 %v2017
        %v2019 = vperm.slane %v2013, %v2018
        %v2021 = vunpack.c.l.s4 1934713408
        %v2022 = vunpack.c.0.s8 %v2021
        %v2023 = vperm.slane %v2015, %v2022
        %v2024 = vrot.slane %v2007, 4
        %v2025 = vsel %vm839, 0.0, %v2024
        %v2026 = vrot.slane %v2011, 4
        %v2027 = vsel %vm839, 0.0, %v2026
        %v2028 = vrot.slane %v2019, 4
        %v2029 = vsel %vm839, 0.0, %v2028
        %v2030 = vrot.slane %v2023, 4
        %v2031 = vsel %vm839, 0.0, %v2030
        %v2032 = vsel %vm839, %v2026, %v2007
        %v2034 = vunpack.c.l.s4 1983009808
        %v2035 = vunpack.c.0.s8 %v2034
        %v2036 = vperm.slane %v2032, %v2035
        %v2037 = vrot.slane %v2027, 4
        %v2038 = vsel %vm839, %v2037, %v2025
        %v2040 = vunpack.c.l.s4 1983009808
        %v2041 = vunpack.c.0.s8 %v2040
        %v2042 = vperm.slane %v2038, %v2041
        %v2043 = vsel %vm839, %v2030, %v2019
        %v2045 = vunpack.c.l.s4 1983009808
        %v2046 = vunpack.c.0.s8 %v2045
        %v2047 = vperm.slane %v2043, %v2046
        %v2048 = vrot.slane %v2031, 4
        %v2049 = vsel %vm839, %v2048, %v2029
        %v2051 = vunpack.c.l.s4 1983009808
        %v2052 = vunpack.c.0.s8 %v2051
        %v2053 = vperm.slane %v2049, %v2052
        %v2054 = vrot.slane %v2042, 4
        %v2055 = vsel %vm839, %v2054, %v2036
        %v2056 = vrot.slane %v2036, 4
        %v2057 = vsel %vm839, %v2042, %v2056
        %v2059 = vunpack.c.l.s4 1934713408
        %v2060 = vunpack.c.0.s8 %v2059
        %v2061 = vperm.slane %v2055, %v2060
        %v2063 = vunpack.c.l.s4 1934713408
        %v2064 = vunpack.c.0.s8 %v2063
        %v2065 = vperm.slane %v2057, %v2064
        %v2066 = vrot.slane %v2053, 4
        %v2067 = vsel %vm839, %v2066, %v2047
        %v2068 = vrot.slane %v2047, 4
        %v2069 = vsel %vm839, %v2053, %v2068
        %v2071 = vunpack.c.l.s4 1934713408
        %v2072 = vunpack.c.0.s8 %v2071
        %v2073 = vperm.slane %v2067, %v2072
        %v2075 = vunpack.c.l.s4 1934713408
        %v2076 = vunpack.c.0.s8 %v2075
        %v2077 = vperm.slane %v2069, %v2076
        %v2078 = vrot.slane %v2073, 4
        %v2079 = vsel %vm839, %v2078, %v2061
        %v2080 = vrot.slane %v2061, 4
        %v2081 = vsel %vm839, %v2073, %v2080
        %v2082 = vrot.slane %v2077, 4
        %v2083 = vsel %vm839, %v2082, %v2065
        %v2084 = vrot.slane %v2065, 4
        %v2085 = vsel %vm839, %v2077, %v2084
        %v2086 = vpack.c.bf16 %v2079, %v2079
        %v2087 = vpack.c.bf16 %v2081, %v2081
        %v2088 = vpack.c.bf16 %v2083, %v2083
        %v2089 = vpack.c.bf16 %v2085, %v2085
        %2091 = vrot.lane.b32.xlu0 %v1839, 120
        %v2092 = vpop.permute.xlu0 %2091
        %2094 = vrot.lane.b32.xlu0 %v1839, 112
        %v2095 = vpop.permute.xlu0 %2094
        %2097 = vrot.lane.b32.xlu0 %v1839, 104
        %v2098 = vpop.permute.xlu0 %2097
        %v2100 = vrot.slane %v2095, 4
        %v2101 = vsel %vm839, %v2100, %v1839
        %v2102 = vrot.slane %v1839, 4
        %v2103 = vsel %vm839, %v2095, %v2102
        %v2105 = vunpack.c.l.s4 1983009808
        %v2106 = vunpack.c.0.s8 %v2105
        %v2107 = vperm.slane %v2101, %v2106
        %v2109 = vunpack.c.l.s4 1983009808
        %v2110 = vunpack.c.0.s8 %v2109
        %v2111 = vperm.slane %v2103, %v2110
        %v2112 = vrot.slane %v2098, 4
        %v2113 = vsel %vm839, %v2112, %v2092
        %v2114 = vrot.slane %v2092, 4
        %v2115 = vsel %vm839, %v2098, %v2114
        %v2117 = vunpack.c.l.s4 1983009808
        %v2118 = vunpack.c.0.s8 %v2117
        %v2119 = vperm.slane %v2113, %v2118
        %v2121 = vunpack.c.l.s4 1983009808
        %v2122 = vunpack.c.0.s8 %v2121
        %v2123 = vperm.slane %v2115, %v2122
        %v2124 = vrot.slane %v2119, 4
        %v2125 = vsel %vm839, %v2124, %v2107
        %v2126 = vrot.slane %v2107, 4
        %v2127 = vsel %vm839, %v2119, %v2126
        %v2129 = vunpack.c.l.s4 1934713408
        %v2130 = vunpack.c.0.s8 %v2129
        %v2131 = vperm.slane %v2125, %v2130
        %v2133 = vunpack.c.l.s4 1934713408
        %v2134 = vunpack.c.0.s8 %v2133
        %v2135 = vperm.slane %v2127, %v2134
        %v2136 = vrot.slane %v2123, 4
        %v2137 = vsel %vm839, %v2136, %v2111
        %v2138 = vrot.slane %v2111, 4
        %v2139 = vsel %vm839, %v2123, %v2138
        %v2141 = vunpack.c.l.s4 1934713408
        %v2142 = vunpack.c.0.s8 %v2141
        %v2143 = vperm.slane %v2137, %v2142
        %v2145 = vunpack.c.l.s4 1934713408
        %v2146 = vunpack.c.0.s8 %v2145
        %v2147 = vperm.slane %v2139, %v2146
        %v2148 = vrot.slane %v2131, 4
        %v2149 = vsel %vm839, 0.0, %v2148
        %v2150 = vrot.slane %v2135, 4
        %v2151 = vsel %vm839, 0.0, %v2150
        %v2152 = vrot.slane %v2143, 4
        %v2153 = vsel %vm839, 0.0, %v2152
        %v2154 = vrot.slane %v2147, 4
        %v2155 = vsel %vm839, 0.0, %v2154
        %v2156 = vsel %vm839, %v2150, %v2131
        %v2158 = vunpack.c.l.s4 1983009808
        %v2159 = vunpack.c.0.s8 %v2158
        %v2160 = vperm.slane %v2156, %v2159
        %v2161 = vrot.slane %v2151, 4
        %v2162 = vsel %vm839, %v2161, %v2149
        %v2164 = vunpack.c.l.s4 1983009808
        %v2165 = vunpack.c.0.s8 %v2164
        %v2166 = vperm.slane %v2162, %v2165
        %v2167 = vsel %vm839, %v2154, %v2143
        %v2169 = vunpack.c.l.s4 1983009808
        %v2170 = vunpack.c.0.s8 %v2169
        %v2171 = vperm.slane %v2167, %v2170
        %v2172 = vrot.slane %v2155, 4
        %v2173 = vsel %vm839, %v2172, %v2153
        %v2175 = vunpack.c.l.s4 1983009808
        %v2176 = vunpack.c.0.s8 %v2175
        %v2177 = vperm.slane %v2173, %v2176
        %v2178 = vrot.slane %v2166, 4
        %v2179 = vsel %vm839, %v2178, %v2160
        %v2180 = vrot.slane %v2160, 4
        %v2181 = vsel %vm839, %v2166, %v2180
        %v2183 = vunpack.c.l.s4 1934713408
        %v2184 = vunpack.c.0.s8 %v2183
        %v2185 = vperm.slane %v2179, %v2184
        %v2187 = vunpack.c.l.s4 1934713408
        %v2188 = vunpack.c.0.s8 %v2187
        %v2189 = vperm.slane %v2181, %v2188
        %v2190 = vrot.slane %v2177, 4
        %v2191 = vsel %vm839, %v2190, %v2171
        %v2192 = vrot.slane %v2171, 4
        %v2193 = vsel %vm839, %v2177, %v2192
        %v2195 = vunpack.c.l.s4 1934713408
        %v2196 = vunpack.c.0.s8 %v2195
        %v2197 = vperm.slane %v2191, %v2196
        %v2199 = vunpack.c.l.s4 1934713408
        %v2200 = vunpack.c.0.s8 %v2199
        %v2201 = vperm.slane %v2193, %v2200
        %v2202 = vrot.slane %v2197, 4
        %v2203 = vsel %vm839, %v2202, %v2185
        %v2204 = vrot.slane %v2185, 4
        %v2205 = vsel %vm839, %v2197, %v2204
        %v2206 = vrot.slane %v2201, 4
        %v2207 = vsel %vm839, %v2206, %v2189
        %v2208 = vrot.slane %v2189, 4
        %v2209 = vsel %vm839, %v2201, %v2208
        %v2210 = vpack.c.bf16 %v2203, %v2203
        %v2211 = vpack.c.bf16 %v2205, %v2205
        %v2212 = vpack.c.bf16 %v2207, %v2207
        %v2213 = vpack.c.bf16 %v2209, %v2209
        %v2215 = vsel %vm1201, %v1962, 0
        %v2218 = vsel %vm1201, %v2086, 0
        %2220 = vmatpush.bf16.xpose.msra.mxu0 0
        %2221 = vmatpush.bf16.xpose.msra.mxu0 0
        %2222 = vmatpush.bf16.xpose.msra.mxu0 0
        %2223 = vmatpush.bf16.xpose.msra.mxu0 0
        %2224 = vmatpush.bf16.xpose.msra.mxu0 0
        %2225 = vmatpush.bf16.xpose.msra.mxu0 0
        %2226 = vmatpush.bf16.xpose.msra.mxu0 0
        %2227 = vmatpush.bf16.xpose.msra.mxu0 %v2218
        %2228 = vmatmul.bf16.gmra.mxu0 %v2215
        %v2229 = vpop.f32.mrf.mxu0
        %v2230 = vadd.f32 %v719, %v2229
        %v2231 = vpop.f32.mrf.mxu0
        %2232 = vdwg.mxu0
        %v2234 = vsel %vm1201, %v1963, 0
        %v2237 = vsel %vm1201, %v2087, 0
        %2239 = vmatpush.bf16.xpose.msra.mxu0 0
        %2240 = vmatpush.bf16.xpose.msra.mxu0 0
        %2241 = vmatpush.bf16.xpose.msra.mxu0 0
        %2242 = vmatpush.bf16.xpose.msra.mxu0 0
        %2243 = vmatpush.bf16.xpose.msra.mxu0 0
        %2244 = vmatpush.bf16.xpose.msra.mxu0 0
        %2245 = vmatpush.bf16.xpose.msra.mxu0 0
        %2246 = vmatpush.bf16.xpose.msra.mxu0 %v2237
        %2247 = vmatmul.bf16.gmra.mxu0 %v2234
        %v2248 = vpop.f32.mrf.mxu0
        %v2249 = vadd.f32 %v719, %v2248
        %v2250 = vpop.f32.mrf.mxu0
        %2251 = vdwg.mxu0
        %v2253 = vsel %vm1201, %v1964, 0
        %v2256 = vsel %vm1201, %v2088, 0
        %2258 = vmatpush.bf16.xpose.msra.mxu0 0
        %2259 = vmatpush.bf16.xpose.msra.mxu0 0
        %2260 = vmatpush.bf16.xpose.msra.mxu0 0
        %2261 = vmatpush.bf16.xpose.msra.mxu0 0
        %2262 = vmatpush.bf16.xpose.msra.mxu0 0
        %2263 = vmatpush.bf16.xpose.msra.mxu0 0
        %2264 = vmatpush.bf16.xpose.msra.mxu0 0
        %2265 = vmatpush.bf16.xpose.msra.mxu0 %v2256
        %2266 = vmatmul.bf16.gmra.mxu0 %v2253
        %v2267 = vpop.f32.mrf.mxu0
        %v2268 = vadd.f32 %v719, %v2267
        %v2269 = vpop.f32.mrf.mxu0
        %2270 = vdwg.mxu0
        %v2272 = vsel %vm1201, %v1965, 0
        %v2275 = vsel %vm1201, %v2089, 0
        %2277 = vmatpush.bf16.xpose.msra.mxu0 0
        %2278 = vmatpush.bf16.xpose.msra.mxu0 0
        %2279 = vmatpush.bf16.xpose.msra.mxu0 0
        %2280 = vmatpush.bf16.xpose.msra.mxu0 0
        %2281 = vmatpush.bf16.xpose.msra.mxu0 0
        %2282 = vmatpush.bf16.xpose.msra.mxu0 0
        %2283 = vmatpush.bf16.xpose.msra.mxu0 0
        %2284 = vmatpush.bf16.xpose.msra.mxu0 %v2275
        %2285 = vmatmul.bf16.gmra.mxu0 %v2272
        %v2286 = vpop.f32.mrf.mxu0
        %v2287 = vadd.f32 %v719, %v2286
        %v2288 = vpop.f32.mrf.mxu0
        %2289 = vdwg.mxu0
        %v2290 = vsel %vm1201, %v2230, -inf
        %2291 = vmax.xlane.f32.xlu0 %v2290
        %v2292 = vpop.xlane.xlu0 %2291
        %v2293 = vsel %vm1201, %v2249, -inf
        %2294 = vmax.xlane.f32.xlu0 %v2293
        %v2295 = vpop.xlane.xlu0 %2294
        %v2296 = vsel %vm1201, %v2268, -inf
        %2297 = vmax.xlane.f32.xlu0 %v2296
        %v2298 = vpop.xlane.xlu0 %2297
        %v2299 = vsel %vm1201, %v2287, -inf
        %2300 = vmax.xlane.f32.xlu0 %v2299
        %v2301 = vpop.xlane.xlu0 %2300
        %v2302 = vsub.f32 %v2230, %v2292
        %v2303 = vsub.f32 %v2249, %v2295
        %v2304 = vsub.f32 %v2268, %v2298
        %v2305 = vsub.f32 %v2287, %v2301
        %v2306 = vmul.f32 %v2302, 1.442695
        %v2307 = vpow.pop %v2306
        %v2308 = vmul.f32 %v2303, 1.442695
        %v2309 = vpow.pop %v2308
        %v2310 = vmul.f32 %v2304, 1.442695
        %v2311 = vpow.pop %v2310
        %v2312 = vmul.f32 %v2305, 1.442695
        %v2313 = vpow.pop %v2312
        %v2314 = vsel %vm1201, %v2307, 0.0
        %2315 = vadd.xlane.f32.xlu0 %v2314
        %v2316 = vpop.xlane.xlu0 %2315
        %v2317 = vsel %vm1201, %v2309, 0.0
        %2318 = vadd.xlane.f32.xlu0 %v2317
        %v2319 = vpop.xlane.xlu0 %2318
        %v2320 = vsel %vm1201, %v2311, 0.0
        %2321 = vadd.xlane.f32.xlu0 %v2320
        %v2322 = vpop.xlane.xlu0 %2321
        %v2323 = vsel %vm1201, %v2313, 0.0
        %2324 = vadd.xlane.f32.xlu0 %v2323
        %v2325 = vpop.xlane.xlu0 %2324
        %v2326 = vrcp.pop %v2316
        %v2327 = vrcp.pop %v2319
        %v2328 = vrcp.pop %v2322
        %v2329 = vrcp.pop %v2325
        %v2330 = vmul.f32 %v2307, %v2326
        %v2331 = vmul.f32 %v2309, %v2327
        %v2332 = vmul.f32 %v2311, %v2328
        %v2333 = vmul.f32 %v2313, %v2329
        %v2334 = vpack.c.bf16 %v2330, %v2330
        %v2335 = vpack.c.bf16 %v2331, %v2331
        %v2336 = vpack.c.bf16 %v2332, %v2332
        %v2337 = vpack.c.bf16 %v2333, %v2333
        %v2339 = vsel %vm1201, %v2334, 0
        %v2342 = vsel %vm1329, %v2210, 0
        %2344 = vmatpush.bf16.msra.mxu0 0
        %2345 = vmatpush.bf16.msra.mxu0 0
        %2346 = vmatpush.bf16.msra.mxu0 0
        %2347 = vmatpush.bf16.msra.mxu0 0
        %2348 = vmatpush.bf16.msra.mxu0 0
        %2349 = vmatpush.bf16.msra.mxu0 0
        %2350 = vmatpush.bf16.msra.mxu0 0
        %2351 = vmatpush.bf16.msra.mxu0 %v2342
        %2352 = vmatmul.bf16.gmra.mxu0 %v2339
        %v2353 = vpop.f32.mrf.mxu0
        %v2354 = vadd.f32 0.0, %v2353
        %v2355 = vpop.f32.mrf.mxu0
        %2356 = vdwg.mxu0
        %v2358 = vsel %vm1201, %v2335, 0
        %v2361 = vsel %vm1329, %v2211, 0
        %2363 = vmatpush.bf16.msra.mxu0 0
        %2364 = vmatpush.bf16.msra.mxu0 0
        %2365 = vmatpush.bf16.msra.mxu0 0
        %2366 = vmatpush.bf16.msra.mxu0 0
        %2367 = vmatpush.bf16.msra.mxu0 0
        %2368 = vmatpush.bf16.msra.mxu0 0
        %2369 = vmatpush.bf16.msra.mxu0 0
        %2370 = vmatpush.bf16.msra.mxu0 %v2361
        %2371 = vmatmul.bf16.gmra.mxu0 %v2358
        %v2372 = vpop.f32.mrf.mxu0
        %v2373 = vadd.f32 0.0, %v2372
        %v2374 = vpop.f32.mrf.mxu0
        %2375 = vdwg.mxu0
        %v2377 = vsel %vm1201, %v2336, 0
        %v2380 = vsel %vm1329, %v2212, 0
        %2382 = vmatpush.bf16.msra.mxu0 0
        %2383 = vmatpush.bf16.msra.mxu0 0
        %2384 = vmatpush.bf16.msra.mxu0 0
        %2385 = vmatpush.bf16.msra.mxu0 0
        %2386 = vmatpush.bf16.msra.mxu0 0
        %2387 = vmatpush.bf16.msra.mxu0 0
        %2388 = vmatpush.bf16.msra.mxu0 0
        %2389 = vmatpush.bf16.msra.mxu0 %v2380
        %2390 = vmatmul.bf16.gmra.mxu0 %v2377
        %v2391 = vpop.f32.mrf.mxu0
        %v2392 = vadd.f32 0.0, %v2391
        %v2393 = vpop.f32.mrf.mxu0
        %2394 = vdwg.mxu0
        %v2396 = vsel %vm1201, %v2337, 0
        %v2399 = vsel %vm1329, %v2213, 0
        %2401 = vmatpush.bf16.msra.mxu0 0
        %2402 = vmatpush.bf16.msra.mxu0 0
        %2403 = vmatpush.bf16.msra.mxu0 0
        %2404 = vmatpush.bf16.msra.mxu0 0
        %2405 = vmatpush.bf16.msra.mxu0 0
        %2406 = vmatpush.bf16.msra.mxu0 0
        %2407 = vmatpush.bf16.msra.mxu0 0
        %2408 = vmatpush.bf16.msra.mxu0 %v2399
        %2409 = vmatmul.bf16.gmra.mxu0 %v2396
        %v2410 = vpop.f32.mrf.mxu0
        %v2411 = vadd.f32 0.0, %v2410
        %v2412 = vpop.f32.mrf.mxu0
        %2413 = vdwg.mxu0
        %v2414 = vrot.slane %v2392, 4
        %v2415 = vsel %vm839, %v2414, %v2354
        %v2416 = vrot.slane %v2354, 4
        %v2417 = vsel %vm839, %v2392, %v2416
        %v2419 = vunpack.c.l.s4 1983009808
        %v2420 = vunpack.c.0.s8 %v2419
        %v2421 = vperm.slane %v2415, %v2420
        %v2423 = vunpack.c.l.s4 1983009808
        %v2424 = vunpack.c.0.s8 %v2423
        %v2425 = vperm.slane %v2417, %v2424
        %v2426 = vrot.slane %v2411, 4
        %v2427 = vsel %vm839, %v2426, %v2373
        %v2428 = vrot.slane %v2373, 4
        %v2429 = vsel %vm839, %v2411, %v2428
        %v2431 = vunpack.c.l.s4 1983009808
        %v2432 = vunpack.c.0.s8 %v2431
        %v2433 = vperm.slane %v2427, %v2432
        %v2435 = vunpack.c.l.s4 1983009808
        %v2436 = vunpack.c.0.s8 %v2435
        %v2437 = vperm.slane %v2429, %v2436
        %v2438 = vrot.slane %v2433, 4
        %v2439 = vsel %vm839, %v2438, %v2421
        %v2440 = vrot.slane %v2421, 4
        %v2441 = vsel %vm839, %v2433, %v2440
        %v2443 = vunpack.c.l.s4 1934713408
        %v2444 = vunpack.c.0.s8 %v2443
        %v2445 = vperm.slane %v2439, %v2444
        %v2447 = vunpack.c.l.s4 1934713408
        %v2448 = vunpack.c.0.s8 %v2447
        %v2449 = vperm.slane %v2441, %v2448
        %v2450 = vrot.slane %v2437, 4
        %v2451 = vsel %vm839, %v2450, %v2425
        %v2452 = vrot.slane %v2425, 4
        %v2453 = vsel %vm839, %v2437, %v2452
        %v2455 = vunpack.c.l.s4 1934713408
        %v2456 = vunpack.c.0.s8 %v2455
        %v2457 = vperm.slane %v2451, %v2456
        %v2459 = vunpack.c.l.s4 1934713408
        %v2460 = vunpack.c.0.s8 %v2459
        %v2461 = vperm.slane %v2453, %v2460
        %v2462 = vrot.slane %v2445, 4
        %v2463 = vsel %vm839, 0.0, %v2462
        %v2464 = vrot.slane %v2449, 4
        %v2465 = vsel %vm839, 0.0, %v2464
        %v2466 = vrot.slane %v2457, 4
        %v2467 = vsel %vm839, 0.0, %v2466
        %v2468 = vrot.slane %v2461, 4
        %v2469 = vsel %vm839, 0.0, %v2468
        %v2470 = vsel %vm839, %v2464, %v2445
        %v2472 = vunpack.c.l.s4 1983009808
        %v2473 = vunpack.c.0.s8 %v2472
        %v2474 = vperm.slane %v2470, %v2473
        %v2475 = vrot.slane %v2465, 4
        %v2476 = vsel %vm839, %v2475, %v2463
        %v2478 = vunpack.c.l.s4 1983009808
        %v2479 = vunpack.c.0.s8 %v2478
        %v2480 = vperm.slane %v2476, %v2479
        %v2481 = vsel %vm839, %v2468, %v2457
        %v2483 = vunpack.c.l.s4 1983009808
        %v2484 = vunpack.c.0.s8 %v2483
        %v2485 = vperm.slane %v2481, %v2484
        %v2486 = vrot.slane %v2469, 4
        %v2487 = vsel %vm839, %v2486, %v2467
        %v2489 = vunpack.c.l.s4 1983009808
        %v2490 = vunpack.c.0.s8 %v2489
        %v2491 = vperm.slane %v2487, %v2490
        %v2492 = vrot.slane %v2480, 4
        %v2493 = vsel %vm839, %v2492, %v2474
        %v2494 = vrot.slane %v2474, 4
        %v2495 = vsel %vm839, %v2480, %v2494
        %v2497 = vunpack.c.l.s4 1934713408
        %v2498 = vunpack.c.0.s8 %v2497
        %v2499 = vperm.slane %v2493, %v2498
        %v2501 = vunpack.c.l.s4 1934713408
        %v2502 = vunpack.c.0.s8 %v2501
        %v2503 = vperm.slane %v2495, %v2502
        %v2504 = vrot.slane %v2491, 4
        %v2505 = vsel %vm839, %v2504, %v2485
        %v2506 = vrot.slane %v2485, 4
        %v2507 = vsel %vm839, %v2491, %v2506
        %v2509 = vunpack.c.l.s4 1934713408
        %v2510 = vunpack.c.0.s8 %v2509
        %v2511 = vperm.slane %v2505, %v2510
        %v2513 = vunpack.c.l.s4 1934713408
        %v2514 = vunpack.c.0.s8 %v2513
        %v2515 = vperm.slane %v2507, %v2514
        %v2516 = vrot.slane %v2511, 4
        %v2517 = vsel %vm839, %v2516, %v2499
        %v2518 = vrot.slane %v2499, 4
        %v2519 = vsel %vm839, %v2511, %v2518
        %v2520 = vrot.slane %v2515, 4
        %v2521 = vsel %vm839, %v2520, %v2503
        %v2522 = vrot.slane %v2503, 4
        %v2523 = vsel %vm839, %v2515, %v2522
        %2525 = vrot.lane.b32.xlu0 %v2519, 8
        %v2526 = vpop.permute.xlu0 %2525
        %2529 = vrot.lane.b32.xlu0 %v2521, 16
        %v2530 = vpop.permute.xlu0 %2529
        %2533 = vrot.lane.b32.xlu0 %v2523, 24
        %v2534 = vpop.permute.xlu0 %2533
        %v2536 = vsel %vm1201, %v2517, %v2526
        %v2537 = vsel %vm1526, %v2536, %v2530
        %v2538 = vsel %vm1528, %v2537, %v2534
        %v2539 = vpack.c.bf16 %v2538, %v2538
        %s2540 = scalar_lea.vmem %s6, 16
        %v2541 = vld [vmem:[%s2540] sm:$0xf]
        %v2542 = vld [vmem:[%s2540 + $0x4] sm:$0xf]
        %v2543 = vld [vmem:[%s2540 + $0x8] sm:$0xf]
        %v2544 = vld [vmem:[%s2540 + $0xc] sm:$0xf]
        %s2545 = scalar_lea.vmem %s7, 1
        %v2546 = vld [vmem:[%s2545] sm:$0x1]
        %v2548 = vperm.slane %v2546, 0
        %v2554 = vunpack.c.l.b16 %v2541
        %v2555 = vunpack.c.l.b16 %v2542
        %v2556 = vunpack.c.l.b16 %v2543
        %v2557 = vunpack.c.l.b16 %v2544
        %v2558 = vpack.c.b16 %v2555, %v2554
        %v2559 = vpack.c.b16 %v2557, %v2556
        %v2563 = vsel %vm679, %v2539, 0
        %2565 = vmatpush.bf16.msra.mxu0 0
        %2566 = vmatpush.bf16.msra.mxu0 0
        %2567 = vmatpush.bf16.msra.mxu0 0
        %2568 = vmatpush.bf16.msra.mxu0 0
        %2569 = vmatpush.bf16.msra.mxu0 0
        %2570 = vmatpush.bf16.msra.mxu0 0
        %2571 = vmatpush.bf16.msra.mxu0 %v2559
        %2572 = vmatpush.bf16.msra.mxu0 %v2558
        %2573 = vmatmul.bf16.gmra.mxu0 %v2563
        %v2574 = vpop.f32.mrf.mxu0
        %v2575 = vadd.f32 %v2548, %v2574
        %v2576 = vpop.f32.mrf.mxu0
        %2577 = vdwg.mxu0
        %v2578 = vadd.f32 %v2575, %v1732
        %s2579 = scalar_lea.vmem %s8, 1
        %v2580 = vld [vmem:[%s2579] sm:$0x1]
        %s2581 = scalar_lea.vmem %s9, 1
        %v2582 = vld [vmem:[%s2581] sm:$0x1]
        %v2583 = vsel %vm679, %v2578, 0.0
        %2584 = vadd.xlane.f32.xlu0 %v2583
        %v2585 = vpop.xlane.xlu0 %2584
        %v2586 = vmul.f32 %v2585, %v689
        %v2587 = vsub.f32 %v2578, %v2586
        %v2588 = vmul.f32 %v2587, %v2587
        %v2589 = vsel %vm679, %v2588, 0.0
        %2590 = vadd.xlane.f32.xlu0 %v2589
        %v2591 = vpop.xlane.xlu0 %2590
        %v2592 = vmul.f32 %v2591, %v689
        %v2593 = vadd.f32 %v2592, 1e-12
        %v2594 = vrsqrt.pop %v2593
        %v2595 = vmul.f32 %v2594, %v2593
        %v2596 = vmul.f32 %v2595, %v2594
        %v2597 = vmul.f32 0.5, %v2596
        %v2598 = vsub.f32 1.5, %v2597
        %v2599 = vmul.f32 %v2594, %v2598
        %vm2600 = vweird.f32 %v2593
        %vm2601 = vweird.f32 %v2594
        %vm2602 = vmor %vm2600, %vm2601
        %v2603 = vsel %vm2602, %v2594, %v2599
        %v2604 = vmul.f32 %v2587, %v2603
        %v2606 = vperm.slane %v2580, 0
        %v2608 = vmul.f32 %v2604, %v2606
        %v2610 = vperm.slane %v2582, 0
        %v2612 = vadd.f32 %v2608, %v2610
        %v2613 = vpack.c.bf16 %v2612, %v2612
        %s2614 = scalar_lea.vmem %s10, 16
        %v2615 = vld [vmem:[%s2614] sm:$0xf]
        %v2616 = vld [vmem:[%s2614 + $0x4] sm:$0xf]
        %v2617 = vld [vmem:[%s2614 + $0x8] sm:$0xf]
        %v2618 = vld [vmem:[%s2614 + $0xc] sm:$0xf]
        %s2619 = scalar_lea.vmem %s11, 1
        %v2620 = vld [vmem:[%s2619] sm:$0x1]
        %v2622 = vperm.slane %v2620, 0
        %v2628 = vunpack.c.l.b16 %v2615
        %v2629 = vunpack.c.l.b16 %v2616
        %v2630 = vunpack.c.l.b16 %v2617
        %v2631 = vunpack.c.l.b16 %v2618
        %v2632 = vpack.c.b16 %v2629, %v2628
        %v2633 = vpack.c.b16 %v2631, %v2630
        %v2637 = vsel %vm679, %v2613, 0
        %2639 = vmatpush.bf16.msra.mxu0 0
        %2640 = vmatpush.bf16.msra.mxu0 0
        %2641 = vmatpush.bf16.msra.mxu0 0
        %2642 = vmatpush.bf16.msra.mxu0 0
        %2643 = vmatpush.bf16.msra.mxu0 0
        %2644 = vmatpush.bf16.msra.mxu0 0
        %2645 = vmatpush.bf16.msra.mxu0 %v2633
        %2646 = vmatpush.bf16.msra.mxu0 %v2632
        %2647 = vmatmul.bf16.gmra.mxu0 %v2637
        %v2648 = vpop.f32.mrf.mxu0
        %v2649 = vadd.f32 %v2622, %v2648
        %v2650 = vpop.f32.mrf.mxu0
        %2651 = vdwg.mxu0
        %v2652 = vmul.f32 %v2649, 0.5
        %v2653 = vmul.f32 %v2649, 0.044715
        %v2654 = vmul.f32 %v2653, %v2649
        %v2655 = vmul.f32 %v2654, %v2649
        %v2656 = vadd.f32 %v2649, %v2655
        %v2657 = vmul.f32 %v2656, 0.7978846
        %v2658 = vtanh.pop %v2657
        %v2659 = vadd.f32 %v2658, 1.0
        %v2660 = vmul.f32 %v2652, %v2659
        %v2661 = vpack.c.bf16 %v2660, %v2660
        %s2662 = scalar_lea.vmem %s12, 32
        %v2663 = vld [vmem:[%s2662] sm:$0xf]
        %v2664 = vld [vmem:[%s2662 + $0x4] sm:$0xf]
        %v2665 = vld [vmem:[%s2662 + $0x8] sm:$0xf]
        %v2666 = vld [vmem:[%s2662 + $0xc] sm:$0xf]
        %v2667 = vld [vmem:[%s2662 + $0x10] sm:$0xf]
        %v2668 = vld [vmem:[%s2662 + $0x14] sm:$0xf]
        %v2669 = vld [vmem:[%s2662 + $0x18] sm:$0xf]
        %v2670 = vld [vmem:[%s2662 + $0x1c] sm:$0xf]
        %s2671 = scalar_lea.vmem %s13, 1
        %v2672 = vld [vmem:[%s2671] sm:$0x1]
        %v2674 = vperm.slane %v2672, 0
        %v2684 = vunpack.c.l.b16 %v2663
        %v2685 = vunpack.c.l.b16 %v2664
        %v2686 = vunpack.c.l.b16 %v2665
        %v2687 = vunpack.c.l.b16 %v2666
        %v2688 = vunpack.c.l.b16 %v2667
        %v2689 = vunpack.c.l.b16 %v2668
        %v2690 = vunpack.c.l.b16 %v2669
        %v2691 = vunpack.c.l.b16 %v2670
        %v2692 = vpack.c.b16 %v2685, %v2684
        %v2693 = vpack.c.b16 %v2687, %v2686
        %v2694 = vpack.c.b16 %v2689, %v2688
        %v2695 = vpack.c.b16 %v2691, %v2690
        %v2701 = vsel %vm1683, %v2661, 0
        %2703 = vmatpush.bf16.msra.mxu0 0
        %2704 = vmatpush.bf16.msra.mxu0 0
        %2705 = vmatpush.bf16.msra.mxu0 0
        %2706 = vmatpush.bf16.msra.mxu0 0
        %2707 = vmatpush.bf16.msra.mxu0 %v2695
        %2708 = vmatpush.bf16.msra.mxu0 %v2694
        %2709 = vmatpush.bf16.msra.mxu0 %v2693
        %2710 = vmatpush.bf16.msra.mxu0 %v2692
        %2711 = vmatmul.bf16.gmra.mxu0 %v2701
        %v2712 = vpop.f32.mrf.mxu0
        %v2713 = vadd.f32 %v2674, %v2712
        %v2714 = vpop.f32.mrf.mxu0
        %2715 = vdwg.mxu0
        %v2716 = vadd.f32 %v2713, %v2612
        %s2717 = scalar_lea.vmem %s14, 1
        %v2718 = vld [vmem:[%s2717] sm:$0x1]
        %s2719 = scalar_lea.vmem %s15, 1
        %v2720 = vld [vmem:[%s2719] sm:$0x1]
        %v2721 = vsel %vm679, %v2716, 0.0
        %2722 = vadd.xlane.f32.xlu0 %v2721
        %v2723 = vpop.xlane.xlu0 %2722
        %v2724 = vmul.f32 %v2723, %v689
        %v2725 = vsub.f32 %v2716, %v2724
        %v2726 = vmul.f32 %v2725, %v2725
        %v2727 = vsel %vm679, %v2726, 0.0
        %2728 = vadd.xlane.f32.xlu0 %v2727
        %v2729 = vpop.xlane.xlu0 %2728
        %v2730 = vmul.f32 %v2729, %v689
        %v2731 = vadd.f32 %v2730, 1e-12
        %v2732 = vrsqrt.pop %v2731
        %v2733 = vmul.f32 %v2732, %v2731
        %v2734 = vmul.f32 %v2733, %v2732
        %v2735 = vmul.f32 0.5, %v2734
        %v2736 = vsub.f32 1.5, %v2735
        %v2737 = vmul.f32 %v2732, %v2736
        %vm2738 = vweird.f32 %v2731
        %vm2739 = vweird.f32 %v2732
        %vm2740 = vmor %vm2738, %vm2739
        %v2741 = vsel %vm2740, %v2732, %v2737
        %v2742 = vmul.f32 %v2725, %v2741
        %v2744 = vperm.slane %v2718, 0
        %v2746 = vmul.f32 %v2742, %v2744
        %v2748 = vperm.slane %v2720, 0
        %v2750 = vadd.f32 %v2746, %v2748
        %v2751 = vpack.c.bf16 %v2750, %v2750
        %v2752 = vld [vmem:[%s16] sm:$0xf]
        %v2753 = vld [vmem:[%s16 + $0x4] sm:$0xf]
        %v2754 = vld [vmem:[%s16 + $0x8] sm:$0xf]
        %v2755 = vld [vmem:[%s16 + $0xc] sm:$0xf]
        %v2756 = vld [vmem:[%s17] sm:$0x1]
        %v2761 = vunpack.c.l.b16 %v2752
        %v2762 = vunpack.c.l.b16 %v2753
        %v2763 = vunpack.c.l.b16 %v2754
        %v2764 = vunpack.c.l.b16 %v2755
        %v2765 = vpack.c.b16 %v2762, %v2761
        %v2766 = vpack.c.b16 %v2764, %v2763
        %v2770 = vsel %vm679, %v2751, 0
        %2772 = vmatpush.bf16.msra.mxu0 0
        %2773 = vmatpush.bf16.msra.mxu0 0
        %2774 = vmatpush.bf16.msra.mxu0 0
        %2775 = vmatpush.bf16.msra.mxu0 0
        %2776 = vmatpush.bf16.msra.mxu0 0
        %2777 = vmatpush.bf16.msra.mxu0 0
        %2778 = vmatpush.bf16.msra.mxu0 %v2766
        %2779 = vmatpush.bf16.msra.mxu0 %v2765
        %2780 = vmatmul.bf16.gmra.mxu0 %v2770
        %v2781 = vpop.f32.mrf.mxu0
        %v2782 = vadd.f32 %v2756, %v2781
        %v2783 = vpop.f32.mrf.mxu0
        %2784 = vdwg.mxu0
        %v2785 = vtanh.pop %v2782
        %2786 = vst [vmem:[%s667] sm:$0x1] %v2785
        %v2787 = vpack.c.bf16 %v2785, %v2785
        %v2788 = vld [vmem:[%s18] sm:$0xf]
        %v2789 = vld [vmem:[%s18 + $0x4] sm:$0xf]
        %v2790 = vld [vmem:[%s18 + $0x8] sm:$0xf]
        %v2791 = vld [vmem:[%s18 + $0xc] sm:$0xf]
        %v2792 = vld [vmem:[%s18 + $0x10] sm:$0xf]
        %v2793 = vld [vmem:[%s18 + $0x14] sm:$0xf]
        %v2794 = vld [vmem:[%s18 + $0x18] sm:$0xf]
        %v2795 = vld [vmem:[%s18 + $0x1c] sm:$0xf]
        %v2796 = vld [vmem:[%s18 + $0x20] sm:$0xf]
        %v2797 = vld [vmem:[%s18 + $0x24] sm:$0xf]
        %v2798 = vld [vmem:[%s18 + $0x28] sm:$0xf]
        %v2799 = vld [vmem:[%s18 + $0x2c] sm:$0xf]
        %v2800 = vld [vmem:[%s18 + $0x30] sm:$0xf]
        %v2801 = vld [vmem:[%s18 + $0x34] sm:$0xf]
        %v2802 = vld [vmem:[%s18 + $0x38] sm:$0xf]
        %v2803 = vld [vmem:[%s18 + $0x3c] sm:$0xf]
        %v2804 = vld [vmem:[%s19] sm:$0x1]
        %v2821 = vunpack.c.l.b16 %v2788
        %v2822 = vunpack.c.l.b16 %v2789
        %v2823 = vunpack.c.l.b16 %v2790
        %v2824 = vunpack.c.l.b16 %v2791
        %v2825 = vunpack.c.l.b16 %v2792
        %v2826 = vunpack.c.l.b16 %v2793
        %v2827 = vunpack.c.l.b16 %v2794
        %v2828 = vunpack.c.l.b16 %v2795
        %v2829 = vunpack.c.l.b16 %v2796
        %v2830 = vunpack.c.l.b16 %v2797
        %v2831 = vunpack.c.l.b16 %v2798
        %v2832 = vunpack.c.l.b16 %v2799
        %v2833 = vunpack.c.l.b16 %v2800
        %v2834 = vunpack.c.l.b16 %v2801
        %v2835 = vunpack.c.l.b16 %v2802
        %v2836 = vunpack.c.l.b16 %v2803
        %v2837 = vpack.c.b16 %v2822, %v2821
        %v2838 = vpack.c.b16 %v2824, %v2823
        %v2839 = vpack.c.b16 %v2826, %v2825
        %v2840 = vpack.c.b16 %v2828, %v2827
        %v2841 = vpack.c.b16 %v2830, %v2829
        %v2842 = vpack.c.b16 %v2832, %v2831
        %v2843 = vpack.c.b16 %v2834, %v2833
        %v2844 = vpack.c.b16 %v2836, %v2835
        %2853 = vmatpush.bf16.msra.mxu0 %v2844
        %2854 = vmatpush.bf16.msra.mxu0 %v2843
        %2855 = vmatpush.bf16.msra.mxu0 %v2842
        %2856 = vmatpush.bf16.msra.mxu0 %v2841
        %2857 = vmatpush.bf16.msra.mxu0 %v2840
        %2858 = vmatpush.bf16.msra.mxu0 %v2839
        %2859 = vmatpush.bf16.msra.mxu0 %v2838
        %2860 = vmatpush.bf16.msra.mxu0 %v2837
        %2861 = vmatmul.bf16.gmra.mxu0 %v2787
        %v2862 = vpop.f32.mrf.mxu0
        %v2863 = vadd.f32 %v2804, %v2862
        %v2864 = vpop.f32.mrf.mxu0
        %2865 = vdwg.mxu0
        %2866 = vst [vmem:[%s661] sm:$0x1] %v2863
        %s2867 = sand.u32 %s477, 1
        %s2868 = scalar_lea.sflag [#allocation3], %s2867
        %s2869 = sand.u32 %s477, 1
        %s2870 = scalar_lea.vmem [#allocation2], %s2869
        %s2871 = sand.u32 %s503, 1
        %s2872 = scalar_lea.sflag [#allocation5], %s2871
        %s2873 = sand.u32 %s503, 1
        %s2874 = scalar_lea.vmem [#allocation4], %s2873
        // Predicated region
        $region101: #{bert_forward.1} parent=99 // pred_check
          %p2875 = pneg %p487
        $region102: #{bert_forward.1} parent=99 // pred_check_branch
          %2877 = sbr.rel (%p2875) target = $region104
        $region103: #{bert_forward.1} parent=99 // pred_region
          %2879 = vsyncadd %s2868, 0
          %s2880 = scalar_lea.hbm %s20, %s39
          %s2882 = sshll.u32 %s2870, 4
          %s2883 = int_to_ptr.vmem [resolvable:$true] %s2882
          %s2884 = sshll.u32 %s2880, 4
          %s2885 = int_to_ptr.hbm [resolvable:$true] %s2884
          %2887 = dma.vmem_to_hbm [thread:$0]  %s2883, 16, %s2885, %s2868
        $region104: #{bert_forward.1} parent=99 // pred_fallthru
          _
        // Predicated region
        $region105: #{bert_forward.1} parent=99 // pred_check
          %p2888 = pneg %p513
        $region106: #{bert_forward.1} parent=99 // pred_check_branch
          %2890 = sbr.rel (%p2888) target = $region108
        $region107: #{bert_forward.1} parent=99 // pred_region
          %2892 = vsyncadd %s2872, 0
          %s2893 = scalar_lea.hbm %s21, %s39
          %s2895 = sshll.u32 %s2874, 4
          %s2896 = int_to_ptr.vmem [resolvable:$true] %s2895
          %s2897 = sshll.u32 %s2893, 4
          %s2898 = int_to_ptr.hbm [resolvable:$true] %s2897
          %2900 = dma.vmem_to_hbm [thread:$0]  %s2896, 16, %s2898, %s2872
        $region108: #{bert_forward.1} parent=99 // pred_fallthru
          _
      $region100: #{bert_forward.1} parent=5 // pred_fallthru
        _
      %p2901 = scmp.le.s32.totalorder 2, %s34
      // Predicated region
      $region109: #{bert_forward.1} parent=5 // pred_check
        %p2902 = pneg %p2901
      $region110: #{bert_forward.1} parent=5 // pred_check_branch
        %2904 = sbr.rel (%p2902) target = $region112
      $region111: #{bert_forward.1} parent=5 // pred_region
        %s2905 = ssub.s32 %s34, 2
        // Predicated region
        $region113: #{bert_forward.1} parent=111 // pred_check
          %p2906 = pneg %p493
        $region114: #{bert_forward.1} parent=111 // pred_check_branch
          %2908 = sbr.rel (%p2906) target = $region116
        $region115: #{bert_forward.1} parent=111 // pred_region
          %s2909 = sand.u32 %s478, 1
          %s2910 = scalar_lea.sflag [#allocation3], %s2909
          %s2911 = sand.u32 %s478, 1
          %s2912 = scalar_lea.vmem [#allocation2], %s2911
          %2914 = dma.done %s2910, 16
        $region116: #{bert_forward.1} parent=111 // pred_fallthru
          _
        // Predicated region
        $region117: #{bert_forward.1} parent=111 // pred_check
          %p2915 = pneg %p519
        $region118: #{bert_forward.1} parent=111 // pred_check_branch
          %2917 = sbr.rel (%p2915) target = $region120
        $region119: #{bert_forward.1} parent=111 // pred_region
          %s2918 = sand.u32 %s504, 1
          %s2919 = scalar_lea.sflag [#allocation5], %s2918
          %s2920 = sand.u32 %s504, 1
          %s2921 = scalar_lea.vmem [#allocation4], %s2920
          %2923 = dma.done %s2919, 16
        $region120: #{bert_forward.1} parent=111 // pred_fallthru
          _
      $region112: #{bert_forward.1} parent=5 // pred_fallthru
        _
    $region6: #{bert_forward.1} parent=1 // loop_footer
      %s38 = sadd.s32 1, %s34
    $region7: #{bert_forward.1} parent=1 // loop_footer_branch
      %33 = sbr.rel target = $region3
    $region8: #{bert_forward.1} parent=1 // loop_exit
      _
    %2924 = vsyncpa [#allocation3], 1
    %s2925 = scalar_lea.sflag [#allocation3], 1
    %2926 = vsyncpa %s2925, 1
    %2927 = vsyncpa [#allocation5], 1
    %s2928 = scalar_lea.sflag [#allocation5], 1
    %2929 = vsyncpa %s2928, 1

</llo_original>
